<compile_context>
chip_gen: v6e
topology: v6e:2x2x1
jax: 0.10.0
libtpu: 0.0.40
codegen_flags: <defaults>
</compile_context>

<pallas_src>
import numpy as np
import jax
import jax.numpy as jnp
from jax.experimental import pallas as pl
from jax.experimental.pallas import tpu as pltpu


# ----------------------------------------------------------------------------
# Fused kernel: LayerNorm([7,7]) + bilinear 7->13 upsample + multi-scale convs
# (folded with the 1x1 accumulation) + Linear(13,7) x2 tail, per batch element.
#
# x_ref:    (512, 49)  f32   channel-major input (spatial flattened h*7+w)
# gam_ref:  (1, 49)    f32   LayerNorm weight (per spatial position)
# bet_ref:  (1, 49)    f32   LayerNorm bias
# kt_ref:   (49, 169)  f32   bilinear kron matrix (in_pos -> out_pos), transposed
# weff_ref: (49, 512)  f32   conv weight folded with the 1x1: [tap=ki*7+kj, c]
# ct_ref:   (49,49,169)f32   tail constant: [tap, out=(w'*7+h'), pos=(a*13+b)]
# cb_ref:   (49, 1)    f32   fused bias of the linear tail (+ conv biases)
# o_ref:    (49, 1)    f32   output, flattened (w', h')
# ----------------------------------------------------------------------------
def crn_kernel(x_ref, gam_ref, bet_ref, kt_ref, weff_ref, ct_ref, cb_ref, o_ref):
    # LayerNorm over the 49 spatial positions of every channel (lane reduction).
    x = x_ref[...]                                            # (512, 49)
    mean = jnp.mean(x, axis=1, keepdims=True)
    xc = x - mean
    var = jnp.mean(xc * xc, axis=1, keepdims=True)
    y = xc * jax.lax.rsqrt(var + 1e-5) * gam_ref[...] + bet_ref[...]

    # Bilinear 7->13 upsample (align_corners=True) as a single matmul.
    up = jnp.dot(y, kt_ref[...], preferred_element_type=jnp.float32)   # (512, 169)
    up = up.astype(jnp.bfloat16)          # emulate the .half() conv input rounding

    # Multi-scale convs (3x3/5x5/7x7, 512->84) + 1x1 accumulation, folded into one
    # channel-contraction matmul:  gt[t, p] = sum_c weff[t, c] * up[c, p].
    gt = jnp.dot(weff_ref[...], up.astype(jnp.float32),
                 preferred_element_type=jnp.float32)                   # (49, 169)

    # Conv taps + zero padding + downsample_width/height Linears, folded into ct:
    #   out[o] = sum_{t,p} gt[t, p] * ct[t, o, p] + cbias[o]
    acc = jnp.zeros((49, 169), jnp.float32)
    for t in range(49):                                  # static, fully unrolled
        acc = acc + gt[t:t + 1, :] * ct_ref[t]           # (1,169) bcast * (49,169)
    out = jnp.sum(acc, axis=1, keepdims=True) + cb_ref[...]            # (49, 1)
    o_ref[...] = out


# ----------------------------------------------------------------------------
# Parameter construction (deterministic, synthetic) + algebraic folding
# ----------------------------------------------------------------------------
def make_params(key):
    ks = jax.random.split(key, 14)
    f32 = jnp.float32

    ln_w = (1.0 + 0.1 * jax.random.normal(ks[0], (7, 7))).astype(f32)
    ln_b = (0.1 * jax.random.normal(ks[1], (7, 7))).astype(f32)

    w3 = (jax.random.normal(ks[2], (32, 512, 3, 3)) / np.sqrt(512 * 9)).astype(f32)
    b3 = (0.05 * jax.random.normal(ks[3], (32,))).astype(f32)
    w5 = (jax.random.normal(ks[4], (32, 512, 5, 5)) / np.sqrt(512 * 25)).astype(f32)
    b5 = (0.05 * jax.random.normal(ks[5], (32,))).astype(f32)
    w7 = (jax.random.normal(ks[6], (20, 512, 7, 7)) / np.sqrt(512 * 49)).astype(f32)
    b7 = (0.05 * jax.random.normal(ks[7], (20,))).astype(f32)

    Ww = (jax.random.normal(ks[8], (7, 13)) / np.sqrt(13)).astype(f32)
    bw = (0.05 * jax.random.normal(ks[9], (7,))).astype(f32)
    Wh = (jax.random.normal(ks[10], (7, 13)) / np.sqrt(13)).astype(f32)
    bh = (0.05 * jax.random.normal(ks[11], (7,))).astype(f32)

    wa = (jax.random.normal(ks[12], (1, 84, 1, 1)) / np.sqrt(84)).astype(f32)
    ba = (0.05 * jax.random.normal(ks[13], (1,))).astype(f32)

    # bilinear interpolation matrix, align_corners=True, 7 -> 13
    M = np.zeros((13, 7), np.float32)
    for i in range(13):
        src = i * 6.0 / 12.0
        i0 = int(np.floor(src))
        frac = src - i0
        i1 = min(i0 + 1, 6)
        M[i, i0] += 1.0 - frac
        M[i, i1] += frac
    K = np.kron(M, M)                               # (169, 49): up_flat = K @ ln_flat

    # half-precision conv weights (bf16 stand-in for .half())
    w3h = w3.astype(jnp.bfloat16)
    w5h = w5.astype(jnp.bfloat16)
    w7h = w7.astype(jnp.bfloat16)

    # combined HWIO conv weight (f32 view of the bf16-rounded values); smaller
    # kernels centered inside a 7x7 window reproduce the per-conv paddings exactly.
    wcomb = jnp.zeros((7, 7, 512, 84), f32)
    wcomb = wcomb.at[2:5, 2:5, :, 0:32].set(jnp.transpose(w3h.astype(f32), (2, 3, 1, 0)))
    wcomb = wcomb.at[1:6, 1:6, :, 32:64].set(jnp.transpose(w5h.astype(f32), (2, 3, 1, 0)))
    wcomb = wcomb.at[:, :, :, 64:84].set(jnp.transpose(w7h.astype(f32), (2, 3, 1, 0)))
    wa_flat = wa.reshape(84)
    bconv = jnp.concatenate([b3, b5, b7])           # (84,)

    # Fold the 1x1 accumulation into the conv weight: (7,7,512,84) x (84) -> (49,512)
    weffT = jnp.einsum('ijco,o->ijc', wcomb, wa_flat).reshape(49, 512)

    # Fold conv taps + zero padding + both Linear(13,7) layers into one constant:
    #   ct[t=(ki,kj), o=(w',h'), p=(a,b)] = Wh[h', a-ki+3] * Ww[w', b-kj+3]  (0 if OOB)
    Wh_np = np.asarray(Wh)
    Ww_np = np.asarray(Ww)
    WhE = np.zeros((7, 13, 7), np.float32)          # [h', a, ki]
    WwE = np.zeros((7, 13, 7), np.float32)          # [w', b, kj]
    for k in range(7):
        for a in range(13):
            i = a - k + 3
            if 0 <= i <= 12:
                WhE[:, a, k] = Wh_np[:, i]
                WwE[:, a, k] = Ww_np[:, i]
    ct = np.einsum('hak,wbj->kjwhab', WhE, WwE).reshape(49, 49, 169).astype(np.float32)

    # fused bias of the linear tail (includes conv biases through the 1x1)
    wsum = jnp.sum(wa_flat)
    rWh = jnp.sum(Wh, axis=1)                       # (7,)
    rWw = jnp.sum(Ww, axis=1)                       # (7,)
    cbias = (wsum * (bw[:, None] * rWh[None, :] + bh[None, :])
             + jnp.dot(bconv, wa_flat) * rWw[:, None] * rWh[None, :]
             + ba[0])                               # (7, 7) indexed [w', h']

    return dict(
        ln_w=ln_w, ln_b=ln_b,
        w3h=w3h, b3=b3, w5h=w5h, b5=b5, w7h=w7h, b7=b7,
        Ww=Ww, bw=bw, Wh=Wh, bh=bh, wa=wa, ba=ba,
        M=jnp.asarray(M),
        gamma=ln_w.reshape(1, 49), beta=ln_b.reshape(1, 49),
        KT=jnp.asarray(K.T),                        # (49, 169)
        weffT=weffT,
        ct=jnp.asarray(ct),
        cbias_col=cbias.reshape(49, 1),
    )


# ----------------------------------------------------------------------------
# Forward pass (Pallas)
# ----------------------------------------------------------------------------
def crn_forward(x, p):
    B, C, H, W = x.shape
    assert (C, H, W) == (512, 7, 7)
    xf = x.reshape(B, C, H * W)                     # (B, 512, 49), free reshape

    out = pl.pallas_call(
        crn_kernel,
        out_shape=jax.ShapeDtypeStruct((B, 49, 1), jnp.float32),
        grid=(B,),
        in_specs=[
            pl.BlockSpec((pl.Squeezed(), 512, 49), lambda b: (b, 0, 0)),
            pl.BlockSpec((1, 49), lambda b: (0, 0)),
            pl.BlockSpec((1, 49), lambda b: (0, 0)),
            pl.BlockSpec((49, 169), lambda b: (0, 0)),
            pl.BlockSpec((49, 512), lambda b: (0, 0)),
            pl.BlockSpec((49, 49, 169), lambda b: (0, 0, 0)),
            pl.BlockSpec((49, 1), lambda b: (0, 0)),
        ],
        out_specs=pl.BlockSpec((pl.Squeezed(), 49, 1), lambda b: (b, 0, 0)),
        compiler_params=pltpu.CompilerParams(dimension_semantics=("parallel",)),
    )(xf, p['gamma'], p['beta'], p['KT'], p['weffT'], p['ct'], p['cbias_col'])

    return out.reshape(B, 1, 7, 7)                  # [b, 0, w', h']


# ----------------------------------------------------------------------------
# Pure-JAX reference (mirrors the PyTorch forward op by op)
# ----------------------------------------------------------------------------
def reference_forward(x, p):
    mean = jnp.mean(x, axis=(2, 3), keepdims=True)
    var = jnp.mean((x - mean) ** 2, axis=(2, 3), keepdims=True)
    xn = (x - mean) / jnp.sqrt(var + 1e-5)
    xln = xn * p['ln_w'][None, None] + p['ln_b'][None, None]

    M = p['M']
    xup = jnp.einsum('ip,bcpq,jq->bcij', M, xln, M)
    xh = xup.astype(jnp.bfloat16)

    def conv(w, b, pad):
        o = jax.lax.conv_general_dilated(
            xh, w, (1, 1), [(pad, pad), (pad, pad)],
            dimension_numbers=('NCHW', 'OIHW', 'NCHW'),
            preferred_element_type=jnp.float32)
        return o + b[None, :, None, None]

    y = jnp.concatenate([conv(p['w3h'], p['b3'], 1),
                         conv(p['w5h'], p['b5'], 2),
                         conv(p['w7h'], p['b7'], 3)], axis=1)       # (B,84,13,13)

    u = jnp.einsum('bchw,vw->bchv', y, p['Ww']) + p['bw']           # (B,84,13,7)
    u = jnp.transpose(u, (0, 1, 3, 2))                              # (B,84,7,13)
    v = jnp.einsum('bcwh,gh->bcwg', u, p['Wh']) + p['bh']           # (B,84,7,7)
    out = jnp.einsum('bcij,c->bij', v, p['wa'].reshape(84)) + p['ba'][0]
    return out[:, None, :, :]                                       # (B,1,7,7)


if __name__ == "__main__":
    key = jax.random.PRNGKey(0)
    pkey, xkey = jax.random.split(key)
    params = make_params(pkey)

    B = 2
    x = jax.random.normal(xkey, (B, 512, 7, 7), jnp.float32)

    forward = jax.jit(lambda inp: crn_forward(inp, params))
    out = forward(x)
    out = jax.block_until_ready(out)
    assert out.shape == (B, 1, 7, 7), out.shape

    ref = reference_forward(x, params)
    max_err = float(jnp.max(jnp.abs(out - ref)))
    if not bool(jnp.allclose(out, ref, rtol=2e-2, atol=2e-2)):
        raise AssertionError(f"kernel does not match reference, max abs err={max_err}")

    print("KERNEL_OK")
</pallas_src>

<mosaic_0001>
module attributes {stable_mosaic.version = 11 : i64} {
  func.func @crn_kernel(%arg0: i32, %arg1: memref<1x512x49xf32, #tpu.memory_space<vmem>>, %arg2: memref<1x49xf32, #tpu.memory_space<vmem>>, %arg3: memref<1x49xf32, #tpu.memory_space<vmem>>, %arg4: memref<49x169xf32, #tpu.memory_space<vmem>>, %arg5: memref<49x512xf32, #tpu.memory_space<vmem>>, %arg6: memref<49x49x169xf32, #tpu.memory_space<vmem>>, %arg7: memref<49x1xf32, #tpu.memory_space<vmem>>, %arg8: memref<1x49x1xf32, #tpu.memory_space<vmem>>) attributes {dimension_semantics = [#tpu.dimension_semantics<parallel>], iteration_bounds = array<i64: 2>, scalar_prefetch = 0 : i64, scratch_operands = 0 : i64, tpu.core_type = #tpu.core_type<tc>, window_params = [{transform_indices = @transform_0, window_bounds = array<i64: 1, 512, 49>}, {pipeline_mode = #tpu.pipeline_mode<synchronous>, transform_indices = @transform_1, window_bounds = array<i64: 1, 49>}, {pipeline_mode = #tpu.pipeline_mode<synchronous>, transform_indices = @transform_2, window_bounds = array<i64: 1, 49>}, {pipeline_mode = #tpu.pipeline_mode<synchronous>, transform_indices = @transform_3, window_bounds = array<i64: 49, 169>}, {pipeline_mode = #tpu.pipeline_mode<synchronous>, transform_indices = @transform_4, window_bounds = array<i64: 49, 512>}, {pipeline_mode = #tpu.pipeline_mode<synchronous>, transform_indices = @transform_5, window_bounds = array<i64: 49, 49, 169>}, {pipeline_mode = #tpu.pipeline_mode<synchronous>, transform_indices = @transform_6, window_bounds = array<i64: 49, 1>}, {transform_indices = @transform_7, window_bounds = array<i64: 1, 49, 1>}]} {
    %c0 = arith.constant 0 : index
    %c0_0 = arith.constant 0 : index
    %c0_1 = arith.constant 0 : index
    %0 = vector.load %arg1[%c0, %c0_0, %c0_1] : memref<1x512x49xf32, #tpu.memory_space<vmem>>, vector<1x512x49xf32>
    %1 = vector.shape_cast %0 : vector<1x512x49xf32> to vector<512x49xf32>
    %cst = arith.constant dense<0.000000e+00> : vector<512xf32>
    %2 = vector.multi_reduction <add>, %1, %cst [1] : vector<512x49xf32> to vector<512xf32>
    %3 = vector.shape_cast %2 : vector<512xf32> to vector<512x1xf32>
    %cst_2 = arith.constant 4.900000e+01 : f32
    %4 = vector.broadcast %cst_2 : f32 to vector<512x1xf32>
    %5 = arith.divf %3, %4 : vector<512x1xf32>
    %6 = vector.broadcast %5 : vector<512x1xf32> to vector<512x49xf32>
    %7 = arith.subf %1, %6 : vector<512x49xf32>
    %8 = arith.mulf %7, %7 : vector<512x49xf32>
    %cst_3 = arith.constant dense<0.000000e+00> : vector<512xf32>
    %9 = vector.multi_reduction <add>, %8, %cst_3 [1] : vector<512x49xf32> to vector<512xf32>
    %10 = vector.shape_cast %9 : vector<512xf32> to vector<512x1xf32>
    %cst_4 = arith.constant 4.900000e+01 : f32
    %11 = vector.broadcast %cst_4 : f32 to vector<512x1xf32>
    %12 = arith.divf %10, %11 : vector<512x1xf32>
    %cst_5 = arith.constant 9.99999974E-6 : f32
    %13 = vector.broadcast %cst_5 : f32 to vector<512x1xf32>
    %14 = arith.addf %12, %13 : vector<512x1xf32>
    %15 = math.rsqrt %14 : vector<512x1xf32>
    %16 = vector.broadcast %15 : vector<512x1xf32> to vector<512x49xf32>
    %17 = arith.mulf %7, %16 : vector<512x49xf32>
    %c0_6 = arith.constant 0 : index
    %c0_7 = arith.constant 0 : index
    %18 = vector.load %arg2[%c0_6, %c0_7] : memref<1x49xf32, #tpu.memory_space<vmem>>, vector<1x49xf32>
    %19 = vector.broadcast %18 : vector<1x49xf32> to vector<512x49xf32>
    %20 = arith.mulf %17, %19 : vector<512x49xf32>
    %c0_8 = arith.constant 0 : index
    %c0_9 = arith.constant 0 : index
    %21 = vector.load %arg3[%c0_8, %c0_9] : memref<1x49xf32, #tpu.memory_space<vmem>>, vector<1x49xf32>
    %22 = vector.broadcast %21 : vector<1x49xf32> to vector<512x49xf32>
    %23 = arith.addf %20, %22 : vector<512x49xf32>
    %c0_10 = arith.constant 0 : index
    %c0_11 = arith.constant 0 : index
    %24 = vector.load %arg4[%c0_10, %c0_11] : memref<49x169xf32, #tpu.memory_space<vmem>>, vector<49x169xf32>
    %cst_12 = arith.constant dense<0.000000e+00> : vector<512x169xf32>
    %25 = tpu.matmul %23, %24, %cst_12 {dimension_numbers = #tpu.dot_dimension_numbers<[1], [0], [0], [1], [0, 0, 1, 1], [], []>} : vector<512x49xf32>, vector<49x169xf32>, vector<512x169xf32> -> vector<512x169xf32>
    %26 = arith.truncf %25 : vector<512x169xf32> to vector<512x169xbf16>
    %c0_13 = arith.constant 0 : index
    %c0_14 = arith.constant 0 : index
    %27 = vector.load %arg5[%c0_13, %c0_14] : memref<49x512xf32, #tpu.memory_space<vmem>>, vector<49x512xf32>
    %28 = arith.extf %26 : vector<512x169xbf16> to vector<512x169xf32>
    %cst_15 = arith.constant dense<0.000000e+00> : vector<49x169xf32>
    %29 = tpu.matmul %27, %28, %cst_15 {dimension_numbers = #tpu.dot_dimension_numbers<[1], [0], [0], [1], [0, 0, 1, 1], [], []>} : vector<49x512xf32>, vector<512x169xf32>, vector<49x169xf32> -> vector<49x169xf32>
    %cst_16 = arith.constant 0.000000e+00 : f32
    %30 = vector.broadcast %cst_16 : f32 to vector<49x169xf32>
    %31 = vector.extract_strided_slice %29 {offsets = [0, 0], sizes = [1, 169], strides = [1, 1]} : vector<49x169xf32> to vector<1x169xf32>
    %c0_17 = arith.constant 0 : index
    %c0_18 = arith.constant 0 : index
    %c0_19 = arith.constant 0 : index
    %32 = vector.load %arg6[%c0_17, %c0_18, %c0_19] : memref<49x49x169xf32, #tpu.memory_space<vmem>>, vector<1x49x169xf32>
    %33 = vector.shape_cast %32 : vector<1x49x169xf32> to vector<49x169xf32>
    %34 = vector.broadcast %31 : vector<1x169xf32> to vector<49x169xf32>
    %35 = arith.mulf %34, %33 : vector<49x169xf32>
    %36 = arith.addf %30, %35 : vector<49x169xf32>
    %37 = vector.extract_strided_slice %29 {offsets = [1, 0], sizes = [1, 169], strides = [1, 1]} : vector<49x169xf32> to vector<1x169xf32>
    %c1 = arith.constant 1 : index
    %c0_20 = arith.constant 0 : index
    %c0_21 = arith.constant 0 : index
    %38 = vector.load %arg6[%c1, %c0_20, %c0_21] : memref<49x49x169xf32, #tpu.memory_space<vmem>>, vector<1x49x169xf32>
    %39 = vector.shape_cast %38 : vector<1x49x169xf32> to vector<49x169xf32>
    %40 = vector.broadcast %37 : vector<1x169xf32> to vector<49x169xf32>
    %41 = arith.mulf %40, %39 : vector<49x169xf32>
    %42 = arith.addf %36, %41 : vector<49x169xf32>
    %43 = vector.extract_strided_slice %29 {offsets = [2, 0], sizes = [1, 169], strides = [1, 1]} : vector<49x169xf32> to vector<1x169xf32>
    %c2 = arith.constant 2 : index
    %c0_22 = arith.constant 0 : index
    %c0_23 = arith.constant 0 : index
    %44 = vector.load %arg6[%c2, %c0_22, %c0_23] : memref<49x49x169xf32, #tpu.memory_space<vmem>>, vector<1x49x169xf32>
    %45 = vector.shape_cast %44 : vector<1x49x169xf32> to vector<49x169xf32>
    %46 = vector.broadcast %43 : vector<1x169xf32> to vector<49x169xf32>
    %47 = arith.mulf %46, %45 : vector<49x169xf32>
    %48 = arith.addf %42, %47 : vector<49x169xf32>
    %49 = vector.extract_strided_slice %29 {offsets = [3, 0], sizes = [1, 169], strides = [1, 1]} : vector<49x169xf32> to vector<1x169xf32>
    %c3 = arith.constant 3 : index
    %c0_24 = arith.constant 0 : index
    %c0_25 = arith.constant 0 : index
    %50 = vector.load %arg6[%c3, %c0_24, %c0_25] : memref<49x49x169xf32, #tpu.memory_space<vmem>>, vector<1x49x169xf32>
    %51 = vector.shape_cast %50 : vector<1x49x169xf32> to vector<49x169xf32>
    %52 = vector.broadcast %49 : vector<1x169xf32> to vector<49x169xf32>
    %53 = arith.mulf %52, %51 : vector<49x169xf32>
    %54 = arith.addf %48, %53 : vector<49x169xf32>
    %55 = vector.extract_strided_slice %29 {offsets = [4, 0], sizes = [1, 169], strides = [1, 1]} : vector<49x169xf32> to vector<1x169xf32>
    %c4 = arith.constant 4 : index
    %c0_26 = arith.constant 0 : index
    %c0_27 = arith.constant 0 : index
    %56 = vector.load %arg6[%c4, %c0_26, %c0_27] : memref<49x49x169xf32, #tpu.memory_space<vmem>>, vector<1x49x169xf32>
    %57 = vector.shape_cast %56 : vector<1x49x169xf32> to vector<49x169xf32>
    %58 = vector.broadcast %55 : vector<1x169xf32> to vector<49x169xf32>
    %59 = arith.mulf %58, %57 : vector<49x169xf32>
    %60 = arith.addf %54, %59 : vector<49x169xf32>
    %61 = vector.extract_strided_slice %29 {offsets = [5, 0], sizes = [1, 169], strides = [1, 1]} : vector<49x169xf32> to vector<1x169xf32>
    %c5 = arith.constant 5 : index
    %c0_28 = arith.constant 0 : index
    %c0_29 = arith.constant 0 : index
    %62 = vector.load %arg6[%c5, %c0_28, %c0_29] : memref<49x49x169xf32, #tpu.memory_space<vmem>>, vector<1x49x169xf32>
    %63 = vector.shape_cast %62 : vector<1x49x169xf32> to vector<49x169xf32>
    %64 = vector.broadcast %61 : vector<1x169xf32> to vector<49x169xf32>
    %65 = arith.mulf %64, %63 : vector<49x169xf32>
    %66 = arith.addf %60, %65 : vector<49x169xf32>
    %67 = vector.extract_strided_slice %29 {offsets = [6, 0], sizes = [1, 169], strides = [1, 1]} : vector<49x169xf32> to vector<1x169xf32>
    %c6 = arith.constant 6 : index
    %c0_30 = arith.constant 0 : index
    %c0_31 = arith.constant 0 : index
    %68 = vector.load %arg6[%c6, %c0_30, %c0_31] : memref<49x49x169xf32, #tpu.memory_space<vmem>>, vector<1x49x169xf32>
    %69 = vector.shape_cast %68 : vector<1x49x169xf32> to vector<49x169xf32>
    %70 = vector.broadcast %67 : vector<1x169xf32> to vector<49x169xf32>
    %71 = arith.mulf %70, %69 : vector<49x169xf32>
    %72 = arith.addf %66, %71 : vector<49x169xf32>
    %73 = vector.extract_strided_slice %29 {offsets = [7, 0], sizes = [1, 169], strides = [1, 1]} : vector<49x169xf32> to vector<1x169xf32>
    %c7 = arith.constant 7 : index
    %c0_32 = arith.constant 0 : index
    %c0_33 = arith.constant 0 : index
    %74 = vector.load %arg6[%c7, %c0_32, %c0_33] : memref<49x49x169xf32, #tpu.memory_space<vmem>>, vector<1x49x169xf32>
    %75 = vector.shape_cast %74 : vector<1x49x169xf32> to vector<49x169xf32>
    %76 = vector.broadcast %73 : vector<1x169xf32> to vector<49x169xf32>
    %77 = arith.mulf %76, %75 : vector<49x169xf32>
    %78 = arith.addf %72, %77 : vector<49x169xf32>
    %79 = vector.extract_strided_slice %29 {offsets = [8, 0], sizes = [1, 169], strides = [1, 1]} : vector<49x169xf32> to vector<1x169xf32>
    %c8 = arith.constant 8 : index
    %c0_34 = arith.constant 0 : index
    %c0_35 = arith.constant 0 : index
    %80 = vector.load %arg6[%c8, %c0_34, %c0_35] : memref<49x49x169xf32, #tpu.memory_space<vmem>>, vector<1x49x169xf32>
    %81 = vector.shape_cast %80 : vector<1x49x169xf32> to vector<49x169xf32>
    %82 = vector.broadcast %79 : vector<1x169xf32> to vector<49x169xf32>
    %83 = arith.mulf %82, %81 : vector<49x169xf32>
    %84 = arith.addf %78, %83 : vector<49x169xf32>
    %85 = vector.extract_strided_slice %29 {offsets = [9, 0], sizes = [1, 169], strides = [1, 1]} : vector<49x169xf32> to vector<1x169xf32>
    %c9 = arith.constant 9 : index
    %c0_36 = arith.constant 0 : index
    %c0_37 = arith.constant 0 : index
    %86 = vector.load %arg6[%c9, %c0_36, %c0_37] : memref<49x49x169xf32, #tpu.memory_space<vmem>>, vector<1x49x169xf32>
    %87 = vector.shape_cast %86 : vector<1x49x169xf32> to vector<49x169xf32>
    %88 = vector.broadcast %85 : vector<1x169xf32> to vector<49x169xf32>
    %89 = arith.mulf %88, %87 : vector<49x169xf32>
    %90 = arith.addf %84, %89 : vector<49x169xf32>
    %91 = vector.extract_strided_slice %29 {offsets = [10, 0], sizes = [1, 169], strides = [1, 1]} : vector<49x169xf32> to vector<1x169xf32>
    %c10 = arith.constant 10 : index
    %c0_38 = arith.constant 0 : index
    %c0_39 = arith.constant 0 : index
    %92 = vector.load %arg6[%c10, %c0_38, %c0_39] : memref<49x49x169xf32, #tpu.memory_space<vmem>>, vector<1x49x169xf32>
    %93 = vector.shape_cast %92 : vector<1x49x169xf32> to vector<49x169xf32>
    %94 = vector.broadcast %91 : vector<1x169xf32> to vector<49x169xf32>
    %95 = arith.mulf %94, %93 : vector<49x169xf32>
    %96 = arith.addf %90, %95 : vector<49x169xf32>
    %97 = vector.extract_strided_slice %29 {offsets = [11, 0], sizes = [1, 169], strides = [1, 1]} : vector<49x169xf32> to vector<1x169xf32>
    %c11 = arith.constant 11 : index
    %c0_40 = arith.constant 0 : index
    %c0_41 = arith.constant 0 : index
    %98 = vector.load %arg6[%c11, %c0_40, %c0_41] : memref<49x49x169xf32, #tpu.memory_space<vmem>>, vector<1x49x169xf32>
    %99 = vector.shape_cast %98 : vector<1x49x169xf32> to vector<49x169xf32>
    %100 = vector.broadcast %97 : vector<1x169xf32> to vector<49x169xf32>
    %101 = arith.mulf %100, %99 : vector<49x169xf32>
    %102 = arith.addf %96, %101 : vector<49x169xf32>
    %103 = vector.extract_strided_slice %29 {offsets = [12, 0], sizes = [1, 169], strides = [1, 1]} : vector<49x169xf32> to vector<1x169xf32>
    %c12 = arith.constant 12 : index
    %c0_42 = arith.constant 0 : index
    %c0_43 = arith.constant 0 : index
    %104 = vector.load %arg6[%c12, %c0_42, %c0_43] : memref<49x49x169xf32, #tpu.memory_space<vmem>>, vector<1x49x169xf32>
    %105 = vector.shape_cast %104 : vector<1x49x169xf32> to vector<49x169xf32>
    %106 = vector.broadcast %103 : vector<1x169xf32> to vector<49x169xf32>
    %107 = arith.mulf %106, %105 : vector<49x169xf32>
    %108 = arith.addf %102, %107 : vector<49x169xf32>
    %109 = vector.extract_strided_slice %29 {offsets = [13, 0], sizes = [1, 169], strides = [1, 1]} : vector<49x169xf32> to vector<1x169xf32>
    %c13 = arith.constant 13 : index
    %c0_44 = arith.constant 0 : index
    %c0_45 = arith.constant 0 : index
    %110 = vector.load %arg6[%c13, %c0_44, %c0_45] : memref<49x49x169xf32, #tpu.memory_space<vmem>>, vector<1x49x169xf32>
    %111 = vector.shape_cast %110 : vector<1x49x169xf32> to vector<49x169xf32>
    %112 = vector.broadcast %109 : vector<1x169xf32> to vector<49x169xf32>
    %113 = arith.mulf %112, %111 : vector<49x169xf32>
    %114 = arith.addf %108, %113 : vector<49x169xf32>
    %115 = vector.extract_strided_slice %29 {offsets = [14, 0], sizes = [1, 169], strides = [1, 1]} : vector<49x169xf32> to vector<1x169xf32>
    %c14 = arith.constant 14 : index
    %c0_46 = arith.constant 0 : index
    %c0_47 = arith.constant 0 : index
    %116 = vector.load %arg6[%c14, %c0_46, %c0_47] : memref<49x49x169xf32, #tpu.memory_space<vmem>>, vector<1x49x169xf32>
    %117 = vector.shape_cast %116 : vector<1x49x169xf32> to vector<49x169xf32>
    %118 = vector.broadcast %115 : vector<1x169xf32> to vector<49x169xf32>
    %119 = arith.mulf %118, %117 : vector<49x169xf32>
    %120 = arith.addf %114, %119 : vector<49x169xf32>
    %121 = vector.extract_strided_slice %29 {offsets = [15, 0], sizes = [1, 169], strides = [1, 1]} : vector<49x169xf32> to vector<1x169xf32>
    %c15 = arith.constant 15 : index
    %c0_48 = arith.constant 0 : index
    %c0_49 = arith.constant 0 : index
    %122 = vector.load %arg6[%c15, %c0_48, %c0_49] : memref<49x49x169xf32, #tpu.memory_space<vmem>>, vector<1x49x169xf32>
    %123 = vector.shape_cast %122 : vector<1x49x169xf32> to vector<49x169xf32>
    %124 = vector.broadcast %121 : vector<1x169xf32> to vector<49x169xf32>
    %125 = arith.mulf %124, %123 : vector<49x169xf32>
    %126 = arith.addf %120, %125 : vector<49x169xf32>
    %127 = vector.extract_strided_slice %29 {offsets = [16, 0], sizes = [1, 169], strides = [1, 1]} : vector<49x169xf32> to vector<1x169xf32>
    %c16 = arith.constant 16 : index
    %c0_50 = arith.constant 0 : index
    %c0_51 = arith.constant 0 : index
    %128 = vector.load %arg6[%c16, %c0_50, %c0_51] : memref<49x49x169xf32, #tpu.memory_space<vmem>>, vector<1x49x169xf32>
    %129 = vector.shape_cast %128 : vector<1x49x169xf32> to vector<49x169xf32>
    %130 = vector.broadcast %127 : vector<1x169xf32> to vector<49x169xf32>
    %131 = arith.mulf %130, %129 : vector<49x169xf32>
    %132 = arith.addf %126, %131 : vector<49x169xf32>
    %133 = vector.extract_strided_slice %29 {offsets = [17, 0], sizes = [1, 169], strides = [1, 1]} : vector<49x169xf32> to vector<1x169xf32>
    %c17 = arith.constant 17 : index
    %c0_52 = arith.constant 0 : index
    %c0_53 = arith.constant 0 : index
    %134 = vector.load %arg6[%c17, %c0_52, %c0_53] : memref<49x49x169xf32, #tpu.memory_space<vmem>>, vector<1x49x169xf32>
    %135 = vector.shape_cast %134 : vector<1x49x169xf32> to vector<49x169xf32>
    %136 = vector.broadcast %133 : vector<1x169xf32> to vector<49x169xf32>
    %137 = arith.mulf %136, %135 : vector<49x169xf32>
    %138 = arith.addf %132, %137 : vector<49x169xf32>
    %139 = vector.extract_strided_slice %29 {offsets = [18, 0], sizes = [1, 169], strides = [1, 1]} : vector<49x169xf32> to vector<1x169xf32>
    %c18 = arith.constant 18 : index
    %c0_54 = arith.constant 0 : index
    %c0_55 = arith.constant 0 : index
    %140 = vector.load %arg6[%c18, %c0_54, %c0_55] : memref<49x49x169xf32, #tpu.memory_space<vmem>>, vector<1x49x169xf32>
    %141 = vector.shape_cast %140 : vector<1x49x169xf32> to vector<49x169xf32>
    %142 = vector.broadcast %139 : vector<1x169xf32> to vector<49x169xf32>
    %143 = arith.mulf %142, %141 : vector<49x169xf32>
    %144 = arith.addf %138, %143 : vector<49x169xf32>
    %145 = vector.extract_strided_slice %29 {offsets = [19, 0], sizes = [1, 169], strides = [1, 1]} : vector<49x169xf32> to vector<1x169xf32>
    %c19 = arith.constant 19 : index
    %c0_56 = arith.constant 0 : index
    %c0_57 = arith.constant 0 : index
    %146 = vector.load %arg6[%c19, %c0_56, %c0_57] : memref<49x49x169xf32, #tpu.memory_space<vmem>>, vector<1x49x169xf32>
    %147 = vector.shape_cast %146 : vector<1x49x169xf32> to vector<49x169xf32>
    %148 = vector.broadcast %145 : vector<1x169xf32> to vector<49x169xf32>
    %149 = arith.mulf %148, %147 : vector<49x169xf32>
    %150 = arith.addf %144, %149 : vector<49x169xf32>
    %151 = vector.extract_strided_slice %29 {offsets = [20, 0], sizes = [1, 169], strides = [1, 1]} : vector<49x169xf32> to vector<1x169xf32>
    %c20 = arith.constant 20 : index
    %c0_58 = arith.constant 0 : index
    %c0_59 = arith.constant 0 : index
    %152 = vector.load %arg6[%c20, %c0_58, %c0_59] : memref<49x49x169xf32, #tpu.memory_space<vmem>>, vector<1x49x169xf32>
    %153 = vector.shape_cast %152 : vector<1x49x169xf32> to vector<49x169xf32>
    %154 = vector.broadcast %151 : vector<1x169xf32> to vector<49x169xf32>
    %155 = arith.mulf %154, %153 : vector<49x169xf32>
    %156 = arith.addf %150, %155 : vector<49x169xf32>
    %157 = vector.extract_strided_slice %29 {offsets = [21, 0], sizes = [1, 169], strides = [1, 1]} : vector<49x169xf32> to vector<1x169xf32>
    %c21 = arith.constant 21 : index
    %c0_60 = arith.constant 0 : index
    %c0_61 = arith.constant 0 : index
    %158 = vector.load %arg6[%c21, %c0_60, %c0_61] : memref<49x49x169xf32, #tpu.memory_space<vmem>>, vector<1x49x169xf32>
    %159 = vector.shape_cast %158 : vector<1x49x169xf32> to vector<49x169xf32>
    %160 = vector.broadcast %157 : vector<1x169xf32> to vector<49x169xf32>
    %161 = arith.mulf %160, %159 : vector<49x169xf32>
    %162 = arith.addf %156, %161 : vector<49x169xf32>
    %163 = vector.extract_strided_slice %29 {offsets = [22, 0], sizes = [1, 169], strides = [1, 1]} : vector<49x169xf32> to vector<1x169xf32>
    %c22 = arith.constant 22 : index
    %c0_62 = arith.constant 0 : index
    %c0_63 = arith.constant 0 : index
    %164 = vector.load %arg6[%c22, %c0_62, %c0_63] : memref<49x49x169xf32, #tpu.memory_space<vmem>>, vector<1x49x169xf32>
    %165 = vector.shape_cast %164 : vector<1x49x169xf32> to vector<49x169xf32>
    %166 = vector.broadcast %163 : vector<1x169xf32> to vector<49x169xf32>
    %167 = arith.mulf %166, %165 : vector<49x169xf32>
    %168 = arith.addf %162, %167 : vector<49x169xf32>
    %169 = vector.extract_strided_slice %29 {offsets = [23, 0], sizes = [1, 169], strides = [1, 1]} : vector<49x169xf32> to vector<1x169xf32>
    %c23 = arith.constant 23 : index
    %c0_64 = arith.constant 0 : index
    %c0_65 = arith.constant 0 : index
    %170 = vector.load %arg6[%c23, %c0_64, %c0_65] : memref<49x49x169xf32, #tpu.memory_space<vmem>>, vector<1x49x169xf32>
    %171 = vector.shape_cast %170 : vector<1x49x169xf32> to vector<49x169xf32>
    %172 = vector.broadcast %169 : vector<1x169xf32> to vector<49x169xf32>
    %173 = arith.mulf %172, %171 : vector<49x169xf32>
    %174 = arith.addf %168, %173 : vector<49x169xf32>
    %175 = vector.extract_strided_slice %29 {offsets = [24, 0], sizes = [1, 169], strides = [1, 1]} : vector<49x169xf32> to vector<1x169xf32>
    %c24 = arith.constant 24 : index
    %c0_66 = arith.constant 0 : index
    %c0_67 = arith.constant 0 : index
    %176 = vector.load %arg6[%c24, %c0_66, %c0_67] : memref<49x49x169xf32, #tpu.memory_space<vmem>>, vector<1x49x169xf32>
    %177 = vector.shape_cast %176 : vector<1x49x169xf32> to vector<49x169xf32>
    %178 = vector.broadcast %175 : vector<1x169xf32> to vector<49x169xf32>
    %179 = arith.mulf %178, %177 : vector<49x169xf32>
    %180 = arith.addf %174, %179 : vector<49x169xf32>
    %181 = vector.extract_strided_slice %29 {offsets = [25, 0], sizes = [1, 169], strides = [1, 1]} : vector<49x169xf32> to vector<1x169xf32>
    %c25 = arith.constant 25 : index
    %c0_68 = arith.constant 0 : index
    %c0_69 = arith.constant 0 : index
    %182 = vector.load %arg6[%c25, %c0_68, %c0_69] : memref<49x49x169xf32, #tpu.memory_space<vmem>>, vector<1x49x169xf32>
    %183 = vector.shape_cast %182 : vector<1x49x169xf32> to vector<49x169xf32>
    %184 = vector.broadcast %181 : vector<1x169xf32> to vector<49x169xf32>
    %185 = arith.mulf %184, %183 : vector<49x169xf32>
    %186 = arith.addf %180, %185 : vector<49x169xf32>
    %187 = vector.extract_strided_slice %29 {offsets = [26, 0], sizes = [1, 169], strides = [1, 1]} : vector<49x169xf32> to vector<1x169xf32>
    %c26 = arith.constant 26 : index
    %c0_70 = arith.constant 0 : index
    %c0_71 = arith.constant 0 : index
    %188 = vector.load %arg6[%c26, %c0_70, %c0_71] : memref<49x49x169xf32, #tpu.memory_space<vmem>>, vector<1x49x169xf32>
    %189 = vector.shape_cast %188 : vector<1x49x169xf32> to vector<49x169xf32>
    %190 = vector.broadcast %187 : vector<1x169xf32> to vector<49x169xf32>
    %191 = arith.mulf %190, %189 : vector<49x169xf32>
    %192 = arith.addf %186, %191 : vector<49x169xf32>
    %193 = vector.extract_strided_slice %29 {offsets = [27, 0], sizes = [1, 169], strides = [1, 1]} : vector<49x169xf32> to vector<1x169xf32>
    %c27 = arith.constant 27 : index
    %c0_72 = arith.constant 0 : index
    %c0_73 = arith.constant 0 : index
    %194 = vector.load %arg6[%c27, %c0_72, %c0_73] : memref<49x49x169xf32, #tpu.memory_space<vmem>>, vector<1x49x169xf32>
    %195 = vector.shape_cast %194 : vector<1x49x169xf32> to vector<49x169xf32>
    %196 = vector.broadcast %193 : vector<1x169xf32> to vector<49x169xf32>
    %197 = arith.mulf %196, %195 : vector<49x169xf32>
    %198 = arith.addf %192, %197 : vector<49x169xf32>
    %199 = vector.extract_strided_slice %29 {offsets = [28, 0], sizes = [1, 169], strides = [1, 1]} : vector<49x169xf32> to vector<1x169xf32>
    %c28 = arith.constant 28 : index
    %c0_74 = arith.constant 0 : index
    %c0_75 = arith.constant 0 : index
    %200 = vector.load %arg6[%c28, %c0_74, %c0_75] : memref<49x49x169xf32, #tpu.memory_space<vmem>>, vector<1x49x169xf32>
    %201 = vector.shape_cast %200 : vector<1x49x169xf32> to vector<49x169xf32>
    %202 = vector.broadcast %199 : vector<1x169xf32> to vector<49x169xf32>
    %203 = arith.mulf %202, %201 : vector<49x169xf32>
    %204 = arith.addf %198, %203 : vector<49x169xf32>
    %205 = vector.extract_strided_slice %29 {offsets = [29, 0], sizes = [1, 169], strides = [1, 1]} : vector<49x169xf32> to vector<1x169xf32>
    %c29 = arith.constant 29 : index
    %c0_76 = arith.constant 0 : index
    %c0_77 = arith.constant 0 : index
    %206 = vector.load %arg6[%c29, %c0_76, %c0_77] : memref<49x49x169xf32, #tpu.memory_space<vmem>>, vector<1x49x169xf32>
    %207 = vector.shape_cast %206 : vector<1x49x169xf32> to vector<49x169xf32>
    %208 = vector.broadcast %205 : vector<1x169xf32> to vector<49x169xf32>
    %209 = arith.mulf %208, %207 : vector<49x169xf32>
    %210 = arith.addf %204, %209 : vector<49x169xf32>
    %211 = vector.extract_strided_slice %29 {offsets = [30, 0], sizes = [1, 169], strides = [1, 1]} : vector<49x169xf32> to vector<1x169xf32>
    %c30 = arith.constant 30 : index
    %c0_78 = arith.constant 0 : index
    %c0_79 = arith.constant 0 : index
    %212 = vector.load %arg6[%c30, %c0_78, %c0_79] : memref<49x49x169xf32, #tpu.memory_space<vmem>>, vector<1x49x169xf32>
    %213 = vector.shape_cast %212 : vector<1x49x169xf32> to vector<49x169xf32>
    %214 = vector.broadcast %211 : vector<1x169xf32> to vector<49x169xf32>
    %215 = arith.mulf %214, %213 : vector<49x169xf32>
    %216 = arith.addf %210, %215 : vector<49x169xf32>
    %217 = vector.extract_strided_slice %29 {offsets = [31, 0], sizes = [1, 169], strides = [1, 1]} : vector<49x169xf32> to vector<1x169xf32>
    %c31 = arith.constant 31 : index
    %c0_80 = arith.constant 0 : index
    %c0_81 = arith.constant 0 : index
    %218 = vector.load %arg6[%c31, %c0_80, %c0_81] : memref<49x49x169xf32, #tpu.memory_space<vmem>>, vector<1x49x169xf32>
    %219 = vector.shape_cast %218 : vector<1x49x169xf32> to vector<49x169xf32>
    %220 = vector.broadcast %217 : vector<1x169xf32> to vector<49x169xf32>
    %221 = arith.mulf %220, %219 : vector<49x169xf32>
    %222 = arith.addf %216, %221 : vector<49x169xf32>
    %223 = vector.extract_strided_slice %29 {offsets = [32, 0], sizes = [1, 169], strides = [1, 1]} : vector<49x169xf32> to vector<1x169xf32>
    %c32 = arith.constant 32 : index
    %c0_82 = arith.constant 0 : index
    %c0_83 = arith.constant 0 : index
    %224 = vector.load %arg6[%c32, %c0_82, %c0_83] : memref<49x49x169xf32, #tpu.memory_space<vmem>>, vector<1x49x169xf32>
    %225 = vector.shape_cast %224 : vector<1x49x169xf32> to vector<49x169xf32>
    %226 = vector.broadcast %223 : vector<1x169xf32> to vector<49x169xf32>
    %227 = arith.mulf %226, %225 : vector<49x169xf32>
    %228 = arith.addf %222, %227 : vector<49x169xf32>
    %229 = vector.extract_strided_slice %29 {offsets = [33, 0], sizes = [1, 169], strides = [1, 1]} : vector<49x169xf32> to vector<1x169xf32>
    %c33 = arith.constant 33 : index
    %c0_84 = arith.constant 0 : index
    %c0_85 = arith.constant 0 : index
    %230 = vector.load %arg6[%c33, %c0_84, %c0_85] : memref<49x49x169xf32, #tpu.memory_space<vmem>>, vector<1x49x169xf32>
    %231 = vector.shape_cast %230 : vector<1x49x169xf32> to vector<49x169xf32>
    %232 = vector.broadcast %229 : vector<1x169xf32> to vector<49x169xf32>
    %233 = arith.mulf %232, %231 : vector<49x169xf32>
    %234 = arith.addf %228, %233 : vector<49x169xf32>
    %235 = vector.extract_strided_slice %29 {offsets = [34, 0], sizes = [1, 169], strides = [1, 1]} : vector<49x169xf32> to vector<1x169xf32>
    %c34 = arith.constant 34 : index
    %c0_86 = arith.constant 0 : index
    %c0_87 = arith.constant 0 : index
    %236 = vector.load %arg6[%c34, %c0_86, %c0_87] : memref<49x49x169xf32, #tpu.memory_space<vmem>>, vector<1x49x169xf32>
    %237 = vector.shape_cast %236 : vector<1x49x169xf32> to vector<49x169xf32>
    %238 = vector.broadcast %235 : vector<1x169xf32> to vector<49x169xf32>
    %239 = arith.mulf %238, %237 : vector<49x169xf32>
    %240 = arith.addf %234, %239 : vector<49x169xf32>
    %241 = vector.extract_strided_slice %29 {offsets = [35, 0], sizes = [1, 169], strides = [1, 1]} : vector<49x169xf32> to vector<1x169xf32>
    %c35 = arith.constant 35 : index
    %c0_88 = arith.constant 0 : index
    %c0_89 = arith.constant 0 : index
    %242 = vector.load %arg6[%c35, %c0_88, %c0_89] : memref<49x49x169xf32, #tpu.memory_space<vmem>>, vector<1x49x169xf32>
    %243 = vector.shape_cast %242 : vector<1x49x169xf32> to vector<49x169xf32>
    %244 = vector.broadcast %241 : vector<1x169xf32> to vector<49x169xf32>
    %245 = arith.mulf %244, %243 : vector<49x169xf32>
    %246 = arith.addf %240, %245 : vector<49x169xf32>
    %247 = vector.extract_strided_slice %29 {offsets = [36, 0], sizes = [1, 169], strides = [1, 1]} : vector<49x169xf32> to vector<1x169xf32>
    %c36 = arith.constant 36 : index
    %c0_90 = arith.constant 0 : index
    %c0_91 = arith.constant 0 : index
    %248 = vector.load %arg6[%c36, %c0_90, %c0_91] : memref<49x49x169xf32, #tpu.memory_space<vmem>>, vector<1x49x169xf32>
    %249 = vector.shape_cast %248 : vector<1x49x169xf32> to vector<49x169xf32>
    %250 = vector.broadcast %247 : vector<1x169xf32> to vector<49x169xf32>
    %251 = arith.mulf %250, %249 : vector<49x169xf32>
    %252 = arith.addf %246, %251 : vector<49x169xf32>
    %253 = vector.extract_strided_slice %29 {offsets = [37, 0], sizes = [1, 169], strides = [1, 1]} : vector<49x169xf32> to vector<1x169xf32>
    %c37 = arith.constant 37 : index
    %c0_92 = arith.constant 0 : index
    %c0_93 = arith.constant 0 : index
    %254 = vector.load %arg6[%c37, %c0_92, %c0_93] : memref<49x49x169xf32, #tpu.memory_space<vmem>>, vector<1x49x169xf32>
    %255 = vector.shape_cast %254 : vector<1x49x169xf32> to vector<49x169xf32>
    %256 = vector.broadcast %253 : vector<1x169xf32> to vector<49x169xf32>
    %257 = arith.mulf %256, %255 : vector<49x169xf32>
    %258 = arith.addf %252, %257 : vector<49x169xf32>
    %259 = vector.extract_strided_slice %29 {offsets = [38, 0], sizes = [1, 169], strides = [1, 1]} : vector<49x169xf32> to vector<1x169xf32>
    %c38 = arith.constant 38 : index
    %c0_94 = arith.constant 0 : index
    %c0_95 = arith.constant 0 : index
    %260 = vector.load %arg6[%c38, %c0_94, %c0_95] : memref<49x49x169xf32, #tpu.memory_space<vmem>>, vector<1x49x169xf32>
    %261 = vector.shape_cast %260 : vector<1x49x169xf32> to vector<49x169xf32>
    %262 = vector.broadcast %259 : vector<1x169xf32> to vector<49x169xf32>
    %263 = arith.mulf %262, %261 : vector<49x169xf32>
    %264 = arith.addf %258, %263 : vector<49x169xf32>
    %265 = vector.extract_strided_slice %29 {offsets = [39, 0], sizes = [1, 169], strides = [1, 1]} : vector<49x169xf32> to vector<1x169xf32>
    %c39 = arith.constant 39 : index
    %c0_96 = arith.constant 0 : index
    %c0_97 = arith.constant 0 : index
    %266 = vector.load %arg6[%c39, %c0_96, %c0_97] : memref<49x49x169xf32, #tpu.memory_space<vmem>>, vector<1x49x169xf32>
    %267 = vector.shape_cast %266 : vector<1x49x169xf32> to vector<49x169xf32>
    %268 = vector.broadcast %265 : vector<1x169xf32> to vector<49x169xf32>
    %269 = arith.mulf %268, %267 : vector<49x169xf32>
    %270 = arith.addf %264, %269 : vector<49x169xf32>
    %271 = vector.extract_strided_slice %29 {offsets = [40, 0], sizes = [1, 169], strides = [1, 1]} : vector<49x169xf32> to vector<1x169xf32>
    %c40 = arith.constant 40 : index
    %c0_98 = arith.constant 0 : index
    %c0_99 = arith.constant 0 : index
    %272 = vector.load %arg6[%c40, %c0_98, %c0_99] : memref<49x49x169xf32, #tpu.memory_space<vmem>>, vector<1x49x169xf32>
    %273 = vector.shape_cast %272 : vector<1x49x169xf32> to vector<49x169xf32>
    %274 = vector.broadcast %271 : vector<1x169xf32> to vector<49x169xf32>
    %275 = arith.mulf %274, %273 : vector<49x169xf32>
    %276 = arith.addf %270, %275 : vector<49x169xf32>
    %277 = vector.extract_strided_slice %29 {offsets = [41, 0], sizes = [1, 169], strides = [1, 1]} : vector<49x169xf32> to vector<1x169xf32>
    %c41 = arith.constant 41 : index
    %c0_100 = arith.constant 0 : index
    %c0_101 = arith.constant 0 : index
    %278 = vector.load %arg6[%c41, %c0_100, %c0_101] : memref<49x49x169xf32, #tpu.memory_space<vmem>>, vector<1x49x169xf32>
    %279 = vector.shape_cast %278 : vector<1x49x169xf32> to vector<49x169xf32>
    %280 = vector.broadcast %277 : vector<1x169xf32> to vector<49x169xf32>
    %281 = arith.mulf %280, %279 : vector<49x169xf32>
    %282 = arith.addf %276, %281 : vector<49x169xf32>
    %283 = vector.extract_strided_slice %29 {offsets = [42, 0], sizes = [1, 169], strides = [1, 1]} : vector<49x169xf32> to vector<1x169xf32>
    %c42 = arith.constant 42 : index
    %c0_102 = arith.constant 0 : index
    %c0_103 = arith.constant 0 : index
    %284 = vector.load %arg6[%c42, %c0_102, %c0_103] : memref<49x49x169xf32, #tpu.memory_space<vmem>>, vector<1x49x169xf32>
    %285 = vector.shape_cast %284 : vector<1x49x169xf32> to vector<49x169xf32>
    %286 = vector.broadcast %283 : vector<1x169xf32> to vector<49x169xf32>
    %287 = arith.mulf %286, %285 : vector<49x169xf32>
    %288 = arith.addf %282, %287 : vector<49x169xf32>
    %289 = vector.extract_strided_slice %29 {offsets = [43, 0], sizes = [1, 169], strides = [1, 1]} : vector<49x169xf32> to vector<1x169xf32>
    %c43 = arith.constant 43 : index
    %c0_104 = arith.constant 0 : index
    %c0_105 = arith.constant 0 : index
    %290 = vector.load %arg6[%c43, %c0_104, %c0_105] : memref<49x49x169xf32, #tpu.memory_space<vmem>>, vector<1x49x169xf32>
    %291 = vector.shape_cast %290 : vector<1x49x169xf32> to vector<49x169xf32>
    %292 = vector.broadcast %289 : vector<1x169xf32> to vector<49x169xf32>
    %293 = arith.mulf %292, %291 : vector<49x169xf32>
    %294 = arith.addf %288, %293 : vector<49x169xf32>
    %295 = vector.extract_strided_slice %29 {offsets = [44, 0], sizes = [1, 169], strides = [1, 1]} : vector<49x169xf32> to vector<1x169xf32>
    %c44 = arith.constant 44 : index
    %c0_106 = arith.constant 0 : index
    %c0_107 = arith.constant 0 : index
    %296 = vector.load %arg6[%c44, %c0_106, %c0_107] : memref<49x49x169xf32, #tpu.memory_space<vmem>>, vector<1x49x169xf32>
    %297 = vector.shape_cast %296 : vector<1x49x169xf32> to vector<49x169xf32>
    %298 = vector.broadcast %295 : vector<1x169xf32> to vector<49x169xf32>
    %299 = arith.mulf %298, %297 : vector<49x169xf32>
    %300 = arith.addf %294, %299 : vector<49x169xf32>
    %301 = vector.extract_strided_slice %29 {offsets = [45, 0], sizes = [1, 169], strides = [1, 1]} : vector<49x169xf32> to vector<1x169xf32>
    %c45 = arith.constant 45 : index
    %c0_108 = arith.constant 0 : index
    %c0_109 = arith.constant 0 : index
    %302 = vector.load %arg6[%c45, %c0_108, %c0_109] : memref<49x49x169xf32, #tpu.memory_space<vmem>>, vector<1x49x169xf32>
    %303 = vector.shape_cast %302 : vector<1x49x169xf32> to vector<49x169xf32>
    %304 = vector.broadcast %301 : vector<1x169xf32> to vector<49x169xf32>
    %305 = arith.mulf %304, %303 : vector<49x169xf32>
    %306 = arith.addf %300, %305 : vector<49x169xf32>
    %307 = vector.extract_strided_slice %29 {offsets = [46, 0], sizes = [1, 169], strides = [1, 1]} : vector<49x169xf32> to vector<1x169xf32>
    %c46 = arith.constant 46 : index
    %c0_110 = arith.constant 0 : index
    %c0_111 = arith.constant 0 : index
    %308 = vector.load %arg6[%c46, %c0_110, %c0_111] : memref<49x49x169xf32, #tpu.memory_space<vmem>>, vector<1x49x169xf32>
    %309 = vector.shape_cast %308 : vector<1x49x169xf32> to vector<49x169xf32>
    %310 = vector.broadcast %307 : vector<1x169xf32> to vector<49x169xf32>
    %311 = arith.mulf %310, %309 : vector<49x169xf32>
    %312 = arith.addf %306, %311 : vector<49x169xf32>
    %313 = vector.extract_strided_slice %29 {offsets = [47, 0], sizes = [1, 169], strides = [1, 1]} : vector<49x169xf32> to vector<1x169xf32>
    %c47 = arith.constant 47 : index
    %c0_112 = arith.constant 0 : index
    %c0_113 = arith.constant 0 : index
    %314 = vector.load %arg6[%c47, %c0_112, %c0_113] : memref<49x49x169xf32, #tpu.memory_space<vmem>>, vector<1x49x169xf32>
    %315 = vector.shape_cast %314 : vector<1x49x169xf32> to vector<49x169xf32>
    %316 = vector.broadcast %313 : vector<1x169xf32> to vector<49x169xf32>
    %317 = arith.mulf %316, %315 : vector<49x169xf32>
    %318 = arith.addf %312, %317 : vector<49x169xf32>
    %319 = vector.extract_strided_slice %29 {offsets = [48, 0], sizes = [1, 169], strides = [1, 1]} : vector<49x169xf32> to vector<1x169xf32>
    %c48 = arith.constant 48 : index
    %c0_114 = arith.constant 0 : index
    %c0_115 = arith.constant 0 : index
    %320 = vector.load %arg6[%c48, %c0_114, %c0_115] : memref<49x49x169xf32, #tpu.memory_space<vmem>>, vector<1x49x169xf32>
    %321 = vector.shape_cast %320 : vector<1x49x169xf32> to vector<49x169xf32>
    %322 = vector.broadcast %319 : vector<1x169xf32> to vector<49x169xf32>
    %323 = arith.mulf %322, %321 : vector<49x169xf32>
    %324 = arith.addf %318, %323 : vector<49x169xf32>
    %cst_116 = arith.constant dense<0.000000e+00> : vector<49xf32>
    %325 = vector.multi_reduction <add>, %324, %cst_116 [1] : vector<49x169xf32> to vector<49xf32>
    %326 = vector.shape_cast %325 : vector<49xf32> to vector<49x1xf32>
    %c0_117 = arith.constant 0 : index
    %c0_118 = arith.constant 0 : index
    %327 = vector.load %arg7[%c0_117, %c0_118] : memref<49x1xf32, #tpu.memory_space<vmem>>, vector<49x1xf32>
    %328 = arith.addf %326, %327 : vector<49x1xf32>
    %c0_119 = arith.constant 0 : index
    %c0_120 = arith.constant 0 : index
    %c0_121 = arith.constant 0 : index
    %329 = vector.load %arg8[%c0_119, %c0_120, %c0_121] : memref<1x49x1xf32, #tpu.memory_space<vmem>>, vector<1x49x1xf32>
    %330 = vector.shape_cast %329 : vector<1x49x1xf32> to vector<49x1xf32>
    %331 = vector.shape_cast %328 : vector<49x1xf32> to vector<1x49x1xf32>
    tpu.vector_store %arg8[%c0_119, %c0_120, %c0_121], %331 {strides = array<i32>} : memref<1x49x1xf32, #tpu.memory_space<vmem>>, vector<1x49x1xf32>,
    return
  }
  func.func @transform_0(%arg0: i32) -> (i32, i32, i32) {
    %c0_i32 = arith.constant 0 : i32
    %c0_i32_0 = arith.constant 0 : i32
    %c0_i32_1 = arith.constant 0 : i32
    return %arg0, %c0_i32, %c0_i32_0 : i32, i32, i32
  }
  func.func @transform_1(%arg0: i32) -> (i32, i32) {
    %c0_i32 = arith.constant 0 : i32
    %c0_i32_0 = arith.constant 0 : i32
    %c0_i32_1 = arith.constant 0 : i32
    return %c0_i32, %c0_i32_0 : i32, i32
  }
  func.func @transform_2(%arg0: i32) -> (i32, i32) {
    %c0_i32 = arith.constant 0 : i32
    %c0_i32_0 = arith.constant 0 : i32
    %c0_i32_1 = arith.constant 0 : i32
    return %c0_i32, %c0_i32_0 : i32, i32
  }
  func.func @transform_3(%arg0: i32) -> (i32, i32) {
    %c0_i32 = arith.constant 0 : i32
    %c0_i32_0 = arith.constant 0 : i32
    %c0_i32_1 = arith.constant 0 : i32
    return %c0_i32, %c0_i32_0 : i32, i32
  }
  func.func @transform_4(%arg0: i32) -> (i32, i32) {
    %c0_i32 = arith.constant 0 : i32
    %c0_i32_0 = arith.constant 0 : i32
    %c0_i32_1 = arith.constant 0 : i32
    return %c0_i32, %c0_i32_0 : i32, i32
  }
  func.func @transform_5(%arg0: i32) -> (i32, i32, i32) {
    %c0_i32 = arith.constant 0 : i32
    %c0_i32_0 = arith.constant 0 : i32
    %c0_i32_1 = arith.constant 0 : i32
    %c0_i32_2 = arith.constant 0 : i32
    return %c0_i32, %c0_i32_0, %c0_i32_1 : i32, i32, i32
  }
  func.func @transform_6(%arg0: i32) -> (i32, i32) {
    %c0_i32 = arith.constant 0 : i32
    %c0_i32_0 = arith.constant 0 : i32
    %c0_i32_1 = arith.constant 0 : i32
    return %c0_i32, %c0_i32_0 : i32, i32
  }
  func.func @transform_7(%arg0: i32) -> (i32, i32, i32) {
    %c0_i32 = arith.constant 0 : i32
    %c0_i32_0 = arith.constant 0 : i32
    %c0_i32_1 = arith.constant 0 : i32
    return %arg0, %c0_i32, %c0_i32_0 : i32, i32, i32
  }
}

</mosaic_0001>

<llo_original>
// kernel: _lambda_.1
$region0: #{_lambda_.1}
  #allocation0 [shape = 'u32[]', space=smem, size = 0x4, offset = 0x4, fixed_abs, tag = 'smem constant byte address 0x4 - core index']
  #allocation1 [shape = 'u32[144,128]{1,0:T(1,128)}', space=vmem, size = 0x12000, scoped, tag = 'internal scratch']
  %s0 = inlined_call_operand.vmem [shape: f32[2,512,49], index: 0, kind: input, shape index: {}]
  %s1 = inlined_call_operand.hbm [shape: f32[1,49], index: 1, kind: input, shape index: {}]
  %s2 = inlined_call_operand.hbm [shape: f32[1,49], index: 2, kind: input, shape index: {}]
  %s3 = inlined_call_operand.hbm [shape: f32[49,169], index: 3, kind: input, shape index: {}]
  %s4 = inlined_call_operand.hbm [shape: f32[49,512], index: 4, kind: input, shape index: {}]
  %s5 = inlined_call_operand.hbm [shape: f32[49,49,169], index: 5, kind: input, shape index: {}]
  %s6 = inlined_call_operand.hbm [shape: f32[49,1], index: 6, kind: input, shape index: {}]
  %s7 = inlined_call_operand.vmem [shape: f32[2,49,1], index: 7, kind: output, shape index: {}]
  %s8 = sld [smem:[#allocation0]]
  $region85: #{_lambda_.1} parent=0
    _
  %s10 = ssub.s32 1, %s8
  %s11 = scalar_select 0, %s10, %s8
  $region1: #{_lambda_.1} parent=0
    #allocation2 [shape = 'u8[512]{0}', space=vmem, size = 0x400, scoped, tag = 'input window, operand 1, single buffered']
    #allocation3 [shape = 's32[2]{0}', space=sflag, size = 0x8, scoped, tag = 'scoped memory for _lambda_.1']
    #allocation4 [shape = 'u8[512]{0}', space=vmem, size = 0x400, scoped, tag = 'input window, operand 2, single buffered']
    #allocation5 [shape = 's32[1]{0}', space=sflag, size = 0x4, scoped, tag = 'scoped memory for _lambda_.1']
    #allocation6 [shape = 'u8[57344]{0}', space=vmem, size = 0xe000, scoped, tag = 'input window, operand 3, single buffered']
    #allocation7 [shape = 'u8[114688]{0}', space=vmem, size = 0x1c000, scoped, tag = 'input window, operand 4, single buffered']
    #allocation8 [shape = 's32[1]{0}', space=sflag, size = 0x4, scoped, tag = 'scoped memory for _lambda_.1']
    #allocation9 [shape = 'u8[2809856]{0}', space=vmem, size = 0x2ae000, scoped, tag = 'input window, operand 5, single buffered']
    #allocation10 [shape = 'u8[28672]{0}', space=vmem, size = 0x7000, scoped, tag = 'input window, operand 6, single buffered']
    #allocation11 [shape = 's32[1]{0}', space=sflag, size = 0x4, scoped, tag = 'scoped memory for _lambda_.1']
    %12 = vsyncpa [#allocation3], 0
    %13 = vsyncpa [#allocation5], 0
    %14 = vsyncpa [#allocation8], 0
    %15 = vsyncpa [#allocation11], 0
    loop: start=0, step=1, limit=4
    $region2: #{_lambda_.1} parent=1 // loop_pre_header
      _
    $region3: #{_lambda_.1} parent=1 // loop_header
      %s17 = sphi 0, %s21
      %p18 = scmp.ge.s32.totalorder %s17, 4
      %s27 = sphi 0, %s29
      %s30 = sphi 0, %s27
      %s31 = sphi 0, %s30
      %s47 = sphi 0, %s31
      %s51 = sphi 0, %s51
      %s53 = sphi 0, %s51
      %s54 = sphi 0, %s53
      %s68 = sphi 0, %s54
      %s72 = sphi 0, %s72
      %s74 = sphi 0, %s72
      %s75 = sphi 0, %s74
      %s89 = sphi 0, %s75
      %s93 = sphi 0, %s93
      %s95 = sphi 0, %s93
      %s96 = sphi 0, %s95
      %s110 = sphi 0, %s96
      %s114 = sphi 0, %s114
      %s116 = sphi 0, %s114
      %s117 = sphi 0, %s116
      %s131 = sphi 0, %s117
      %s135 = sphi 0, %s135
      %s137 = sphi 0, %s135
      %s138 = sphi 0, %s137
      %s152 = sphi 0, %s138
      %s156 = sphi 0, %s156
      %s158 = sphi 0, %s156
      %s159 = sphi 0, %s158
      %s173 = sphi 0, %s159
      %s179 = sphi 0, %s181
      %s182 = sphi 0, %s179
      %s183 = sphi 0, %s182
      %s199 = sphi 0, %s183
    $region4: #{_lambda_.1} parent=1 // loop_header_branch
      %20 = sbr.rel (%p18) target = $region8
    $region5: #{_lambda_.1} parent=1 // loop_body
      %s22 = ssub.s32 %s17, 1
      %s23 = ssub.s32 %s17, 2
      %s24 = sadd.s32 %s17, 1
      %s25 = ssub.s32 %s17, %s24
      %p26 = scmp.eq.s32.totalorder %s25, 0
      %s28 = sadd.s32 %s27, 1
      %s29 = scalar_select %p26, %s27, %s28
      %p32 = pneg %p26
      %p33 = scmp.eq.s32.totalorder %s17, 1
      %p34 = por %p32, %p33
      %p35 = scmp.ne.s32.totalorder %s27, %s30
      %p36 = scmp.eq.s32.totalorder %s17, 0
      %p37 = por %p35, %p36
      %p38 = scmp.ne.s32.totalorder %s27, %s30
      %p39 = scmp.eq.s32.totalorder %s22, 1
      %p40 = por %p38, %p39
      %p41 = scmp.ne.s32.totalorder %s30, %s31
      %p42 = scmp.eq.s32.totalorder %s22, 0
      %p43 = por %p41, %p42
      %p44 = scmp.ne.s32.totalorder %s30, %s31
      %p45 = scmp.eq.s32.totalorder %s23, 1
      %p46 = por %p44, %p45
      %p48 = scmp.ne.s32.totalorder %s31, %s47
      %p49 = scmp.eq.s32.totalorder %s23, 0
      %p50 = por %p48, %p49
      %s52 = sadd.s32 %s51, 1
      %p55 = scmp.eq.s32.totalorder %s17, 1
      %p56 = scmp.ne.s32.totalorder %s51, %s53
      %p57 = scmp.eq.s32.totalorder %s17, 0
      %p58 = por %p56, %p57
      %p59 = scmp.ne.s32.totalorder %s51, %s53
      %p60 = scmp.eq.s32.totalorder %s22, 1
      %p61 = por %p59, %p60
      %p62 = scmp.ne.s32.totalorder %s53, %s54
      %p63 = scmp.eq.s32.totalorder %s22, 0
      %p64 = por %p62, %p63
      %p65 = scmp.ne.s32.totalorder %s53, %s54
      %p66 = scmp.eq.s32.totalorder %s23, 1
      %p67 = por %p65, %p66
      %p69 = scmp.ne.s32.totalorder %s54, %s68
      %p70 = scmp.eq.s32.totalorder %s23, 0
      %p71 = por %p69, %p70
      %s73 = sadd.s32 %s72, 1
      %p76 = scmp.eq.s32.totalorder %s17, 1
      %p77 = scmp.ne.s32.totalorder %s72, %s74
      %p78 = scmp.eq.s32.totalorder %s17, 0
      %p79 = por %p77, %p78
      %p80 = scmp.ne.s32.totalorder %s72, %s74
      %p81 = scmp.eq.s32.totalorder %s22, 1
      %p82 = por %p80, %p81
      %p83 = scmp.ne.s32.totalorder %s74, %s75
      %p84 = scmp.eq.s32.totalorder %s22, 0
      %p85 = por %p83, %p84
      %p86 = scmp.ne.s32.totalorder %s74, %s75
      %p87 = scmp.eq.s32.totalorder %s23, 1
      %p88 = por %p86, %p87
      %p90 = scmp.ne.s32.totalorder %s75, %s89
      %p91 = scmp.eq.s32.totalorder %s23, 0
      %p92 = por %p90, %p91
      %s94 = sadd.s32 %s93, 1
      %p97 = scmp.eq.s32.totalorder %s17, 1
      %p98 = scmp.ne.s32.totalorder %s93, %s95
      %p99 = scmp.eq.s32.totalorder %s17, 0
      %p100 = por %p98, %p99
      %p101 = scmp.ne.s32.totalorder %s93, %s95
      %p102 = scmp.eq.s32.totalorder %s22, 1
      %p103 = por %p101, %p102
      %p104 = scmp.ne.s32.totalorder %s95, %s96
      %p105 = scmp.eq.s32.totalorder %s22, 0
      %p106 = por %p104, %p105
      %p107 = scmp.ne.s32.totalorder %s95, %s96
      %p108 = scmp.eq.s32.totalorder %s23, 1
      %p109 = por %p107, %p108
      %p111 = scmp.ne.s32.totalorder %s96, %s110
      %p112 = scmp.eq.s32.totalorder %s23, 0
      %p113 = por %p111, %p112
      %s115 = sadd.s32 %s114, 1
      %p118 = scmp.eq.s32.totalorder %s17, 1
      %p119 = scmp.ne.s32.totalorder %s114, %s116
      %p120 = scmp.eq.s32.totalorder %s17, 0
      %p121 = por %p119, %p120
      %p122 = scmp.ne.s32.totalorder %s114, %s116
      %p123 = scmp.eq.s32.totalorder %s22, 1
      %p124 = por %p122, %p123
      %p125 = scmp.ne.s32.totalorder %s116, %s117
      %p126 = scmp.eq.s32.totalorder %s22, 0
      %p127 = por %p125, %p126
      %p128 = scmp.ne.s32.totalorder %s116, %s117
      %p129 = scmp.eq.s32.totalorder %s23, 1
      %p130 = por %p128, %p129
      %p132 = scmp.ne.s32.totalorder %s117, %s131
      %p133 = scmp.eq.s32.totalorder %s23, 0
      %p134 = por %p132, %p133
      %s136 = sadd.s32 %s135, 1
      %p139 = scmp.eq.s32.totalorder %s17, 1
      %p140 = scmp.ne.s32.totalorder %s135, %s137
      %p141 = scmp.eq.s32.totalorder %s17, 0
      %p142 = por %p140, %p141
      %p143 = scmp.ne.s32.totalorder %s135, %s137
      %p144 = scmp.eq.s32.totalorder %s22, 1
      %p145 = por %p143, %p144
      %p146 = scmp.ne.s32.totalorder %s137, %s138
      %p147 = scmp.eq.s32.totalorder %s22, 0
      %p148 = por %p146, %p147
      %p149 = scmp.ne.s32.totalorder %s137, %s138
      %p150 = scmp.eq.s32.totalorder %s23, 1
      %p151 = por %p149, %p150
      %p153 = scmp.ne.s32.totalorder %s138, %s152
      %p154 = scmp.eq.s32.totalorder %s23, 0
      %p155 = por %p153, %p154
      %s157 = sadd.s32 %s156, 1
      %p160 = scmp.eq.s32.totalorder %s17, 1
      %p161 = scmp.ne.s32.totalorder %s156, %s158
      %p162 = scmp.eq.s32.totalorder %s17, 0
      %p163 = por %p161, %p162
      %p164 = scmp.ne.s32.totalorder %s156, %s158
      %p165 = scmp.eq.s32.totalorder %s22, 1
      %p166 = por %p164, %p165
      %p167 = scmp.ne.s32.totalorder %s158, %s159
      %p168 = scmp.eq.s32.totalorder %s22, 0
      %p169 = por %p167, %p168
      %p170 = scmp.ne.s32.totalorder %s158, %s159
      %p171 = scmp.eq.s32.totalorder %s23, 1
      %p172 = por %p170, %p171
      %p174 = scmp.ne.s32.totalorder %s159, %s173
      %p175 = scmp.eq.s32.totalorder %s23, 0
      %p176 = por %p174, %p175
      %s177 = ssub.s32 %s17, %s24
      %p178 = scmp.eq.s32.totalorder %s177, 0
      %s180 = sadd.s32 %s179, 1
      %s181 = scalar_select %p178, %s179, %s180
      %p184 = pneg %p178
      %p185 = scmp.eq.s32.totalorder %s17, 1
      %p186 = por %p184, %p185
      %p187 = scmp.ne.s32.totalorder %s179, %s182
      %p188 = scmp.eq.s32.totalorder %s17, 0
      %p189 = por %p187, %p188
      %p190 = scmp.ne.s32.totalorder %s179, %s182
      %p191 = scmp.eq.s32.totalorder %s22, 1
      %p192 = por %p190, %p191
      %p193 = scmp.ne.s32.totalorder %s182, %s183
      %p194 = scmp.eq.s32.totalorder %s22, 0
      %p195 = por %p193, %p194
      %p196 = scmp.ne.s32.totalorder %s182, %s183
      %p197 = scmp.eq.s32.totalorder %s23, 1
      %p198 = por %p196, %p197
      %p200 = scmp.ne.s32.totalorder %s183, %s199
      %p201 = scmp.eq.s32.totalorder %s23, 0
      %p202 = por %p200, %p201
      %p203 = scmp.le.s32.totalorder 1, %s17
      %p204 = scmp.lt.s32.totalorder %s17, 3
      %p205 = pnand %p203, %p204
      %p206 = pneg %p205
      // Predicated region
      $region9: #{_lambda_.1} parent=5 // pred_check
        _
      $region10: #{_lambda_.1} parent=5 // pred_check_branch
        %208 = sbr.rel (%p205) target = $region12
      $region11: #{_lambda_.1} parent=5 // pred_region
        %s209 = ssub.s32 %s17, 1
        // Predicated region
        $region13: #{_lambda_.1} parent=11 // pred_check
          %p210 = pneg %p64
        $region14: #{_lambda_.1} parent=11 // pred_check_branch
          %212 = sbr.rel (%p210) target = $region16
        $region15: #{_lambda_.1} parent=11 // pred_region
          %s214 = ssub.s32 16, 16
          %215 = vsyncadd [#allocation3], %s214
          %s217 = sshll.u32 [#allocation2], 4
          %s218 = int_to_ptr.vmem [resolvable:$true] %s217
          %220 = dma.hbm_to_vmem [thread:$0]  %s1, 16, %s218, [#allocation3]
        $region16: #{_lambda_.1} parent=11 // pred_fallthru
          _
        // Predicated region
        $region17: #{_lambda_.1} parent=11 // pred_check
          %p221 = pneg %p85
        $region18: #{_lambda_.1} parent=11 // pred_check_branch
          %223 = sbr.rel (%p221) target = $region20
        $region19: #{_lambda_.1} parent=11 // pred_region
          %s225 = ssub.s32 16, 16
          %226 = vsyncadd [#allocation5], %s225
          %s228 = sshll.u32 [#allocation4], 4
          %s229 = int_to_ptr.vmem [resolvable:$true] %s228
          %231 = dma.hbm_to_vmem [thread:$0]  %s2, 16, %s229, [#allocation5]
        $region20: #{_lambda_.1} parent=11 // pred_fallthru
          _
        // Predicated region
        $region21: #{_lambda_.1} parent=11 // pred_check
          %p232 = pneg %p106
        $region22: #{_lambda_.1} parent=11 // pred_check_branch
          %234 = sbr.rel (%p232) target = $region24
        $region23: #{_lambda_.1} parent=11 // pred_region
          %s236 = ssub.s32 1792, 1792
          %237 = vsyncadd [#allocation5], %s236
          %s238 = sshll.u32 [#allocation6], 4
          %s239 = int_to_ptr.vmem [resolvable:$true] %s238
          %244 = dma.hbm_to_vmem [thread:$0]  %s3, 1792, %s239, [#allocation5], 256, 256, 16
        $region24: #{_lambda_.1} parent=11 // pred_fallthru
          _
        // Predicated region
        $region25: #{_lambda_.1} parent=11 // pred_check
          %p245 = pneg %p127
        $region26: #{_lambda_.1} parent=11 // pred_check_branch
          %247 = sbr.rel (%p245) target = $region28
        $region27: #{_lambda_.1} parent=11 // pred_region
          %s249 = ssub.s32 3584, 3584
          %250 = vsyncadd [#allocation8], %s249
          %s251 = sshll.u32 [#allocation7], 4
          %s252 = int_to_ptr.vmem [resolvable:$true] %s251
          %257 = dma.hbm_to_vmem [thread:$0]  %s4, 3584, %s252, [#allocation8], 512, 512, 32
        $region28: #{_lambda_.1} parent=11 // pred_fallthru
          _
        // Predicated region
        $region29: #{_lambda_.1} parent=11 // pred_check
          %p258 = pneg %p148
        $region30: #{_lambda_.1} parent=11 // pred_check_branch
          %260 = sbr.rel (%p258) target = $region32
        $region31: #{_lambda_.1} parent=11 // pred_region
          %s262 = ssub.s32 87808, 87808
          %263 = vsyncadd [#allocation8], %s262
          %s264 = sshll.u32 [#allocation9], 4
          %s265 = int_to_ptr.vmem [resolvable:$true] %s264
          %270 = dma.hbm_to_vmem [thread:$0]  %s5, 87808, %s265, [#allocation8], 256, 256, 16
        $region32: #{_lambda_.1} parent=11 // pred_fallthru
          _
        // Predicated region
        $region33: #{_lambda_.1} parent=11 // pred_check
          %p271 = pneg %p169
        $region34: #{_lambda_.1} parent=11 // pred_check_branch
          %273 = sbr.rel (%p271) target = $region36
        $region35: #{_lambda_.1} parent=11 // pred_region
          %s275 = ssub.s32 896, 896
          %276 = vsyncadd [#allocation11], %s275
          %s277 = sshll.u32 [#allocation10], 4
          %s278 = int_to_ptr.vmem [resolvable:$true] %s277
          %283 = dma.hbm_to_vmem [thread:$0]  %s6, 896, %s278, [#allocation11], 128, 128, 8
        $region36: #{_lambda_.1} parent=11 // pred_fallthru
          _
      $region12: #{_lambda_.1} parent=5 // pred_fallthru
        _
      %p284 = scmp.lt.s32.totalorder %s17, 2
      // Predicated region
      $region37: #{_lambda_.1} parent=5 // pred_check
        %p285 = pneg %p284
      $region38: #{_lambda_.1} parent=5 // pred_check_branch
        %287 = sbr.rel (%p285) target = $region40
      $region39: #{_lambda_.1} parent=5 // pred_region
        // Predicated region
        $region41: #{_lambda_.1} parent=39 // pred_check
          %p288 = pneg %p37
        $region42: #{_lambda_.1} parent=39 // pred_check_branch
          %290 = sbr.rel (%p288) target = $region44
        $region43: #{_lambda_.1} parent=39 // pred_region
          %p291 = scmp.lt.s32.totalorder %s17, 1
          %s292 = scalar_select %p291, %s17, 1
          %s293 = smul.addr %s292, 64
          %s294 = smul.addr %s293, 8
          %s295 = scalar_lea.vmem %s0, %s294
        $region44: #{_lambda_.1} parent=39 // pred_fallthru
          _
      $region40: #{_lambda_.1} parent=5 // pred_fallthru
        _
      %p296 = scmp.le.s32.totalorder 1, %s17
      %p297 = scmp.lt.s32.totalorder %s17, 3
      %p298 = pnand %p296, %p297
      %p299 = pneg %p298
      // Predicated region
      $region45: #{_lambda_.1} parent=5 // pred_check
        _
      $region46: #{_lambda_.1} parent=5 // pred_check_branch
        %301 = sbr.rel (%p298) target = $region48
      $region47: #{_lambda_.1} parent=5 // pred_region
        %s302 = ssub.s32 %s17, 1
        // Predicated region
        $region49: #{_lambda_.1} parent=47 // pred_check
          %p303 = pneg %p64
        $region50: #{_lambda_.1} parent=47 // pred_check_branch
          %305 = sbr.rel (%p303) target = $region52
        $region51: #{_lambda_.1} parent=47 // pred_region
          %306 = dma.done [#allocation3], 16
        $region52: #{_lambda_.1} parent=47 // pred_fallthru
          _
        // Predicated region
        $region53: #{_lambda_.1} parent=47 // pred_check
          %p307 = pneg %p85
        $region54: #{_lambda_.1} parent=47 // pred_check_branch
          %309 = sbr.rel (%p307) target = $region56
        $region55: #{_lambda_.1} parent=47 // pred_region
          %310 = dma.done [#allocation5], 16
        $region56: #{_lambda_.1} parent=47 // pred_fallthru
          _
        // Predicated region
        $region57: #{_lambda_.1} parent=47 // pred_check
          %p311 = pneg %p106
        $region58: #{_lambda_.1} parent=47 // pred_check_branch
          %313 = sbr.rel (%p311) target = $region60
        $region59: #{_lambda_.1} parent=47 // pred_region
          %314 = dma.done [#allocation5], 1792
        $region60: #{_lambda_.1} parent=47 // pred_fallthru
          _
        // Predicated region
        $region61: #{_lambda_.1} parent=47 // pred_check
          %p315 = pneg %p127
        $region62: #{_lambda_.1} parent=47 // pred_check_branch
          %317 = sbr.rel (%p315) target = $region64
        $region63: #{_lambda_.1} parent=47 // pred_region
          %318 = dma.done [#allocation8], 3584
        $region64: #{_lambda_.1} parent=47 // pred_fallthru
          _
        // Predicated region
        $region65: #{_lambda_.1} parent=47 // pred_check
          %p319 = pneg %p148
        $region66: #{_lambda_.1} parent=47 // pred_check_branch
          %321 = sbr.rel (%p319) target = $region68
        $region67: #{_lambda_.1} parent=47 // pred_region
          %322 = dma.done [#allocation8], 87808
        $region68: #{_lambda_.1} parent=47 // pred_fallthru
          _
        // Predicated region
        $region69: #{_lambda_.1} parent=47 // pred_check
          %p323 = pneg %p169
        $region70: #{_lambda_.1} parent=47 // pred_check_branch
          %325 = sbr.rel (%p323) target = $region72
        $region71: #{_lambda_.1} parent=47 // pred_region
          %326 = dma.done [#allocation11], 896
        $region72: #{_lambda_.1} parent=47 // pred_fallthru
          _
        %p327 = scmp.lt.s32.totalorder %s22, 1
        %s328 = scalar_select %p327, %s22, 1
        %s329 = smul.addr %s328, 64
        %s330 = smul.addr %s329, 8
        %s331 = scalar_lea.vmem %s0, %s330
        %p332 = pneg %p43
        %p333 = pneg %p40
        %p334 = pneg %p64
        %p335 = pneg %p61
        %p336 = pneg %p85
        %p337 = pneg %p82
        %p338 = pneg %p106
        %p339 = pneg %p103
        %p340 = pneg %p127
        %p341 = pneg %p124
        %p342 = pneg %p148
        %p343 = pneg %p145
        %p344 = pneg %p169
        %p345 = pneg %p166
        %p346 = pneg %p195
        %p347 = pneg %p192
        %p348 = scmp.lt.s32.totalorder %s22, 1
        %s349 = scalar_select %p348, %s22, 1
        %s350 = smul.addr %s349, 7
        %s351 = smul.addr %s350, 8
        %s352 = scalar_lea.vmem %s7, %s351
        %p353 = scmp.lt.s32.totalorder %s22, 1
        %s354 = scalar_select %p353, %s22, 1
        %s355 = smul.addr %s354, 64
        %s356 = smul.addr %s355, 8
        %s357 = scalar_lea.vmem %s0, %s356
        %p358 = scmp.lt.s32.totalorder %s22, 1
        %s359 = scalar_select %p358, %s22, 1
        %s360 = smul.addr %s359, 7
        %s361 = smul.addr %s360, 8
        %s362 = scalar_lea.vmem %s7, %s361
        %v363 = vld [vmem:[%s357] sm:$0xff]
        %v364 = vld [vmem:[%s357 + $0x8] sm:$0xff]
        %v365 = vld [vmem:[%s357 + $0x10] sm:$0xff]
        %v366 = vld [vmem:[%s357 + $0x18] sm:$0xff]
        %v367 = vld [vmem:[%s357 + $0x20] sm:$0xff]
        %v368 = vld [vmem:[%s357 + $0x28] sm:$0xff]
        %v369 = vld [vmem:[%s357 + $0x30] sm:$0xff]
        %v370 = vld [vmem:[%s357 + $0x38] sm:$0xff]
        %v371 = vld [vmem:[%s357 + $0x40] sm:$0xff]
        %v372 = vld [vmem:[%s357 + $0x48] sm:$0xff]
        %v373 = vld [vmem:[%s357 + $0x50] sm:$0xff]
        %v374 = vld [vmem:[%s357 + $0x58] sm:$0xff]
        %v375 = vld [vmem:[%s357 + $0x60] sm:$0xff]
        %v376 = vld [vmem:[%s357 + $0x68] sm:$0xff]
        %v377 = vld [vmem:[%s357 + $0x70] sm:$0xff]
        %v378 = vld [vmem:[%s357 + $0x78] sm:$0xff]
        %v379 = vld [vmem:[%s357 + $0x80] sm:$0xff]
        %v380 = vld [vmem:[%s357 + $0x88] sm:$0xff]
        %v381 = vld [vmem:[%s357 + $0x90] sm:$0xff]
        %v382 = vld [vmem:[%s357 + $0x98] sm:$0xff]
        %v383 = vld [vmem:[%s357 + $0xa0] sm:$0xff]
        %v384 = vld [vmem:[%s357 + $0xa8] sm:$0xff]
        %v385 = vld [vmem:[%s357 + $0xb0] sm:$0xff]
        %v386 = vld [vmem:[%s357 + $0xb8] sm:$0xff]
        %v387 = vld [vmem:[%s357 + $0xc0] sm:$0xff]
        %v388 = vld [vmem:[%s357 + $0xc8] sm:$0xff]
        %v389 = vld [vmem:[%s357 + $0xd0] sm:$0xff]
        %v390 = vld [vmem:[%s357 + $0xd8] sm:$0xff]
        %v391 = vld [vmem:[%s357 + $0xe0] sm:$0xff]
        %v392 = vld [vmem:[%s357 + $0xe8] sm:$0xff]
        %v393 = vld [vmem:[%s357 + $0xf0] sm:$0xff]
        %v394 = vld [vmem:[%s357 + $0xf8] sm:$0xff]
        %v395 = vld [vmem:[%s357 + $0x100] sm:$0xff]
        %v396 = vld [vmem:[%s357 + $0x108] sm:$0xff]
        %v397 = vld [vmem:[%s357 + $0x110] sm:$0xff]
        %v398 = vld [vmem:[%s357 + $0x118] sm:$0xff]
        %v399 = vld [vmem:[%s357 + $0x120] sm:$0xff]
        %v400 = vld [vmem:[%s357 + $0x128] sm:$0xff]
        %v401 = vld [vmem:[%s357 + $0x130] sm:$0xff]
        %v402 = vld [vmem:[%s357 + $0x138] sm:$0xff]
        %v403 = vld [vmem:[%s357 + $0x140] sm:$0xff]
        %v404 = vld [vmem:[%s357 + $0x148] sm:$0xff]
        %v405 = vld [vmem:[%s357 + $0x150] sm:$0xff]
        %v406 = vld [vmem:[%s357 + $0x158] sm:$0xff]
        %v407 = vld [vmem:[%s357 + $0x160] sm:$0xff]
        %v408 = vld [vmem:[%s357 + $0x168] sm:$0xff]
        %v409 = vld [vmem:[%s357 + $0x170] sm:$0xff]
        %v410 = vld [vmem:[%s357 + $0x178] sm:$0xff]
        %v411 = vld [vmem:[%s357 + $0x180] sm:$0xff]
        %v412 = vld [vmem:[%s357 + $0x188] sm:$0xff]
        %v413 = vld [vmem:[%s357 + $0x190] sm:$0xff]
        %v414 = vld [vmem:[%s357 + $0x198] sm:$0xff]
        %v415 = vld [vmem:[%s357 + $0x1a0] sm:$0xff]
        %v416 = vld [vmem:[%s357 + $0x1a8] sm:$0xff]
        %v417 = vld [vmem:[%s357 + $0x1b0] sm:$0xff]
        %v418 = vld [vmem:[%s357 + $0x1b8] sm:$0xff]
        %v419 = vld [vmem:[%s357 + $0x1c0] sm:$0xff]
        %v420 = vld [vmem:[%s357 + $0x1c8] sm:$0xff]
        %v421 = vld [vmem:[%s357 + $0x1d0] sm:$0xff]
        %v422 = vld [vmem:[%s357 + $0x1d8] sm:$0xff]
        %v423 = vld [vmem:[%s357 + $0x1e0] sm:$0xff]
        %v424 = vld [vmem:[%s357 + $0x1e8] sm:$0xff]
        %v425 = vld [vmem:[%s357 + $0x1f0] sm:$0xff]
        %v426 = vld [vmem:[%s357 + $0x1f8] sm:$0xff]
        %vm427 = vcmask 400384
        %v428 = vsel %vm427, %v363, 0.0
        %429 = vadd.xlane.f32.xlu0 %v428
        %v430 = vpop.xlane.xlu0 %429
        %v431 = vsel %vm427, %v364, 0.0
        %432 = vadd.xlane.f32.xlu0 %v431
        %v433 = vpop.xlane.xlu0 %432
        %v434 = vsel %vm427, %v365, 0.0
        %435 = vadd.xlane.f32.xlu0 %v434
        %v436 = vpop.xlane.xlu0 %435
        %v437 = vsel %vm427, %v366, 0.0
        %438 = vadd.xlane.f32.xlu0 %v437
        %v439 = vpop.xlane.xlu0 %438
        %v440 = vsel %vm427, %v367, 0.0
        %441 = vadd.xlane.f32.xlu0 %v440
        %v442 = vpop.xlane.xlu0 %441
        %v443 = vsel %vm427, %v368, 0.0
        %444 = vadd.xlane.f32.xlu0 %v443
        %v445 = vpop.xlane.xlu0 %444
        %v446 = vsel %vm427, %v369, 0.0
        %447 = vadd.xlane.f32.xlu0 %v446
        %v448 = vpop.xlane.xlu0 %447
        %v449 = vsel %vm427, %v370, 0.0
        %450 = vadd.xlane.f32.xlu0 %v449
        %v451 = vpop.xlane.xlu0 %450
        %v452 = vsel %vm427, %v371, 0.0
        %453 = vadd.xlane.f32.xlu0 %v452
        %v454 = vpop.xlane.xlu0 %453
        %v455 = vsel %vm427, %v372, 0.0
        %456 = vadd.xlane.f32.xlu0 %v455
        %v457 = vpop.xlane.xlu0 %456
        %v458 = vsel %vm427, %v373, 0.0
        %459 = vadd.xlane.f32.xlu0 %v458
        %v460 = vpop.xlane.xlu0 %459
        %v461 = vsel %vm427, %v374, 0.0
        %462 = vadd.xlane.f32.xlu0 %v461
        %v463 = vpop.xlane.xlu0 %462
        %v464 = vsel %vm427, %v375, 0.0
        %465 = vadd.xlane.f32.xlu0 %v464
        %v466 = vpop.xlane.xlu0 %465
        %v467 = vsel %vm427, %v376, 0.0
        %468 = vadd.xlane.f32.xlu0 %v467
        %v469 = vpop.xlane.xlu0 %468
        %v470 = vsel %vm427, %v377, 0.0
        %471 = vadd.xlane.f32.xlu0 %v470
        %v472 = vpop.xlane.xlu0 %471
        %v473 = vsel %vm427, %v378, 0.0
        %474 = vadd.xlane.f32.xlu0 %v473
        %v475 = vpop.xlane.xlu0 %474
        %v476 = vsel %vm427, %v379, 0.0
        %477 = vadd.xlane.f32.xlu0 %v476
        %v478 = vpop.xlane.xlu0 %477
        %v479 = vsel %vm427, %v380, 0.0
        %480 = vadd.xlane.f32.xlu0 %v479
        %v481 = vpop.xlane.xlu0 %480
        %v482 = vsel %vm427, %v381, 0.0
        %483 = vadd.xlane.f32.xlu0 %v482
        %v484 = vpop.xlane.xlu0 %483
        %v485 = vsel %vm427, %v382, 0.0
        %486 = vadd.xlane.f32.xlu0 %v485
        %v487 = vpop.xlane.xlu0 %486
        %v488 = vsel %vm427, %v383, 0.0
        %489 = vadd.xlane.f32.xlu0 %v488
        %v490 = vpop.xlane.xlu0 %489
        %v491 = vsel %vm427, %v384, 0.0
        %492 = vadd.xlane.f32.xlu0 %v491
        %v493 = vpop.xlane.xlu0 %492
        %v494 = vsel %vm427, %v385, 0.0
        %495 = vadd.xlane.f32.xlu0 %v494
        %v496 = vpop.xlane.xlu0 %495
        %v497 = vsel %vm427, %v386, 0.0
        %498 = vadd.xlane.f32.xlu0 %v497
        %v499 = vpop.xlane.xlu0 %498
        %v500 = vsel %vm427, %v387, 0.0
        %501 = vadd.xlane.f32.xlu0 %v500
        %v502 = vpop.xlane.xlu0 %501
        %v503 = vsel %vm427, %v388, 0.0
        %504 = vadd.xlane.f32.xlu0 %v503
        %v505 = vpop.xlane.xlu0 %504
        %v506 = vsel %vm427, %v389, 0.0
        %507 = vadd.xlane.f32.xlu0 %v506
        %v508 = vpop.xlane.xlu0 %507
        %v509 = vsel %vm427, %v390, 0.0
        %510 = vadd.xlane.f32.xlu0 %v509
        %v511 = vpop.xlane.xlu0 %510
        %v512 = vsel %vm427, %v391, 0.0
        %513 = vadd.xlane.f32.xlu0 %v512
        %v514 = vpop.xlane.xlu0 %513
        %v515 = vsel %vm427, %v392, 0.0
        %516 = vadd.xlane.f32.xlu0 %v515
        %v517 = vpop.xlane.xlu0 %516
        %v518 = vsel %vm427, %v393, 0.0
        %519 = vadd.xlane.f32.xlu0 %v518
        %v520 = vpop.xlane.xlu0 %519
        %v521 = vsel %vm427, %v394, 0.0
        %522 = vadd.xlane.f32.xlu0 %v521
        %v523 = vpop.xlane.xlu0 %522
        %v524 = vsel %vm427, %v395, 0.0
        %525 = vadd.xlane.f32.xlu0 %v524
        %v526 = vpop.xlane.xlu0 %525
        %v527 = vsel %vm427, %v396, 0.0
        %528 = vadd.xlane.f32.xlu0 %v527
        %v529 = vpop.xlane.xlu0 %528
        %v530 = vsel %vm427, %v397, 0.0
        %531 = vadd.xlane.f32.xlu0 %v530
        %v532 = vpop.xlane.xlu0 %531
        %v533 = vsel %vm427, %v398, 0.0
        %534 = vadd.xlane.f32.xlu0 %v533
        %v535 = vpop.xlane.xlu0 %534
        %v536 = vsel %vm427, %v399, 0.0
        %537 = vadd.xlane.f32.xlu0 %v536
        %v538 = vpop.xlane.xlu0 %537
        %v539 = vsel %vm427, %v400, 0.0
        %540 = vadd.xlane.f32.xlu0 %v539
        %v541 = vpop.xlane.xlu0 %540
        %v542 = vsel %vm427, %v401, 0.0
        %543 = vadd.xlane.f32.xlu0 %v542
        %v544 = vpop.xlane.xlu0 %543
        %v545 = vsel %vm427, %v402, 0.0
        %546 = vadd.xlane.f32.xlu0 %v545
        %v547 = vpop.xlane.xlu0 %546
        %v548 = vsel %vm427, %v403, 0.0
        %549 = vadd.xlane.f32.xlu0 %v548
        %v550 = vpop.xlane.xlu0 %549
        %v551 = vsel %vm427, %v404, 0.0
        %552 = vadd.xlane.f32.xlu0 %v551
        %v553 = vpop.xlane.xlu0 %552
        %v554 = vsel %vm427, %v405, 0.0
        %555 = vadd.xlane.f32.xlu0 %v554
        %v556 = vpop.xlane.xlu0 %555
        %v557 = vsel %vm427, %v406, 0.0
        %558 = vadd.xlane.f32.xlu0 %v557
        %v559 = vpop.xlane.xlu0 %558
        %v560 = vsel %vm427, %v407, 0.0
        %561 = vadd.xlane.f32.xlu0 %v560
        %v562 = vpop.xlane.xlu0 %561
        %v563 = vsel %vm427, %v408, 0.0
        %564 = vadd.xlane.f32.xlu0 %v563
        %v565 = vpop.xlane.xlu0 %564
        %v566 = vsel %vm427, %v409, 0.0
        %567 = vadd.xlane.f32.xlu0 %v566
        %v568 = vpop.xlane.xlu0 %567
        %v569 = vsel %vm427, %v410, 0.0
        %570 = vadd.xlane.f32.xlu0 %v569
        %v571 = vpop.xlane.xlu0 %570
        %v572 = vsel %vm427, %v411, 0.0
        %573 = vadd.xlane.f32.xlu0 %v572
        %v574 = vpop.xlane.xlu0 %573
        %v575 = vsel %vm427, %v412, 0.0
        %576 = vadd.xlane.f32.xlu0 %v575
        %v577 = vpop.xlane.xlu0 %576
        %v578 = vsel %vm427, %v413, 0.0
        %579 = vadd.xlane.f32.xlu0 %v578
        %v580 = vpop.xlane.xlu0 %579
        %v581 = vsel %vm427, %v414, 0.0
        %582 = vadd.xlane.f32.xlu0 %v581
        %v583 = vpop.xlane.xlu0 %582
        %v584 = vsel %vm427, %v415, 0.0
        %585 = vadd.xlane.f32.xlu0 %v584
        %v586 = vpop.xlane.xlu0 %585
        %v587 = vsel %vm427, %v416, 0.0
        %588 = vadd.xlane.f32.xlu0 %v587
        %v589 = vpop.xlane.xlu0 %588
        %v590 = vsel %vm427, %v417, 0.0
        %591 = vadd.xlane.f32.xlu0 %v590
        %v592 = vpop.xlane.xlu0 %591
        %v593 = vsel %vm427, %v418, 0.0
        %594 = vadd.xlane.f32.xlu0 %v593
        %v595 = vpop.xlane.xlu0 %594
        %v596 = vsel %vm427, %v419, 0.0
        %597 = vadd.xlane.f32.xlu0 %v596
        %v598 = vpop.xlane.xlu0 %597
        %v599 = vsel %vm427, %v420, 0.0
        %600 = vadd.xlane.f32.xlu0 %v599
        %v601 = vpop.xlane.xlu0 %600
        %v602 = vsel %vm427, %v421, 0.0
        %603 = vadd.xlane.f32.xlu0 %v602
        %v604 = vpop.xlane.xlu0 %603
        %v605 = vsel %vm427, %v422, 0.0
        %606 = vadd.xlane.f32.xlu0 %v605
        %v607 = vpop.xlane.xlu0 %606
        %v608 = vsel %vm427, %v423, 0.0
        %609 = vadd.xlane.f32.xlu0 %v608
        %v610 = vpop.xlane.xlu0 %609
        %v611 = vsel %vm427, %v424, 0.0
        %612 = vadd.xlane.f32.xlu0 %v611
        %v613 = vpop.xlane.xlu0 %612
        %v614 = vsel %vm427, %v425, 0.0
        %615 = vadd.xlane.f32.xlu0 %v614
        %v616 = vpop.xlane.xlu0 %615
        %v617 = vsel %vm427, %v426, 0.0
        %618 = vadd.xlane.f32.xlu0 %v617
        %v619 = vpop.xlane.xlu0 %618
        %v620 = vrcp.pop 49.0
        %v621 = vmul.f32 %v430, %v620
        %v622 = vmul.f32 %v433, %v620
        %v623 = vmul.f32 %v436, %v620
        %v624 = vmul.f32 %v439, %v620
        %v625 = vmul.f32 %v442, %v620
        %v626 = vmul.f32 %v445, %v620
        %v627 = vmul.f32 %v448, %v620
        %v628 = vmul.f32 %v451, %v620
        %v629 = vmul.f32 %v454, %v620
        %v630 = vmul.f32 %v457, %v620
        %v631 = vmul.f32 %v460, %v620
        %v632 = vmul.f32 %v463, %v620
        %v633 = vmul.f32 %v466, %v620
        %v634 = vmul.f32 %v469, %v620
        %v635 = vmul.f32 %v472, %v620
        %v636 = vmul.f32 %v475, %v620
        %v637 = vmul.f32 %v478, %v620
        %v638 = vmul.f32 %v481, %v620
        %v639 = vmul.f32 %v484, %v620
        %v640 = vmul.f32 %v487, %v620
        %v641 = vmul.f32 %v490, %v620
        %v642 = vmul.f32 %v493, %v620
        %v643 = vmul.f32 %v496, %v620
        %v644 = vmul.f32 %v499, %v620
        %v645 = vmul.f32 %v502, %v620
        %v646 = vmul.f32 %v505, %v620
        %v647 = vmul.f32 %v508, %v620
        %v648 = vmul.f32 %v511, %v620
        %v649 = vmul.f32 %v514, %v620
        %v650 = vmul.f32 %v517, %v620
        %v651 = vmul.f32 %v520, %v620
        %v652 = vmul.f32 %v523, %v620
        %v653 = vmul.f32 %v526, %v620
        %v654 = vmul.f32 %v529, %v620
        %v655 = vmul.f32 %v532, %v620
        %v656 = vmul.f32 %v535, %v620
        %v657 = vmul.f32 %v538, %v620
        %v658 = vmul.f32 %v541, %v620
        %v659 = vmul.f32 %v544, %v620
        %v660 = vmul.f32 %v547, %v620
        %v661 = vmul.f32 %v550, %v620
        %v662 = vmul.f32 %v553, %v620
        %v663 = vmul.f32 %v556, %v620
        %v664 = vmul.f32 %v559, %v620
        %v665 = vmul.f32 %v562, %v620
        %v666 = vmul.f32 %v565, %v620
        %v667 = vmul.f32 %v568, %v620
        %v668 = vmul.f32 %v571, %v620
        %v669 = vmul.f32 %v574, %v620
        %v670 = vmul.f32 %v577, %v620
        %v671 = vmul.f32 %v580, %v620
        %v672 = vmul.f32 %v583, %v620
        %v673 = vmul.f32 %v586, %v620
        %v674 = vmul.f32 %v589, %v620
        %v675 = vmul.f32 %v592, %v620
        %v676 = vmul.f32 %v595, %v620
        %v677 = vmul.f32 %v598, %v620
        %v678 = vmul.f32 %v601, %v620
        %v679 = vmul.f32 %v604, %v620
        %v680 = vmul.f32 %v607, %v620
        %v681 = vmul.f32 %v610, %v620
        %v682 = vmul.f32 %v613, %v620
        %v683 = vmul.f32 %v616, %v620
        %v684 = vmul.f32 %v619, %v620
        %v685 = vsub.f32 %v363, %v621
        %v686 = vsub.f32 %v364, %v622
        %v687 = vsub.f32 %v365, %v623
        %v688 = vsub.f32 %v366, %v624
        %v689 = vsub.f32 %v367, %v625
        %v690 = vsub.f32 %v368, %v626
        %v691 = vsub.f32 %v369, %v627
        %v692 = vsub.f32 %v370, %v628
        %v693 = vsub.f32 %v371, %v629
        %v694 = vsub.f32 %v372, %v630
        %v695 = vsub.f32 %v373, %v631
        %v696 = vsub.f32 %v374, %v632
        %v697 = vsub.f32 %v375, %v633
        %v698 = vsub.f32 %v376, %v634
        %v699 = vsub.f32 %v377, %v635
        %v700 = vsub.f32 %v378, %v636
        %v701 = vsub.f32 %v379, %v637
        %v702 = vsub.f32 %v380, %v638
        %v703 = vsub.f32 %v381, %v639
        %v704 = vsub.f32 %v382, %v640
        %v705 = vsub.f32 %v383, %v641
        %v706 = vsub.f32 %v384, %v642
        %v707 = vsub.f32 %v385, %v643
        %v708 = vsub.f32 %v386, %v644
        %v709 = vsub.f32 %v387, %v645
        %v710 = vsub.f32 %v388, %v646
        %v711 = vsub.f32 %v389, %v647
        %v712 = vsub.f32 %v390, %v648
        %v713 = vsub.f32 %v391, %v649
        %v714 = vsub.f32 %v392, %v650
        %v715 = vsub.f32 %v393, %v651
        %v716 = vsub.f32 %v394, %v652
        %v717 = vsub.f32 %v395, %v653
        %v718 = vsub.f32 %v396, %v654
        %v719 = vsub.f32 %v397, %v655
        %v720 = vsub.f32 %v398, %v656
        %v721 = vsub.f32 %v399, %v657
        %v722 = vsub.f32 %v400, %v658
        %v723 = vsub.f32 %v401, %v659
        %v724 = vsub.f32 %v402, %v660
        %v725 = vsub.f32 %v403, %v661
        %v726 = vsub.f32 %v404, %v662
        %v727 = vsub.f32 %v405, %v663
        %v728 = vsub.f32 %v406, %v664
        %v729 = vsub.f32 %v407, %v665
        %v730 = vsub.f32 %v408, %v666
        %v731 = vsub.f32 %v409, %v667
        %v732 = vsub.f32 %v410, %v668
        %v733 = vsub.f32 %v411, %v669
        %v734 = vsub.f32 %v412, %v670
        %v735 = vsub.f32 %v413, %v671
        %v736 = vsub.f32 %v414, %v672
        %v737 = vsub.f32 %v415, %v673
        %v738 = vsub.f32 %v416, %v674
        %v739 = vsub.f32 %v417, %v675
        %v740 = vsub.f32 %v418, %v676
        %v741 = vsub.f32 %v419, %v677
        %v742 = vsub.f32 %v420, %v678
        %v743 = vsub.f32 %v421, %v679
        %v744 = vsub.f32 %v422, %v680
        %v745 = vsub.f32 %v423, %v681
        %v746 = vsub.f32 %v424, %v682
        %v747 = vsub.f32 %v425, %v683
        %v748 = vsub.f32 %v426, %v684
        %v749 = vmul.f32 %v685, %v685
        %v750 = vmul.f32 %v686, %v686
        %v751 = vmul.f32 %v687, %v687
        %v752 = vmul.f32 %v688, %v688
        %v753 = vmul.f32 %v689, %v689
        %v754 = vmul.f32 %v690, %v690
        %v755 = vmul.f32 %v691, %v691
        %v756 = vmul.f32 %v692, %v692
        %v757 = vmul.f32 %v693, %v693
        %v758 = vmul.f32 %v694, %v694
        %v759 = vmul.f32 %v695, %v695
        %v760 = vmul.f32 %v696, %v696
        %v761 = vmul.f32 %v697, %v697
        %v762 = vmul.f32 %v698, %v698
        %v763 = vmul.f32 %v699, %v699
        %v764 = vmul.f32 %v700, %v700
        %v765 = vmul.f32 %v701, %v701
        %v766 = vmul.f32 %v702, %v702
        %v767 = vmul.f32 %v703, %v703
        %v768 = vmul.f32 %v704, %v704
        %v769 = vmul.f32 %v705, %v705
        %v770 = vmul.f32 %v706, %v706
        %v771 = vmul.f32 %v707, %v707
        %v772 = vmul.f32 %v708, %v708
        %v773 = vmul.f32 %v709, %v709
        %v774 = vmul.f32 %v710, %v710
        %v775 = vmul.f32 %v711, %v711
        %v776 = vmul.f32 %v712, %v712
        %v777 = vmul.f32 %v713, %v713
        %v778 = vmul.f32 %v714, %v714
        %v779 = vmul.f32 %v715, %v715
        %v780 = vmul.f32 %v716, %v716
        %v781 = vmul.f32 %v717, %v717
        %v782 = vmul.f32 %v718, %v718
        %v783 = vmul.f32 %v719, %v719
        %v784 = vmul.f32 %v720, %v720
        %v785 = vmul.f32 %v721, %v721
        %v786 = vmul.f32 %v722, %v722
        %v787 = vmul.f32 %v723, %v723
        %v788 = vmul.f32 %v724, %v724
        %v789 = vmul.f32 %v725, %v725
        %v790 = vmul.f32 %v726, %v726
        %v791 = vmul.f32 %v727, %v727
        %v792 = vmul.f32 %v728, %v728
        %v793 = vmul.f32 %v729, %v729
        %v794 = vmul.f32 %v730, %v730
        %v795 = vmul.f32 %v731, %v731
        %v796 = vmul.f32 %v732, %v732
        %v797 = vmul.f32 %v733, %v733
        %v798 = vmul.f32 %v734, %v734
        %v799 = vmul.f32 %v735, %v735
        %v800 = vmul.f32 %v736, %v736
        %v801 = vmul.f32 %v737, %v737
        %v802 = vmul.f32 %v738, %v738
        %v803 = vmul.f32 %v739, %v739
        %v804 = vmul.f32 %v740, %v740
        %v805 = vmul.f32 %v741, %v741
        %v806 = vmul.f32 %v742, %v742
        %v807 = vmul.f32 %v743, %v743
        %v808 = vmul.f32 %v744, %v744
        %v809 = vmul.f32 %v745, %v745
        %v810 = vmul.f32 %v746, %v746
        %v811 = vmul.f32 %v747, %v747
        %v812 = vmul.f32 %v748, %v748
        %v813 = vsel %vm427, %v749, 0.0
        %814 = vadd.xlane.f32.xlu0 %v813
        %v815 = vpop.xlane.xlu0 %814
        %v816 = vsel %vm427, %v750, 0.0
        %817 = vadd.xlane.f32.xlu0 %v816
        %v818 = vpop.xlane.xlu0 %817
        %v819 = vsel %vm427, %v751, 0.0
        %820 = vadd.xlane.f32.xlu0 %v819
        %v821 = vpop.xlane.xlu0 %820
        %v822 = vsel %vm427, %v752, 0.0
        %823 = vadd.xlane.f32.xlu0 %v822
        %v824 = vpop.xlane.xlu0 %823
        %v825 = vsel %vm427, %v753, 0.0
        %826 = vadd.xlane.f32.xlu0 %v825
        %v827 = vpop.xlane.xlu0 %826
        %v828 = vsel %vm427, %v754, 0.0
        %829 = vadd.xlane.f32.xlu0 %v828
        %v830 = vpop.xlane.xlu0 %829
        %v831 = vsel %vm427, %v755, 0.0
        %832 = vadd.xlane.f32.xlu0 %v831
        %v833 = vpop.xlane.xlu0 %832
        %v834 = vsel %vm427, %v756, 0.0
        %835 = vadd.xlane.f32.xlu0 %v834
        %v836 = vpop.xlane.xlu0 %835
        %v837 = vsel %vm427, %v757, 0.0
        %838 = vadd.xlane.f32.xlu0 %v837
        %v839 = vpop.xlane.xlu0 %838
        %v840 = vsel %vm427, %v758, 0.0
        %841 = vadd.xlane.f32.xlu0 %v840
        %v842 = vpop.xlane.xlu0 %841
        %v843 = vsel %vm427, %v759, 0.0
        %844 = vadd.xlane.f32.xlu0 %v843
        %v845 = vpop.xlane.xlu0 %844
        %v846 = vsel %vm427, %v760, 0.0
        %847 = vadd.xlane.f32.xlu0 %v846
        %v848 = vpop.xlane.xlu0 %847
        %v849 = vsel %vm427, %v761, 0.0
        %850 = vadd.xlane.f32.xlu0 %v849
        %v851 = vpop.xlane.xlu0 %850
        %v852 = vsel %vm427, %v762, 0.0
        %853 = vadd.xlane.f32.xlu0 %v852
        %v854 = vpop.xlane.xlu0 %853
        %v855 = vsel %vm427, %v763, 0.0
        %856 = vadd.xlane.f32.xlu0 %v855
        %v857 = vpop.xlane.xlu0 %856
        %v858 = vsel %vm427, %v764, 0.0
        %859 = vadd.xlane.f32.xlu0 %v858
        %v860 = vpop.xlane.xlu0 %859
        %v861 = vsel %vm427, %v765, 0.0
        %862 = vadd.xlane.f32.xlu0 %v861
        %v863 = vpop.xlane.xlu0 %862
        %v864 = vsel %vm427, %v766, 0.0
        %865 = vadd.xlane.f32.xlu0 %v864
        %v866 = vpop.xlane.xlu0 %865
        %v867 = vsel %vm427, %v767, 0.0
        %868 = vadd.xlane.f32.xlu0 %v867
        %v869 = vpop.xlane.xlu0 %868
        %v870 = vsel %vm427, %v768, 0.0
        %871 = vadd.xlane.f32.xlu0 %v870
        %v872 = vpop.xlane.xlu0 %871
        %v873 = vsel %vm427, %v769, 0.0
        %874 = vadd.xlane.f32.xlu0 %v873
        %v875 = vpop.xlane.xlu0 %874
        %v876 = vsel %vm427, %v770, 0.0
        %877 = vadd.xlane.f32.xlu0 %v876
        %v878 = vpop.xlane.xlu0 %877
        %v879 = vsel %vm427, %v771, 0.0
        %880 = vadd.xlane.f32.xlu0 %v879
        %v881 = vpop.xlane.xlu0 %880
        %v882 = vsel %vm427, %v772, 0.0
        %883 = vadd.xlane.f32.xlu0 %v882
        %v884 = vpop.xlane.xlu0 %883
        %v885 = vsel %vm427, %v773, 0.0
        %886 = vadd.xlane.f32.xlu0 %v885
        %v887 = vpop.xlane.xlu0 %886
        %v888 = vsel %vm427, %v774, 0.0
        %889 = vadd.xlane.f32.xlu0 %v888
        %v890 = vpop.xlane.xlu0 %889
        %v891 = vsel %vm427, %v775, 0.0
        %892 = vadd.xlane.f32.xlu0 %v891
        %v893 = vpop.xlane.xlu0 %892
        %v894 = vsel %vm427, %v776, 0.0
        %895 = vadd.xlane.f32.xlu0 %v894
        %v896 = vpop.xlane.xlu0 %895
        %v897 = vsel %vm427, %v777, 0.0
        %898 = vadd.xlane.f32.xlu0 %v897
        %v899 = vpop.xlane.xlu0 %898
        %v900 = vsel %vm427, %v778, 0.0
        %901 = vadd.xlane.f32.xlu0 %v900
        %v902 = vpop.xlane.xlu0 %901
        %v903 = vsel %vm427, %v779, 0.0
        %904 = vadd.xlane.f32.xlu0 %v903
        %v905 = vpop.xlane.xlu0 %904
        %v906 = vsel %vm427, %v780, 0.0
        %907 = vadd.xlane.f32.xlu0 %v906
        %v908 = vpop.xlane.xlu0 %907
        %v909 = vsel %vm427, %v781, 0.0
        %910 = vadd.xlane.f32.xlu0 %v909
        %v911 = vpop.xlane.xlu0 %910
        %v912 = vsel %vm427, %v782, 0.0
        %913 = vadd.xlane.f32.xlu0 %v912
        %v914 = vpop.xlane.xlu0 %913
        %v915 = vsel %vm427, %v783, 0.0
        %916 = vadd.xlane.f32.xlu0 %v915
        %v917 = vpop.xlane.xlu0 %916
        %v918 = vsel %vm427, %v784, 0.0
        %919 = vadd.xlane.f32.xlu0 %v918
        %v920 = vpop.xlane.xlu0 %919
        %v921 = vsel %vm427, %v785, 0.0
        %922 = vadd.xlane.f32.xlu0 %v921
        %v923 = vpop.xlane.xlu0 %922
        %v924 = vsel %vm427, %v786, 0.0
        %925 = vadd.xlane.f32.xlu0 %v924
        %v926 = vpop.xlane.xlu0 %925
        %v927 = vsel %vm427, %v787, 0.0
        %928 = vadd.xlane.f32.xlu0 %v927
        %v929 = vpop.xlane.xlu0 %928
        %v930 = vsel %vm427, %v788, 0.0
        %931 = vadd.xlane.f32.xlu0 %v930
        %v932 = vpop.xlane.xlu0 %931
        %v933 = vsel %vm427, %v789, 0.0
        %934 = vadd.xlane.f32.xlu0 %v933
        %v935 = vpop.xlane.xlu0 %934
        %v936 = vsel %vm427, %v790, 0.0
        %937 = vadd.xlane.f32.xlu0 %v936
        %v938 = vpop.xlane.xlu0 %937
        %v939 = vsel %vm427, %v791, 0.0
        %940 = vadd.xlane.f32.xlu0 %v939
        %v941 = vpop.xlane.xlu0 %940
        %v942 = vsel %vm427, %v792, 0.0
        %943 = vadd.xlane.f32.xlu0 %v942
        %v944 = vpop.xlane.xlu0 %943
        %v945 = vsel %vm427, %v793, 0.0
        %946 = vadd.xlane.f32.xlu0 %v945
        %v947 = vpop.xlane.xlu0 %946
        %v948 = vsel %vm427, %v794, 0.0
        %949 = vadd.xlane.f32.xlu0 %v948
        %v950 = vpop.xlane.xlu0 %949
        %v951 = vsel %vm427, %v795, 0.0
        %952 = vadd.xlane.f32.xlu0 %v951
        %v953 = vpop.xlane.xlu0 %952
        %v954 = vsel %vm427, %v796, 0.0
        %955 = vadd.xlane.f32.xlu0 %v954
        %v956 = vpop.xlane.xlu0 %955
        %v957 = vsel %vm427, %v797, 0.0
        %958 = vadd.xlane.f32.xlu0 %v957
        %v959 = vpop.xlane.xlu0 %958
        %v960 = vsel %vm427, %v798, 0.0
        %961 = vadd.xlane.f32.xlu0 %v960
        %v962 = vpop.xlane.xlu0 %961
        %v963 = vsel %vm427, %v799, 0.0
        %964 = vadd.xlane.f32.xlu0 %v963
        %v965 = vpop.xlane.xlu0 %964
        %v966 = vsel %vm427, %v800, 0.0
        %967 = vadd.xlane.f32.xlu0 %v966
        %v968 = vpop.xlane.xlu0 %967
        %v969 = vsel %vm427, %v801, 0.0
        %970 = vadd.xlane.f32.xlu0 %v969
        %v971 = vpop.xlane.xlu0 %970
        %v972 = vsel %vm427, %v802, 0.0
        %973 = vadd.xlane.f32.xlu0 %v972
        %v974 = vpop.xlane.xlu0 %973
        %v975 = vsel %vm427, %v803, 0.0
        %976 = vadd.xlane.f32.xlu0 %v975
        %v977 = vpop.xlane.xlu0 %976
        %v978 = vsel %vm427, %v804, 0.0
        %979 = vadd.xlane.f32.xlu0 %v978
        %v980 = vpop.xlane.xlu0 %979
        %v981 = vsel %vm427, %v805, 0.0
        %982 = vadd.xlane.f32.xlu0 %v981
        %v983 = vpop.xlane.xlu0 %982
        %v984 = vsel %vm427, %v806, 0.0
        %985 = vadd.xlane.f32.xlu0 %v984
        %v986 = vpop.xlane.xlu0 %985
        %v987 = vsel %vm427, %v807, 0.0
        %988 = vadd.xlane.f32.xlu0 %v987
        %v989 = vpop.xlane.xlu0 %988
        %v990 = vsel %vm427, %v808, 0.0
        %991 = vadd.xlane.f32.xlu0 %v990
        %v992 = vpop.xlane.xlu0 %991
        %v993 = vsel %vm427, %v809, 0.0
        %994 = vadd.xlane.f32.xlu0 %v993
        %v995 = vpop.xlane.xlu0 %994
        %v996 = vsel %vm427, %v810, 0.0
        %997 = vadd.xlane.f32.xlu0 %v996
        %v998 = vpop.xlane.xlu0 %997
        %v999 = vsel %vm427, %v811, 0.0
        %1000 = vadd.xlane.f32.xlu0 %v999
        %v1001 = vpop.xlane.xlu0 %1000
        %v1002 = vsel %vm427, %v812, 0.0
        %1003 = vadd.xlane.f32.xlu0 %v1002
        %v1004 = vpop.xlane.xlu0 %1003
        %v1005 = vmul.f32 %v815, %v620
        %v1006 = vmul.f32 %v818, %v620
        %v1007 = vmul.f32 %v821, %v620
        %v1008 = vmul.f32 %v824, %v620
        %v1009 = vmul.f32 %v827, %v620
        %v1010 = vmul.f32 %v830, %v620
        %v1011 = vmul.f32 %v833, %v620
        %v1012 = vmul.f32 %v836, %v620
        %v1013 = vmul.f32 %v839, %v620
        %v1014 = vmul.f32 %v842, %v620
        %v1015 = vmul.f32 %v845, %v620
        %v1016 = vmul.f32 %v848, %v620
        %v1017 = vmul.f32 %v851, %v620
        %v1018 = vmul.f32 %v854, %v620
        %v1019 = vmul.f32 %v857, %v620
        %v1020 = vmul.f32 %v860, %v620
        %v1021 = vmul.f32 %v863, %v620
        %v1022 = vmul.f32 %v866, %v620
        %v1023 = vmul.f32 %v869, %v620
        %v1024 = vmul.f32 %v872, %v620
        %v1025 = vmul.f32 %v875, %v620
        %v1026 = vmul.f32 %v878, %v620
        %v1027 = vmul.f32 %v881, %v620
        %v1028 = vmul.f32 %v884, %v620
        %v1029 = vmul.f32 %v887, %v620
        %v1030 = vmul.f32 %v890, %v620
        %v1031 = vmul.f32 %v893, %v620
        %v1032 = vmul.f32 %v896, %v620
        %v1033 = vmul.f32 %v899, %v620
        %v1034 = vmul.f32 %v902, %v620
        %v1035 = vmul.f32 %v905, %v620
        %v1036 = vmul.f32 %v908, %v620
        %v1037 = vmul.f32 %v911, %v620
        %v1038 = vmul.f32 %v914, %v620
        %v1039 = vmul.f32 %v917, %v620
        %v1040 = vmul.f32 %v920, %v620
        %v1041 = vmul.f32 %v923, %v620
        %v1042 = vmul.f32 %v926, %v620
        %v1043 = vmul.f32 %v929, %v620
        %v1044 = vmul.f32 %v932, %v620
        %v1045 = vmul.f32 %v935, %v620
        %v1046 = vmul.f32 %v938, %v620
        %v1047 = vmul.f32 %v941, %v620
        %v1048 = vmul.f32 %v944, %v620
        %v1049 = vmul.f32 %v947, %v620
        %v1050 = vmul.f32 %v950, %v620
        %v1051 = vmul.f32 %v953, %v620
        %v1052 = vmul.f32 %v956, %v620
        %v1053 = vmul.f32 %v959, %v620
        %v1054 = vmul.f32 %v962, %v620
        %v1055 = vmul.f32 %v965, %v620
        %v1056 = vmul.f32 %v968, %v620
        %v1057 = vmul.f32 %v971, %v620
        %v1058 = vmul.f32 %v974, %v620
        %v1059 = vmul.f32 %v977, %v620
        %v1060 = vmul.f32 %v980, %v620
        %v1061 = vmul.f32 %v983, %v620
        %v1062 = vmul.f32 %v986, %v620
        %v1063 = vmul.f32 %v989, %v620
        %v1064 = vmul.f32 %v992, %v620
        %v1065 = vmul.f32 %v995, %v620
        %v1066 = vmul.f32 %v998, %v620
        %v1067 = vmul.f32 %v1001, %v620
        %v1068 = vmul.f32 %v1004, %v620
        %v1069 = vadd.f32 %v1005, 1e-05
        %v1070 = vadd.f32 %v1006, 1e-05
        %v1071 = vadd.f32 %v1007, 1e-05
        %v1072 = vadd.f32 %v1008, 1e-05
        %v1073 = vadd.f32 %v1009, 1e-05
        %v1074 = vadd.f32 %v1010, 1e-05
        %v1075 = vadd.f32 %v1011, 1e-05
        %v1076 = vadd.f32 %v1012, 1e-05
        %v1077 = vadd.f32 %v1013, 1e-05
        %v1078 = vadd.f32 %v1014, 1e-05
        %v1079 = vadd.f32 %v1015, 1e-05
        %v1080 = vadd.f32 %v1016, 1e-05
        %v1081 = vadd.f32 %v1017, 1e-05
        %v1082 = vadd.f32 %v1018, 1e-05
        %v1083 = vadd.f32 %v1019, 1e-05
        %v1084 = vadd.f32 %v1020, 1e-05
        %v1085 = vadd.f32 %v1021, 1e-05
        %v1086 = vadd.f32 %v1022, 1e-05
        %v1087 = vadd.f32 %v1023, 1e-05
        %v1088 = vadd.f32 %v1024, 1e-05
        %v1089 = vadd.f32 %v1025, 1e-05
        %v1090 = vadd.f32 %v1026, 1e-05
        %v1091 = vadd.f32 %v1027, 1e-05
        %v1092 = vadd.f32 %v1028, 1e-05
        %v1093 = vadd.f32 %v1029, 1e-05
        %v1094 = vadd.f32 %v1030, 1e-05
        %v1095 = vadd.f32 %v1031, 1e-05
        %v1096 = vadd.f32 %v1032, 1e-05
        %v1097 = vadd.f32 %v1033, 1e-05
        %v1098 = vadd.f32 %v1034, 1e-05
        %v1099 = vadd.f32 %v1035, 1e-05
        %v1100 = vadd.f32 %v1036, 1e-05
        %v1101 = vadd.f32 %v1037, 1e-05
        %v1102 = vadd.f32 %v1038, 1e-05
        %v1103 = vadd.f32 %v1039, 1e-05
        %v1104 = vadd.f32 %v1040, 1e-05
        %v1105 = vadd.f32 %v1041, 1e-05
        %v1106 = vadd.f32 %v1042, 1e-05
        %v1107 = vadd.f32 %v1043, 1e-05
        %v1108 = vadd.f32 %v1044, 1e-05
        %v1109 = vadd.f32 %v1045, 1e-05
        %v1110 = vadd.f32 %v1046, 1e-05
        %v1111 = vadd.f32 %v1047, 1e-05
        %v1112 = vadd.f32 %v1048, 1e-05
        %v1113 = vadd.f32 %v1049, 1e-05
        %v1114 = vadd.f32 %v1050, 1e-05
        %v1115 = vadd.f32 %v1051, 1e-05
        %v1116 = vadd.f32 %v1052, 1e-05
        %v1117 = vadd.f32 %v1053, 1e-05
        %v1118 = vadd.f32 %v1054, 1e-05
        %v1119 = vadd.f32 %v1055, 1e-05
        %v1120 = vadd.f32 %v1056, 1e-05
        %v1121 = vadd.f32 %v1057, 1e-05
        %v1122 = vadd.f32 %v1058, 1e-05
        %v1123 = vadd.f32 %v1059, 1e-05
        %v1124 = vadd.f32 %v1060, 1e-05
        %v1125 = vadd.f32 %v1061, 1e-05
        %v1126 = vadd.f32 %v1062, 1e-05
        %v1127 = vadd.f32 %v1063, 1e-05
        %v1128 = vadd.f32 %v1064, 1e-05
        %v1129 = vadd.f32 %v1065, 1e-05
        %v1130 = vadd.f32 %v1066, 1e-05
        %v1131 = vadd.f32 %v1067, 1e-05
        %v1132 = vadd.f32 %v1068, 1e-05
        %v1133 = vrsqrt.pop %v1069
        %v1134 = vrsqrt.pop %v1070
        %v1135 = vrsqrt.pop %v1071
        %v1136 = vrsqrt.pop %v1072
        %v1137 = vrsqrt.pop %v1073
        %v1138 = vrsqrt.pop %v1074
        %v1139 = vrsqrt.pop %v1075
        %v1140 = vrsqrt.pop %v1076
        %v1141 = vrsqrt.pop %v1077
        %v1142 = vrsqrt.pop %v1078
        %v1143 = vrsqrt.pop %v1079
        %v1144 = vrsqrt.pop %v1080
        %v1145 = vrsqrt.pop %v1081
        %v1146 = vrsqrt.pop %v1082
        %v1147 = vrsqrt.pop %v1083
        %v1148 = vrsqrt.pop %v1084
        %v1149 = vrsqrt.pop %v1085
        %v1150 = vrsqrt.pop %v1086
        %v1151 = vrsqrt.pop %v1087
        %v1152 = vrsqrt.pop %v1088
        %v1153 = vrsqrt.pop %v1089
        %v1154 = vrsqrt.pop %v1090
        %v1155 = vrsqrt.pop %v1091
        %v1156 = vrsqrt.pop %v1092
        %v1157 = vrsqrt.pop %v1093
        %v1158 = vrsqrt.pop %v1094
        %v1159 = vrsqrt.pop %v1095
        %v1160 = vrsqrt.pop %v1096
        %v1161 = vrsqrt.pop %v1097
        %v1162 = vrsqrt.pop %v1098
        %v1163 = vrsqrt.pop %v1099
        %v1164 = vrsqrt.pop %v1100
        %v1165 = vrsqrt.pop %v1101
        %v1166 = vrsqrt.pop %v1102
        %v1167 = vrsqrt.pop %v1103
        %v1168 = vrsqrt.pop %v1104
        %v1169 = vrsqrt.pop %v1105
        %v1170 = vrsqrt.pop %v1106
        %v1171 = vrsqrt.pop %v1107
        %v1172 = vrsqrt.pop %v1108
        %v1173 = vrsqrt.pop %v1109
        %v1174 = vrsqrt.pop %v1110
        %v1175 = vrsqrt.pop %v1111
        %v1176 = vrsqrt.pop %v1112
        %v1177 = vrsqrt.pop %v1113
        %v1178 = vrsqrt.pop %v1114
        %v1179 = vrsqrt.pop %v1115
        %v1180 = vrsqrt.pop %v1116
        %v1181 = vrsqrt.pop %v1117
        %v1182 = vrsqrt.pop %v1118
        %v1183 = vrsqrt.pop %v1119
        %v1184 = vrsqrt.pop %v1120
        %v1185 = vrsqrt.pop %v1121
        %v1186 = vrsqrt.pop %v1122
        %v1187 = vrsqrt.pop %v1123
        %v1188 = vrsqrt.pop %v1124
        %v1189 = vrsqrt.pop %v1125
        %v1190 = vrsqrt.pop %v1126
        %v1191 = vrsqrt.pop %v1127
        %v1192 = vrsqrt.pop %v1128
        %v1193 = vrsqrt.pop %v1129
        %v1194 = vrsqrt.pop %v1130
        %v1195 = vrsqrt.pop %v1131
        %v1196 = vrsqrt.pop %v1132
        %v1197 = vmul.f32 %v685, %v1133
        %v1198 = vmul.f32 %v686, %v1134
        %v1199 = vmul.f32 %v687, %v1135
        %v1200 = vmul.f32 %v688, %v1136
        %v1201 = vmul.f32 %v689, %v1137
        %v1202 = vmul.f32 %v690, %v1138
        %v1203 = vmul.f32 %v691, %v1139
        %v1204 = vmul.f32 %v692, %v1140
        %v1205 = vmul.f32 %v693, %v1141
        %v1206 = vmul.f32 %v694, %v1142
        %v1207 = vmul.f32 %v695, %v1143
        %v1208 = vmul.f32 %v696, %v1144
        %v1209 = vmul.f32 %v697, %v1145
        %v1210 = vmul.f32 %v698, %v1146
        %v1211 = vmul.f32 %v699, %v1147
        %v1212 = vmul.f32 %v700, %v1148
        %v1213 = vmul.f32 %v701, %v1149
        %v1214 = vmul.f32 %v702, %v1150
        %v1215 = vmul.f32 %v703, %v1151
        %v1216 = vmul.f32 %v704, %v1152
        %v1217 = vmul.f32 %v705, %v1153
        %v1218 = vmul.f32 %v706, %v1154
        %v1219 = vmul.f32 %v707, %v1155
        %v1220 = vmul.f32 %v708, %v1156
        %v1221 = vmul.f32 %v709, %v1157
        %v1222 = vmul.f32 %v710, %v1158
        %v1223 = vmul.f32 %v711, %v1159
        %v1224 = vmul.f32 %v712, %v1160
        %v1225 = vmul.f32 %v713, %v1161
        %v1226 = vmul.f32 %v714, %v1162
        %v1227 = vmul.f32 %v715, %v1163
        %v1228 = vmul.f32 %v716, %v1164
        %v1229 = vmul.f32 %v717, %v1165
        %v1230 = vmul.f32 %v718, %v1166
        %v1231 = vmul.f32 %v719, %v1167
        %v1232 = vmul.f32 %v720, %v1168
        %v1233 = vmul.f32 %v721, %v1169
        %v1234 = vmul.f32 %v722, %v1170
        %v1235 = vmul.f32 %v723, %v1171
        %v1236 = vmul.f32 %v724, %v1172
        %v1237 = vmul.f32 %v725, %v1173
        %v1238 = vmul.f32 %v726, %v1174
        %v1239 = vmul.f32 %v727, %v1175
        %v1240 = vmul.f32 %v728, %v1176
        %v1241 = vmul.f32 %v729, %v1177
        %v1242 = vmul.f32 %v730, %v1178
        %v1243 = vmul.f32 %v731, %v1179
        %v1244 = vmul.f32 %v732, %v1180
        %v1245 = vmul.f32 %v733, %v1181
        %v1246 = vmul.f32 %v734, %v1182
        %v1247 = vmul.f32 %v735, %v1183
        %v1248 = vmul.f32 %v736, %v1184
        %v1249 = vmul.f32 %v737, %v1185
        %v1250 = vmul.f32 %v738, %v1186
        %v1251 = vmul.f32 %v739, %v1187
        %v1252 = vmul.f32 %v740, %v1188
        %v1253 = vmul.f32 %v741, %v1189
        %v1254 = vmul.f32 %v742, %v1190
        %v1255 = vmul.f32 %v743, %v1191
        %v1256 = vmul.f32 %v744, %v1192
        %v1257 = vmul.f32 %v745, %v1193
        %v1258 = vmul.f32 %v746, %v1194
        %v1259 = vmul.f32 %v747, %v1195
        %v1260 = vmul.f32 %v748, %v1196
        %v1261 = vld [vmem:[#allocation2] sm:$0x1]
        %v1263 = vlaneseq
        %v1264 = vshrl.u32 %v1263, 7
        %v1265 = vsub.s32 0, %v1264
        %v1266 = vrot.slane %v1261, %v1265
        %v1268 = vmul.f32 %v1197, %v1266
        %v1269 = vmul.f32 %v1198, %v1266
        %v1270 = vmul.f32 %v1199, %v1266
        %v1271 = vmul.f32 %v1200, %v1266
        %v1272 = vmul.f32 %v1201, %v1266
        %v1273 = vmul.f32 %v1202, %v1266
        %v1274 = vmul.f32 %v1203, %v1266
        %v1275 = vmul.f32 %v1204, %v1266
        %v1276 = vmul.f32 %v1205, %v1266
        %v1277 = vmul.f32 %v1206, %v1266
        %v1278 = vmul.f32 %v1207, %v1266
        %v1279 = vmul.f32 %v1208, %v1266
        %v1280 = vmul.f32 %v1209, %v1266
        %v1281 = vmul.f32 %v1210, %v1266
        %v1282 = vmul.f32 %v1211, %v1266
        %v1283 = vmul.f32 %v1212, %v1266
        %v1284 = vmul.f32 %v1213, %v1266
        %v1285 = vmul.f32 %v1214, %v1266
        %v1286 = vmul.f32 %v1215, %v1266
        %v1287 = vmul.f32 %v1216, %v1266
        %v1288 = vmul.f32 %v1217, %v1266
        %v1289 = vmul.f32 %v1218, %v1266
        %v1290 = vmul.f32 %v1219, %v1266
        %v1291 = vmul.f32 %v1220, %v1266
        %v1292 = vmul.f32 %v1221, %v1266
        %v1293 = vmul.f32 %v1222, %v1266
        %v1294 = vmul.f32 %v1223, %v1266
        %v1295 = vmul.f32 %v1224, %v1266
        %v1296 = vmul.f32 %v1225, %v1266
        %v1297 = vmul.f32 %v1226, %v1266
        %v1298 = vmul.f32 %v1227, %v1266
        %v1299 = vmul.f32 %v1228, %v1266
        %v1300 = vmul.f32 %v1229, %v1266
        %v1301 = vmul.f32 %v1230, %v1266
        %v1302 = vmul.f32 %v1231, %v1266
        %v1303 = vmul.f32 %v1232, %v1266
        %v1304 = vmul.f32 %v1233, %v1266
        %v1305 = vmul.f32 %v1234, %v1266
        %v1306 = vmul.f32 %v1235, %v1266
        %v1307 = vmul.f32 %v1236, %v1266
        %v1308 = vmul.f32 %v1237, %v1266
        %v1309 = vmul.f32 %v1238, %v1266
        %v1310 = vmul.f32 %v1239, %v1266
        %v1311 = vmul.f32 %v1240, %v1266
        %v1312 = vmul.f32 %v1241, %v1266
        %v1313 = vmul.f32 %v1242, %v1266
        %v1314 = vmul.f32 %v1243, %v1266
        %v1315 = vmul.f32 %v1244, %v1266
        %v1316 = vmul.f32 %v1245, %v1266
        %v1317 = vmul.f32 %v1246, %v1266
        %v1318 = vmul.f32 %v1247, %v1266
        %v1319 = vmul.f32 %v1248, %v1266
        %v1320 = vmul.f32 %v1249, %v1266
        %v1321 = vmul.f32 %v1250, %v1266
        %v1322 = vmul.f32 %v1251, %v1266
        %v1323 = vmul.f32 %v1252, %v1266
        %v1324 = vmul.f32 %v1253, %v1266
        %v1325 = vmul.f32 %v1254, %v1266
        %v1326 = vmul.f32 %v1255, %v1266
        %v1327 = vmul.f32 %v1256, %v1266
        %v1328 = vmul.f32 %v1257, %v1266
        %v1329 = vmul.f32 %v1258, %v1266
        %v1330 = vmul.f32 %v1259, %v1266
        %v1331 = vmul.f32 %v1260, %v1266
        %v1332 = vld [vmem:[#allocation4] sm:$0x1]
        %v1334 = vlaneseq
        %v1335 = vshrl.u32 %v1334, 7
        %v1336 = vsub.s32 0, %v1335
        %v1337 = vrot.slane %v1332, %v1336
        %v1339 = vadd.f32 %v1268, %v1337
        %v1340 = vadd.f32 %v1269, %v1337
        %v1341 = vadd.f32 %v1270, %v1337
        %v1342 = vadd.f32 %v1271, %v1337
        %v1343 = vadd.f32 %v1272, %v1337
        %v1344 = vadd.f32 %v1273, %v1337
        %v1345 = vadd.f32 %v1274, %v1337
        %v1346 = vadd.f32 %v1275, %v1337
        %v1347 = vadd.f32 %v1276, %v1337
        %v1348 = vadd.f32 %v1277, %v1337
        %v1349 = vadd.f32 %v1278, %v1337
        %v1350 = vadd.f32 %v1279, %v1337
        %v1351 = vadd.f32 %v1280, %v1337
        %v1352 = vadd.f32 %v1281, %v1337
        %v1353 = vadd.f32 %v1282, %v1337
        %v1354 = vadd.f32 %v1283, %v1337
        %v1355 = vadd.f32 %v1284, %v1337
        %v1356 = vadd.f32 %v1285, %v1337
        %v1357 = vadd.f32 %v1286, %v1337
        %v1358 = vadd.f32 %v1287, %v1337
        %v1359 = vadd.f32 %v1288, %v1337
        %v1360 = vadd.f32 %v1289, %v1337
        %v1361 = vadd.f32 %v1290, %v1337
        %v1362 = vadd.f32 %v1291, %v1337
        %v1363 = vadd.f32 %v1292, %v1337
        %v1364 = vadd.f32 %v1293, %v1337
        %v1365 = vadd.f32 %v1294, %v1337
        %v1366 = vadd.f32 %v1295, %v1337
        %v1367 = vadd.f32 %v1296, %v1337
        %v1368 = vadd.f32 %v1297, %v1337
        %v1369 = vadd.f32 %v1298, %v1337
        %v1370 = vadd.f32 %v1299, %v1337
        %v1371 = vadd.f32 %v1300, %v1337
        %v1372 = vadd.f32 %v1301, %v1337
        %v1373 = vadd.f32 %v1302, %v1337
        %v1374 = vadd.f32 %v1303, %v1337
        %v1375 = vadd.f32 %v1304, %v1337
        %v1376 = vadd.f32 %v1305, %v1337
        %v1377 = vadd.f32 %v1306, %v1337
        %v1378 = vadd.f32 %v1307, %v1337
        %v1379 = vadd.f32 %v1308, %v1337
        %v1380 = vadd.f32 %v1309, %v1337
        %v1381 = vadd.f32 %v1310, %v1337
        %v1382 = vadd.f32 %v1311, %v1337
        %v1383 = vadd.f32 %v1312, %v1337
        %v1384 = vadd.f32 %v1313, %v1337
        %v1385 = vadd.f32 %v1314, %v1337
        %v1386 = vadd.f32 %v1315, %v1337
        %v1387 = vadd.f32 %v1316, %v1337
        %v1388 = vadd.f32 %v1317, %v1337
        %v1389 = vadd.f32 %v1318, %v1337
        %v1390 = vadd.f32 %v1319, %v1337
        %v1391 = vadd.f32 %v1320, %v1337
        %v1392 = vadd.f32 %v1321, %v1337
        %v1393 = vadd.f32 %v1322, %v1337
        %v1394 = vadd.f32 %v1323, %v1337
        %v1395 = vadd.f32 %v1324, %v1337
        %v1396 = vadd.f32 %v1325, %v1337
        %v1397 = vadd.f32 %v1326, %v1337
        %v1398 = vadd.f32 %v1327, %v1337
        %v1399 = vadd.f32 %v1328, %v1337
        %v1400 = vadd.f32 %v1329, %v1337
        %v1401 = vadd.f32 %v1330, %v1337
        %v1402 = vadd.f32 %v1331, %v1337
        %v1403 = vld [vmem:[#allocation6] sm:$0xff]
        %v1404 = vld [vmem:[#allocation6 + $0x8] sm:$0xff]
        %v1405 = vld [vmem:[#allocation6 + $0x10] sm:$0xff]
        %v1406 = vld [vmem:[#allocation6 + $0x18] sm:$0xff]
        %v1407 = vld [vmem:[#allocation6 + $0x20] sm:$0xff]
        %v1408 = vld [vmem:[#allocation6 + $0x28] sm:$0xff]
        %v1409 = vld [vmem:[#allocation6 + $0x30] sm:$0xff]
        %v1410 = vld [vmem:[#allocation6 + $0x38] sm:$0xff]
        %v1411 = vld [vmem:[#allocation6 + $0x40] sm:$0xff]
        %v1412 = vld [vmem:[#allocation6 + $0x48] sm:$0xff]
        %v1413 = vld [vmem:[#allocation6 + $0x50] sm:$0xff]
        %v1414 = vld [vmem:[#allocation6 + $0x58] sm:$0xff]
        %v1415 = vld [vmem:[#allocation6 + $0x60] sm:$0x1]
        %v1416 = vld [vmem:[#allocation6 + $0x68] sm:$0x1]
        %v1418 = vsel %vm427, %v1339, 0
        %v1421 = vsel %vm427, %v1340, 0
        %v1424 = vsel %vm427, %v1341, 0
        %v1427 = vsel %vm427, %v1342, 0
        %v1430 = vsel %vm427, %v1343, 0
        %v1433 = vsel %vm427, %v1344, 0
        %v1436 = vsel %vm427, %v1345, 0
        %v1439 = vsel %vm427, %v1346, 0
        %v1442 = vsel %vm427, %v1347, 0
        %v1445 = vsel %vm427, %v1348, 0
        %v1448 = vsel %vm427, %v1349, 0
        %v1451 = vsel %vm427, %v1350, 0
        %v1454 = vsel %vm427, %v1351, 0
        %v1457 = vsel %vm427, %v1352, 0
        %v1460 = vsel %vm427, %v1353, 0
        %v1463 = vsel %vm427, %v1354, 0
        %v1466 = vsel %vm427, %v1355, 0
        %v1469 = vsel %vm427, %v1356, 0
        %v1472 = vsel %vm427, %v1357, 0
        %v1475 = vsel %vm427, %v1358, 0
        %v1478 = vsel %vm427, %v1359, 0
        %v1481 = vsel %vm427, %v1360, 0
        %v1484 = vsel %vm427, %v1361, 0
        %v1487 = vsel %vm427, %v1362, 0
        %v1490 = vsel %vm427, %v1363, 0
        %v1493 = vsel %vm427, %v1364, 0
        %v1496 = vsel %vm427, %v1365, 0
        %v1499 = vsel %vm427, %v1366, 0
        %v1502 = vsel %vm427, %v1367, 0
        %v1505 = vsel %vm427, %v1368, 0
        %v1508 = vsel %vm427, %v1369, 0
        %v1511 = vsel %vm427, %v1370, 0
        %v1514 = vsel %vm427, %v1371, 0
        %v1517 = vsel %vm427, %v1372, 0
        %v1520 = vsel %vm427, %v1373, 0
        %v1523 = vsel %vm427, %v1374, 0
        %v1526 = vsel %vm427, %v1375, 0
        %v1529 = vsel %vm427, %v1376, 0
        %v1532 = vsel %vm427, %v1377, 0
        %v1535 = vsel %vm427, %v1378, 0
        %v1538 = vsel %vm427, %v1379, 0
        %v1541 = vsel %vm427, %v1380, 0
        %v1544 = vsel %vm427, %v1381, 0
        %v1547 = vsel %vm427, %v1382, 0
        %v1550 = vsel %vm427, %v1383, 0
        %v1553 = vsel %vm427, %v1384, 0
        %v1556 = vsel %vm427, %v1385, 0
        %v1559 = vsel %vm427, %v1386, 0
        %v1562 = vsel %vm427, %v1387, 0
        %v1565 = vsel %vm427, %v1388, 0
        %v1568 = vsel %vm427, %v1389, 0
        %v1571 = vsel %vm427, %v1390, 0
        %v1574 = vsel %vm427, %v1391, 0
        %v1577 = vsel %vm427, %v1392, 0
        %v1580 = vsel %vm427, %v1393, 0
        %v1583 = vsel %vm427, %v1394, 0
        %v1586 = vsel %vm427, %v1395, 0
        %v1589 = vsel %vm427, %v1396, 0
        %v1592 = vsel %vm427, %v1397, 0
        %v1595 = vsel %vm427, %v1398, 0
        %v1598 = vsel %vm427, %v1399, 0
        %v1601 = vsel %vm427, %v1400, 0
        %v1604 = vsel %vm427, %v1401, 0
        %v1607 = vsel %vm427, %v1402, 0
        %vm1609 = vcmask 1040384
        %v1611 = vsel %vm1609, %v1415, 0
        %v1614 = vsel %vm1609, %v1416, 0
        %1616 = vmatprep.subr.mxu0 0.0
        %1617 = vmatpush1.msra.mxu0 0.0
        %1618 = vmatprep.subr.mxu0 0.0
        %1619 = vmatpush1.msra.mxu0 0.0
        %1620 = vmatprep.subr.mxu0 0.0
        %1621 = vmatpush1.msra.mxu0 0.0
        %1622 = vmatprep.subr.mxu0 0.0
        %1623 = vmatpush1.msra.mxu0 0.0
        %1624 = vmatprep.subr.mxu0 0.0
        %1625 = vmatpush1.msra.mxu0 0.0
        %1626 = vmatprep.subr.mxu0 0.0
        %1627 = vmatpush1.msra.mxu0 0.0
        %1628 = vmatprep.subr.mxu0 0.0
        %1629 = vmatpush1.msra.mxu0 0.0
        %1630 = vmatprep.subr.mxu0 0.0
        %1631 = vmatpush1.msra.mxu0 0.0
        %1632 = vmatprep.subr.mxu0 0.0
        %1633 = vmatpush1.msra.mxu0 0.0
        %1634 = vmatprep.subr.mxu0 %v1614
        %1635 = vmatpush1.msra.mxu0 %v1611
        %1636 = vmatprep.subr.mxu0 %v1414
        %1637 = vmatpush1.msra.mxu0 %v1413
        %1638 = vmatprep.subr.mxu0 %v1412
        %1639 = vmatpush1.msra.mxu0 %v1411
        %1640 = vmatprep.subr.mxu0 %v1410
        %1641 = vmatpush1.msra.mxu0 %v1409
        %1642 = vmatprep.subr.mxu0 %v1408
        %1643 = vmatpush1.msra.mxu0 %v1407
        %1644 = vmatprep.subr.mxu0 %v1406
        %1645 = vmatpush1.msra.mxu0 %v1405
        %1646 = vmatprep.subr.mxu0 %v1404
        %1647 = vmatpush1.msra.mxu0 %v1403
        %1648 = vmatprep.subr.mxu0 0.0
        %1649 = vmatpush2.msra.mxu0 0.0
        %1650 = vmatprep.subr.mxu0 0.0
        %1651 = vmatpush2.msra.mxu0 0.0
        %1652 = vmatprep.subr.mxu0 0.0
        %1653 = vmatpush2.msra.mxu0 0.0
        %1654 = vmatprep.subr.mxu0 0.0
        %1655 = vmatpush2.msra.mxu0 0.0
        %1656 = vmatprep.subr.mxu0 0.0
        %1657 = vmatpush2.msra.mxu0 0.0
        %1658 = vmatprep.subr.mxu0 0.0
        %1659 = vmatpush2.msra.mxu0 0.0
        %1660 = vmatprep.subr.mxu0 0.0
        %1661 = vmatpush2.msra.mxu0 0.0
        %1662 = vmatprep.subr.mxu0 0.0
        %1663 = vmatpush2.msra.mxu0 0.0
        %1664 = vmatprep.subr.mxu0 0.0
        %1665 = vmatpush2.msra.mxu0 0.0
        %1666 = vmatprep.subr.mxu0 0.0
        %1667 = vmatpush2.msra.mxu0 0.0
        %1668 = vmatprep.subr.mxu0 0.0
        %1669 = vmatpush2.msra.mxu0 0.0
        %1670 = vmatprep.subr.mxu0 0.0
        %1671 = vmatpush2.msra.mxu0 0.0
        %1672 = vmatprep.subr.mxu0 0.0
        %1673 = vmatpush2.msra.mxu0 0.0
        %1674 = vmatprep.subr.mxu0 0.0
        %1675 = vmatpush2.msra.mxu0 0.0
        %1676 = vmatprep.subr.mxu0 0.0
        %1677 = vmatpush2.msra.mxu0 0.0
        %1678 = vmatprep.subr.mxu0 0.0
        %1679 = vmatpush2.msra.mxu0 0.0
        %1680 = vmatprep.mubr.f32.mxu0 0.0
        %1681 = vmatmul.mubr.f32.gmra.mxu0 %v1418
        %v1682 = vpop.f32.mrf.mxu0
        %v1683 = vadd.f32 0.0, %v1682
        %v1684 = vpop.f32.mrf.mxu0
        %v1685 = vadd.f32 0.0, %v1684
        %1686 = vmatprep.mubr.f32.mxu0 0.0
        %1687 = vmatmul.mubr.f32.gmra.mxu0 %v1421
        %v1688 = vpop.f32.mrf.mxu0
        %v1689 = vadd.f32 0.0, %v1688
        %v1690 = vpop.f32.mrf.mxu0
        %v1691 = vadd.f32 0.0, %v1690
        %1692 = vmatprep.mubr.f32.mxu0 0.0
        %1693 = vmatmul.mubr.f32.gmra.mxu0 %v1424
        %v1694 = vpop.f32.mrf.mxu0
        %v1695 = vadd.f32 0.0, %v1694
        %v1696 = vpop.f32.mrf.mxu0
        %v1697 = vadd.f32 0.0, %v1696
        %1698 = vmatprep.mubr.f32.mxu0 0.0
        %1699 = vmatmul.mubr.f32.gmra.mxu0 %v1427
        %v1700 = vpop.f32.mrf.mxu0
        %v1701 = vadd.f32 0.0, %v1700
        %v1702 = vpop.f32.mrf.mxu0
        %v1703 = vadd.f32 0.0, %v1702
        %1704 = vmatprep.mubr.f32.mxu0 0.0
        %1705 = vmatmul.mubr.f32.gmra.mxu0 %v1430
        %v1706 = vpop.f32.mrf.mxu0
        %v1707 = vadd.f32 0.0, %v1706
        %v1708 = vpop.f32.mrf.mxu0
        %v1709 = vadd.f32 0.0, %v1708
        %1710 = vmatprep.mubr.f32.mxu0 0.0
        %1711 = vmatmul.mubr.f32.gmra.mxu0 %v1433
        %v1712 = vpop.f32.mrf.mxu0
        %v1713 = vadd.f32 0.0, %v1712
        %v1714 = vpop.f32.mrf.mxu0
        %v1715 = vadd.f32 0.0, %v1714
        %1716 = vmatprep.mubr.f32.mxu0 0.0
        %1717 = vmatmul.mubr.f32.gmra.mxu0 %v1436
        %v1718 = vpop.f32.mrf.mxu0
        %v1719 = vadd.f32 0.0, %v1718
        %v1720 = vpop.f32.mrf.mxu0
        %v1721 = vadd.f32 0.0, %v1720
        %1722 = vmatprep.mubr.f32.mxu0 0.0
        %1723 = vmatmul.mubr.f32.gmra.mxu0 %v1439
        %v1724 = vpop.f32.mrf.mxu0
        %v1725 = vadd.f32 0.0, %v1724
        %v1726 = vpop.f32.mrf.mxu0
        %v1727 = vadd.f32 0.0, %v1726
        %1728 = vmatprep.mubr.f32.mxu0 0.0
        %1729 = vmatmul.mubr.f32.gmra.mxu0 %v1442
        %v1730 = vpop.f32.mrf.mxu0
        %v1731 = vadd.f32 0.0, %v1730
        %v1732 = vpop.f32.mrf.mxu0
        %v1733 = vadd.f32 0.0, %v1732
        %1734 = vmatprep.mubr.f32.mxu0 0.0
        %1735 = vmatmul.mubr.f32.gmra.mxu0 %v1445
        %v1736 = vpop.f32.mrf.mxu0
        %v1737 = vadd.f32 0.0, %v1736
        %v1738 = vpop.f32.mrf.mxu0
        %v1739 = vadd.f32 0.0, %v1738
        %1740 = vmatprep.mubr.f32.mxu0 0.0
        %1741 = vmatmul.mubr.f32.gmra.mxu0 %v1448
        %v1742 = vpop.f32.mrf.mxu0
        %v1743 = vadd.f32 0.0, %v1742
        %v1744 = vpop.f32.mrf.mxu0
        %v1745 = vadd.f32 0.0, %v1744
        %1746 = vmatprep.mubr.f32.mxu0 0.0
        %1747 = vmatmul.mubr.f32.gmra.mxu0 %v1451
        %v1748 = vpop.f32.mrf.mxu0
        %v1749 = vadd.f32 0.0, %v1748
        %v1750 = vpop.f32.mrf.mxu0
        %v1751 = vadd.f32 0.0, %v1750
        %1752 = vmatprep.mubr.f32.mxu0 0.0
        %1753 = vmatmul.mubr.f32.gmra.mxu0 %v1454
        %v1754 = vpop.f32.mrf.mxu0
        %v1755 = vadd.f32 0.0, %v1754
        %v1756 = vpop.f32.mrf.mxu0
        %v1757 = vadd.f32 0.0, %v1756
        %1758 = vmatprep.mubr.f32.mxu0 0.0
        %1759 = vmatmul.mubr.f32.gmra.mxu0 %v1457
        %v1760 = vpop.f32.mrf.mxu0
        %v1761 = vadd.f32 0.0, %v1760
        %v1762 = vpop.f32.mrf.mxu0
        %v1763 = vadd.f32 0.0, %v1762
        %1764 = vmatprep.mubr.f32.mxu0 0.0
        %1765 = vmatmul.mubr.f32.gmra.mxu0 %v1460
        %v1766 = vpop.f32.mrf.mxu0
        %v1767 = vadd.f32 0.0, %v1766
        %v1768 = vpop.f32.mrf.mxu0
        %v1769 = vadd.f32 0.0, %v1768
        %1770 = vmatprep.mubr.f32.mxu0 0.0
        %1771 = vmatmul.mubr.f32.gmra.mxu0 %v1463
        %v1772 = vpop.f32.mrf.mxu0
        %v1773 = vadd.f32 0.0, %v1772
        %v1774 = vpop.f32.mrf.mxu0
        %v1775 = vadd.f32 0.0, %v1774
        %1776 = vmatprep.mubr.f32.mxu0 0.0
        %1777 = vmatmul.mubr.f32.gmra.mxu0 %v1466
        %v1778 = vpop.f32.mrf.mxu0
        %v1779 = vadd.f32 0.0, %v1778
        %v1780 = vpop.f32.mrf.mxu0
        %v1781 = vadd.f32 0.0, %v1780
        %1782 = vmatprep.mubr.f32.mxu0 0.0
        %1783 = vmatmul.mubr.f32.gmra.mxu0 %v1469
        %v1784 = vpop.f32.mrf.mxu0
        %v1785 = vadd.f32 0.0, %v1784
        %v1786 = vpop.f32.mrf.mxu0
        %v1787 = vadd.f32 0.0, %v1786
        %1788 = vmatprep.mubr.f32.mxu0 0.0
        %1789 = vmatmul.mubr.f32.gmra.mxu0 %v1472
        %v1790 = vpop.f32.mrf.mxu0
        %v1791 = vadd.f32 0.0, %v1790
        %v1792 = vpop.f32.mrf.mxu0
        %v1793 = vadd.f32 0.0, %v1792
        %1794 = vmatprep.mubr.f32.mxu0 0.0
        %1795 = vmatmul.mubr.f32.gmra.mxu0 %v1475
        %v1796 = vpop.f32.mrf.mxu0
        %v1797 = vadd.f32 0.0, %v1796
        %v1798 = vpop.f32.mrf.mxu0
        %v1799 = vadd.f32 0.0, %v1798
        %1800 = vmatprep.mubr.f32.mxu0 0.0
        %1801 = vmatmul.mubr.f32.gmra.mxu0 %v1478
        %v1802 = vpop.f32.mrf.mxu0
        %v1803 = vadd.f32 0.0, %v1802
        %v1804 = vpop.f32.mrf.mxu0
        %v1805 = vadd.f32 0.0, %v1804
        %1806 = vmatprep.mubr.f32.mxu0 0.0
        %1807 = vmatmul.mubr.f32.gmra.mxu0 %v1481
        %v1808 = vpop.f32.mrf.mxu0
        %v1809 = vadd.f32 0.0, %v1808
        %v1810 = vpop.f32.mrf.mxu0
        %v1811 = vadd.f32 0.0, %v1810
        %1812 = vmatprep.mubr.f32.mxu0 0.0
        %1813 = vmatmul.mubr.f32.gmra.mxu0 %v1484
        %v1814 = vpop.f32.mrf.mxu0
        %v1815 = vadd.f32 0.0, %v1814
        %v1816 = vpop.f32.mrf.mxu0
        %v1817 = vadd.f32 0.0, %v1816
        %1818 = vmatprep.mubr.f32.mxu0 0.0
        %1819 = vmatmul.mubr.f32.gmra.mxu0 %v1487
        %v1820 = vpop.f32.mrf.mxu0
        %v1821 = vadd.f32 0.0, %v1820
        %v1822 = vpop.f32.mrf.mxu0
        %v1823 = vadd.f32 0.0, %v1822
        %1824 = vmatprep.mubr.f32.mxu0 0.0
        %1825 = vmatmul.mubr.f32.gmra.mxu0 %v1490
        %v1826 = vpop.f32.mrf.mxu0
        %v1827 = vadd.f32 0.0, %v1826
        %v1828 = vpop.f32.mrf.mxu0
        %v1829 = vadd.f32 0.0, %v1828
        %1830 = vmatprep.mubr.f32.mxu0 0.0
        %1831 = vmatmul.mubr.f32.gmra.mxu0 %v1493
        %v1832 = vpop.f32.mrf.mxu0
        %v1833 = vadd.f32 0.0, %v1832
        %v1834 = vpop.f32.mrf.mxu0
        %v1835 = vadd.f32 0.0, %v1834
        %1836 = vmatprep.mubr.f32.mxu0 0.0
        %1837 = vmatmul.mubr.f32.gmra.mxu0 %v1496
        %v1838 = vpop.f32.mrf.mxu0
        %v1839 = vadd.f32 0.0, %v1838
        %v1840 = vpop.f32.mrf.mxu0
        %v1841 = vadd.f32 0.0, %v1840
        %1842 = vmatprep.mubr.f32.mxu0 0.0
        %1843 = vmatmul.mubr.f32.gmra.mxu0 %v1499
        %v1844 = vpop.f32.mrf.mxu0
        %v1845 = vadd.f32 0.0, %v1844
        %v1846 = vpop.f32.mrf.mxu0
        %v1847 = vadd.f32 0.0, %v1846
        %1848 = vmatprep.mubr.f32.mxu0 0.0
        %1849 = vmatmul.mubr.f32.gmra.mxu0 %v1502
        %v1850 = vpop.f32.mrf.mxu0
        %v1851 = vadd.f32 0.0, %v1850
        %v1852 = vpop.f32.mrf.mxu0
        %v1853 = vadd.f32 0.0, %v1852
        %1854 = vmatprep.mubr.f32.mxu0 0.0
        %1855 = vmatmul.mubr.f32.gmra.mxu0 %v1505
        %v1856 = vpop.f32.mrf.mxu0
        %v1857 = vadd.f32 0.0, %v1856
        %v1858 = vpop.f32.mrf.mxu0
        %v1859 = vadd.f32 0.0, %v1858
        %1860 = vmatprep.mubr.f32.mxu0 0.0
        %1861 = vmatmul.mubr.f32.gmra.mxu0 %v1508
        %v1862 = vpop.f32.mrf.mxu0
        %v1863 = vadd.f32 0.0, %v1862
        %v1864 = vpop.f32.mrf.mxu0
        %v1865 = vadd.f32 0.0, %v1864
        %1866 = vmatprep.mubr.f32.mxu0 0.0
        %1867 = vmatmul.mubr.f32.gmra.mxu0 %v1511
        %v1868 = vpop.f32.mrf.mxu0
        %v1869 = vadd.f32 0.0, %v1868
        %v1870 = vpop.f32.mrf.mxu0
        %v1871 = vadd.f32 0.0, %v1870
        %1872 = vmatprep.mubr.f32.mxu0 0.0
        %1873 = vmatmul.mubr.f32.gmra.mxu0 %v1514
        %v1874 = vpop.f32.mrf.mxu0
        %v1875 = vadd.f32 0.0, %v1874
        %v1876 = vpop.f32.mrf.mxu0
        %v1877 = vadd.f32 0.0, %v1876
        %1878 = vmatprep.mubr.f32.mxu0 0.0
        %1879 = vmatmul.mubr.f32.gmra.mxu0 %v1517
        %v1880 = vpop.f32.mrf.mxu0
        %v1881 = vadd.f32 0.0, %v1880
        %v1882 = vpop.f32.mrf.mxu0
        %v1883 = vadd.f32 0.0, %v1882
        %1884 = vmatprep.mubr.f32.mxu0 0.0
        %1885 = vmatmul.mubr.f32.gmra.mxu0 %v1520
        %v1886 = vpop.f32.mrf.mxu0
        %v1887 = vadd.f32 0.0, %v1886
        %v1888 = vpop.f32.mrf.mxu0
        %v1889 = vadd.f32 0.0, %v1888
        %1890 = vmatprep.mubr.f32.mxu0 0.0
        %1891 = vmatmul.mubr.f32.gmra.mxu0 %v1523
        %v1892 = vpop.f32.mrf.mxu0
        %v1893 = vadd.f32 0.0, %v1892
        %v1894 = vpop.f32.mrf.mxu0
        %v1895 = vadd.f32 0.0, %v1894
        %1896 = vmatprep.mubr.f32.mxu0 0.0
        %1897 = vmatmul.mubr.f32.gmra.mxu0 %v1526
        %v1898 = vpop.f32.mrf.mxu0
        %v1899 = vadd.f32 0.0, %v1898
        %v1900 = vpop.f32.mrf.mxu0
        %v1901 = vadd.f32 0.0, %v1900
        %1902 = vmatprep.mubr.f32.mxu0 0.0
        %1903 = vmatmul.mubr.f32.gmra.mxu0 %v1529
        %v1904 = vpop.f32.mrf.mxu0
        %v1905 = vadd.f32 0.0, %v1904
        %v1906 = vpop.f32.mrf.mxu0
        %v1907 = vadd.f32 0.0, %v1906
        %1908 = vmatprep.mubr.f32.mxu0 0.0
        %1909 = vmatmul.mubr.f32.gmra.mxu0 %v1532
        %v1910 = vpop.f32.mrf.mxu0
        %v1911 = vadd.f32 0.0, %v1910
        %v1912 = vpop.f32.mrf.mxu0
        %v1913 = vadd.f32 0.0, %v1912
        %1914 = vmatprep.mubr.f32.mxu0 0.0
        %1915 = vmatmul.mubr.f32.gmra.mxu0 %v1535
        %v1916 = vpop.f32.mrf.mxu0
        %v1917 = vadd.f32 0.0, %v1916
        %v1918 = vpop.f32.mrf.mxu0
        %v1919 = vadd.f32 0.0, %v1918
        %1920 = vmatprep.mubr.f32.mxu0 0.0
        %1921 = vmatmul.mubr.f32.gmra.mxu0 %v1538
        %v1922 = vpop.f32.mrf.mxu0
        %v1923 = vadd.f32 0.0, %v1922
        %v1924 = vpop.f32.mrf.mxu0
        %v1925 = vadd.f32 0.0, %v1924
        %1926 = vmatprep.mubr.f32.mxu0 0.0
        %1927 = vmatmul.mubr.f32.gmra.mxu0 %v1541
        %v1928 = vpop.f32.mrf.mxu0
        %v1929 = vadd.f32 0.0, %v1928
        %v1930 = vpop.f32.mrf.mxu0
        %v1931 = vadd.f32 0.0, %v1930
        %1932 = vmatprep.mubr.f32.mxu0 0.0
        %1933 = vmatmul.mubr.f32.gmra.mxu0 %v1544
        %v1934 = vpop.f32.mrf.mxu0
        %v1935 = vadd.f32 0.0, %v1934
        %v1936 = vpop.f32.mrf.mxu0
        %v1937 = vadd.f32 0.0, %v1936
        %1938 = vmatprep.mubr.f32.mxu0 0.0
        %1939 = vmatmul.mubr.f32.gmra.mxu0 %v1547
        %v1940 = vpop.f32.mrf.mxu0
        %v1941 = vadd.f32 0.0, %v1940
        %v1942 = vpop.f32.mrf.mxu0
        %v1943 = vadd.f32 0.0, %v1942
        %1944 = vmatprep.mubr.f32.mxu0 0.0
        %1945 = vmatmul.mubr.f32.gmra.mxu0 %v1550
        %v1946 = vpop.f32.mrf.mxu0
        %v1947 = vadd.f32 0.0, %v1946
        %v1948 = vpop.f32.mrf.mxu0
        %v1949 = vadd.f32 0.0, %v1948
        %1950 = vmatprep.mubr.f32.mxu0 0.0
        %1951 = vmatmul.mubr.f32.gmra.mxu0 %v1553
        %v1952 = vpop.f32.mrf.mxu0
        %v1953 = vadd.f32 0.0, %v1952
        %v1954 = vpop.f32.mrf.mxu0
        %v1955 = vadd.f32 0.0, %v1954
        %1956 = vmatprep.mubr.f32.mxu0 0.0
        %1957 = vmatmul.mubr.f32.gmra.mxu0 %v1556
        %v1958 = vpop.f32.mrf.mxu0
        %v1959 = vadd.f32 0.0, %v1958
        %v1960 = vpop.f32.mrf.mxu0
        %v1961 = vadd.f32 0.0, %v1960
        %1962 = vmatprep.mubr.f32.mxu0 0.0
        %1963 = vmatmul.mubr.f32.gmra.mxu0 %v1559
        %v1964 = vpop.f32.mrf.mxu0
        %v1965 = vadd.f32 0.0, %v1964
        %v1966 = vpop.f32.mrf.mxu0
        %v1967 = vadd.f32 0.0, %v1966
        %1968 = vmatprep.mubr.f32.mxu0 0.0
        %1969 = vmatmul.mubr.f32.gmra.mxu0 %v1562
        %v1970 = vpop.f32.mrf.mxu0
        %v1971 = vadd.f32 0.0, %v1970
        %v1972 = vpop.f32.mrf.mxu0
        %v1973 = vadd.f32 0.0, %v1972
        %1974 = vmatprep.mubr.f32.mxu0 0.0
        %1975 = vmatmul.mubr.f32.gmra.mxu0 %v1565
        %v1976 = vpop.f32.mrf.mxu0
        %v1977 = vadd.f32 0.0, %v1976
        %v1978 = vpop.f32.mrf.mxu0
        %v1979 = vadd.f32 0.0, %v1978
        %1980 = vmatprep.mubr.f32.mxu0 0.0
        %1981 = vmatmul.mubr.f32.gmra.mxu0 %v1568
        %v1982 = vpop.f32.mrf.mxu0
        %v1983 = vadd.f32 0.0, %v1982
        %v1984 = vpop.f32.mrf.mxu0
        %v1985 = vadd.f32 0.0, %v1984
        %1986 = vmatprep.mubr.f32.mxu0 0.0
        %1987 = vmatmul.mubr.f32.gmra.mxu0 %v1571
        %v1988 = vpop.f32.mrf.mxu0
        %v1989 = vadd.f32 0.0, %v1988
        %v1990 = vpop.f32.mrf.mxu0
        %v1991 = vadd.f32 0.0, %v1990
        %1992 = vmatprep.mubr.f32.mxu0 0.0
        %1993 = vmatmul.mubr.f32.gmra.mxu0 %v1574
        %v1994 = vpop.f32.mrf.mxu0
        %v1995 = vadd.f32 0.0, %v1994
        %v1996 = vpop.f32.mrf.mxu0
        %v1997 = vadd.f32 0.0, %v1996
        %1998 = vmatprep.mubr.f32.mxu0 0.0
        %1999 = vmatmul.mubr.f32.gmra.mxu0 %v1577
        %v2000 = vpop.f32.mrf.mxu0
        %v2001 = vadd.f32 0.0, %v2000
        %v2002 = vpop.f32.mrf.mxu0
        %v2003 = vadd.f32 0.0, %v2002
        %2004 = vmatprep.mubr.f32.mxu0 0.0
        %2005 = vmatmul.mubr.f32.gmra.mxu0 %v1580
        %v2006 = vpop.f32.mrf.mxu0
        %v2007 = vadd.f32 0.0, %v2006
        %v2008 = vpop.f32.mrf.mxu0
        %v2009 = vadd.f32 0.0, %v2008
        %2010 = vmatprep.mubr.f32.mxu0 0.0
        %2011 = vmatmul.mubr.f32.gmra.mxu0 %v1583
        %v2012 = vpop.f32.mrf.mxu0
        %v2013 = vadd.f32 0.0, %v2012
        %v2014 = vpop.f32.mrf.mxu0
        %v2015 = vadd.f32 0.0, %v2014
        %2016 = vmatprep.mubr.f32.mxu0 0.0
        %2017 = vmatmul.mubr.f32.gmra.mxu0 %v1586
        %v2018 = vpop.f32.mrf.mxu0
        %v2019 = vadd.f32 0.0, %v2018
        %v2020 = vpop.f32.mrf.mxu0
        %v2021 = vadd.f32 0.0, %v2020
        %2022 = vmatprep.mubr.f32.mxu0 0.0
        %2023 = vmatmul.mubr.f32.gmra.mxu0 %v1589
        %v2024 = vpop.f32.mrf.mxu0
        %v2025 = vadd.f32 0.0, %v2024
        %v2026 = vpop.f32.mrf.mxu0
        %v2027 = vadd.f32 0.0, %v2026
        %2028 = vmatprep.mubr.f32.mxu0 0.0
        %2029 = vmatmul.mubr.f32.gmra.mxu0 %v1592
        %v2030 = vpop.f32.mrf.mxu0
        %v2031 = vadd.f32 0.0, %v2030
        %v2032 = vpop.f32.mrf.mxu0
        %v2033 = vadd.f32 0.0, %v2032
        %2034 = vmatprep.mubr.f32.mxu0 0.0
        %2035 = vmatmul.mubr.f32.gmra.mxu0 %v1595
        %v2036 = vpop.f32.mrf.mxu0
        %v2037 = vadd.f32 0.0, %v2036
        %v2038 = vpop.f32.mrf.mxu0
        %v2039 = vadd.f32 0.0, %v2038
        %2040 = vmatprep.mubr.f32.mxu0 0.0
        %2041 = vmatmul.mubr.f32.gmra.mxu0 %v1598
        %v2042 = vpop.f32.mrf.mxu0
        %v2043 = vadd.f32 0.0, %v2042
        %v2044 = vpop.f32.mrf.mxu0
        %v2045 = vadd.f32 0.0, %v2044
        %2046 = vmatprep.mubr.f32.mxu0 0.0
        %2047 = vmatmul.mubr.f32.gmra.mxu0 %v1601
        %v2048 = vpop.f32.mrf.mxu0
        %v2049 = vadd.f32 0.0, %v2048
        %v2050 = vpop.f32.mrf.mxu0
        %v2051 = vadd.f32 0.0, %v2050
        %2052 = vmatprep.mubr.f32.mxu0 0.0
        %2053 = vmatmul.mubr.f32.gmra.mxu0 %v1604
        %v2054 = vpop.f32.mrf.mxu0
        %v2055 = vadd.f32 0.0, %v2054
        %v2056 = vpop.f32.mrf.mxu0
        %v2057 = vadd.f32 0.0, %v2056
        %2058 = vmatprep.mubr.f32.mxu0 0.0
        %2059 = vmatmul.mubr.f32.gmra.mxu0 %v1607
        %v2060 = vpop.f32.mrf.mxu0
        %v2061 = vadd.f32 0.0, %v2060
        %v2062 = vpop.f32.mrf.mxu0
        %v2063 = vadd.f32 0.0, %v2062
        %2064 = vdwg.mxu0
        %v2065 = vpack.c.bf16 %v1689, %v1683
        %v2066 = vpack.c.bf16 %v1691, %v1685
        %v2067 = vpack.c.bf16 %v1701, %v1695
        %v2068 = vpack.c.bf16 %v1703, %v1697
        %v2069 = vpack.c.bf16 %v1713, %v1707
        %v2070 = vpack.c.bf16 %v1715, %v1709
        %v2071 = vpack.c.bf16 %v1725, %v1719
        %v2072 = vpack.c.bf16 %v1727, %v1721
        %v2073 = vpack.c.bf16 %v1737, %v1731
        %v2074 = vpack.c.bf16 %v1739, %v1733
        %v2075 = vpack.c.bf16 %v1749, %v1743
        %v2076 = vpack.c.bf16 %v1751, %v1745
        %v2077 = vpack.c.bf16 %v1761, %v1755
        %v2078 = vpack.c.bf16 %v1763, %v1757
        %v2079 = vpack.c.bf16 %v1773, %v1767
        %v2080 = vpack.c.bf16 %v1775, %v1769
        %v2081 = vpack.c.bf16 %v1785, %v1779
        %v2082 = vpack.c.bf16 %v1787, %v1781
        %v2083 = vpack.c.bf16 %v1797, %v1791
        %v2084 = vpack.c.bf16 %v1799, %v1793
        %v2085 = vpack.c.bf16 %v1809, %v1803
        %v2086 = vpack.c.bf16 %v1811, %v1805
        %v2087 = vpack.c.bf16 %v1821, %v1815
        %v2088 = vpack.c.bf16 %v1823, %v1817
        %v2089 = vpack.c.bf16 %v1833, %v1827
        %v2090 = vpack.c.bf16 %v1835, %v1829
        %v2091 = vpack.c.bf16 %v1845, %v1839
        %v2092 = vpack.c.bf16 %v1847, %v1841
        %v2093 = vpack.c.bf16 %v1857, %v1851
        %v2094 = vpack.c.bf16 %v1859, %v1853
        %v2095 = vpack.c.bf16 %v1869, %v1863
        %v2096 = vpack.c.bf16 %v1871, %v1865
        %v2097 = vpack.c.bf16 %v1881, %v1875
        %v2098 = vpack.c.bf16 %v1883, %v1877
        %v2099 = vpack.c.bf16 %v1893, %v1887
        %v2100 = vpack.c.bf16 %v1895, %v1889
        %v2101 = vpack.c.bf16 %v1905, %v1899
        %v2102 = vpack.c.bf16 %v1907, %v1901
        %v2103 = vpack.c.bf16 %v1917, %v1911
        %v2104 = vpack.c.bf16 %v1919, %v1913
        %v2105 = vpack.c.bf16 %v1929, %v1923
        %v2106 = vpack.c.bf16 %v1931, %v1925
        %v2107 = vpack.c.bf16 %v1941, %v1935
        %v2108 = vpack.c.bf16 %v1943, %v1937
        %v2109 = vpack.c.bf16 %v1953, %v1947
        %v2110 = vpack.c.bf16 %v1955, %v1949
        %v2111 = vpack.c.bf16 %v1965, %v1959
        %v2112 = vpack.c.bf16 %v1967, %v1961
        %v2113 = vpack.c.bf16 %v1977, %v1971
        %v2114 = vpack.c.bf16 %v1979, %v1973
        %v2115 = vpack.c.bf16 %v1989, %v1983
        %v2116 = vpack.c.bf16 %v1991, %v1985
        %v2117 = vpack.c.bf16 %v2001, %v1995
        %v2118 = vpack.c.bf16 %v2003, %v1997
        %v2119 = vpack.c.bf16 %v2013, %v2007
        %v2120 = vpack.c.bf16 %v2015, %v2009
        %v2121 = vpack.c.bf16 %v2025, %v2019
        %v2122 = vpack.c.bf16 %v2027, %v2021
        %v2123 = vpack.c.bf16 %v2037, %v2031
        %v2124 = vpack.c.bf16 %v2039, %v2033
        %v2125 = vpack.c.bf16 %v2049, %v2043
        %v2126 = vpack.c.bf16 %v2051, %v2045
        %v2127 = vpack.c.bf16 %v2061, %v2055
        %v2128 = vpack.c.bf16 %v2063, %v2057
        %v2129 = vld [vmem:[#allocation7] sm:$0xff]
        %v2130 = vld [vmem:[#allocation7 + $0x8] sm:$0xff]
        %v2131 = vld [vmem:[#allocation7 + $0x10] sm:$0xff]
        %v2132 = vld [vmem:[#allocation7 + $0x18] sm:$0xff]
        %v2133 = vld [vmem:[#allocation7 + $0x20] sm:$0xff]
        %v2134 = vld [vmem:[#allocation7 + $0x28] sm:$0xff]
        %v2135 = vld [vmem:[#allocation7 + $0x30] sm:$0xff]
        %v2136 = vld [vmem:[#allocation7 + $0x38] sm:$0xff]
        %v2137 = vld [vmem:[#allocation7 + $0x40] sm:$0xff]
        %v2138 = vld [vmem:[#allocation7 + $0x48] sm:$0xff]
        %v2139 = vld [vmem:[#allocation7 + $0x50] sm:$0xff]
        %v2140 = vld [vmem:[#allocation7 + $0x58] sm:$0xff]
        %v2141 = vld [vmem:[#allocation7 + $0x60] sm:$0xff]
        %v2142 = vld [vmem:[#allocation7 + $0x68] sm:$0xff]
        %v2143 = vld [vmem:[#allocation7 + $0x70] sm:$0xff]
        %v2144 = vld [vmem:[#allocation7 + $0x78] sm:$0xff]
        %v2145 = vld [vmem:[#allocation7 + $0x80] sm:$0xff]
        %v2146 = vld [vmem:[#allocation7 + $0x88] sm:$0xff]
        %v2147 = vld [vmem:[#allocation7 + $0x90] sm:$0xff]
        %v2148 = vld [vmem:[#allocation7 + $0x98] sm:$0xff]
        %v2149 = vld [vmem:[#allocation7 + $0xa0] sm:$0xff]
        %v2150 = vld [vmem:[#allocation7 + $0xa8] sm:$0xff]
        %v2151 = vld [vmem:[#allocation7 + $0xb0] sm:$0xff]
        %v2152 = vld [vmem:[#allocation7 + $0xb8] sm:$0xff]
        %v2153 = vld [vmem:[#allocation7 + $0xc0] sm:$0x1]
        %v2154 = vld [vmem:[#allocation7 + $0xc8] sm:$0x1]
        %v2155 = vld [vmem:[#allocation7 + $0xd0] sm:$0x1]
        %v2156 = vld [vmem:[#allocation7 + $0xd8] sm:$0x1]
        %v2157 = vunpack.c.l.bf16 %v2065
        %v2158 = vunpack.c.l.bf16 %v2066
        %v2159 = vunpack.c.h.bf16 %v2065
        %v2160 = vunpack.c.h.bf16 %v2066
        %v2161 = vunpack.c.l.bf16 %v2067
        %v2162 = vunpack.c.l.bf16 %v2068
        %v2163 = vunpack.c.h.bf16 %v2067
        %v2164 = vunpack.c.h.bf16 %v2068
        %v2165 = vunpack.c.l.bf16 %v2069
        %v2166 = vunpack.c.l.bf16 %v2070
        %v2167 = vunpack.c.h.bf16 %v2069
        %v2168 = vunpack.c.h.bf16 %v2070
        %v2169 = vunpack.c.l.bf16 %v2071
        %v2170 = vunpack.c.l.bf16 %v2072
        %v2171 = vunpack.c.h.bf16 %v2071
        %v2172 = vunpack.c.h.bf16 %v2072
        %v2173 = vunpack.c.l.bf16 %v2073
        %v2174 = vunpack.c.l.bf16 %v2074
        %v2175 = vunpack.c.h.bf16 %v2073
        %v2176 = vunpack.c.h.bf16 %v2074
        %v2177 = vunpack.c.l.bf16 %v2075
        %v2178 = vunpack.c.l.bf16 %v2076
        %v2179 = vunpack.c.h.bf16 %v2075
        %v2180 = vunpack.c.h.bf16 %v2076
        %v2181 = vunpack.c.l.bf16 %v2077
        %v2182 = vunpack.c.l.bf16 %v2078
        %v2183 = vunpack.c.h.bf16 %v2077
        %v2184 = vunpack.c.h.bf16 %v2078
        %v2185 = vunpack.c.l.bf16 %v2079
        %v2186 = vunpack.c.l.bf16 %v2080
        %v2187 = vunpack.c.h.bf16 %v2079
        %v2188 = vunpack.c.h.bf16 %v2080
        %v2189 = vunpack.c.l.bf16 %v2081
        %v2190 = vunpack.c.l.bf16 %v2082
        %v2191 = vunpack.c.h.bf16 %v2081
        %v2192 = vunpack.c.h.bf16 %v2082
        %v2193 = vunpack.c.l.bf16 %v2083
        %v2194 = vunpack.c.l.bf16 %v2084
        %v2195 = vunpack.c.h.bf16 %v2083
        %v2196 = vunpack.c.h.bf16 %v2084
        %v2197 = vunpack.c.l.bf16 %v2085
        %v2198 = vunpack.c.l.bf16 %v2086
        %v2199 = vunpack.c.h.bf16 %v2085
        %v2200 = vunpack.c.h.bf16 %v2086
        %v2201 = vunpack.c.l.bf16 %v2087
        %v2202 = vunpack.c.l.bf16 %v2088
        %v2203 = vunpack.c.h.bf16 %v2087
        %v2204 = vunpack.c.h.bf16 %v2088
        %v2205 = vunpack.c.l.bf16 %v2089
        %v2206 = vunpack.c.l.bf16 %v2090
        %v2207 = vunpack.c.h.bf16 %v2089
        %v2208 = vunpack.c.h.bf16 %v2090
        %v2209 = vunpack.c.l.bf16 %v2091
        %v2210 = vunpack.c.l.bf16 %v2092
        %v2211 = vunpack.c.h.bf16 %v2091
        %v2212 = vunpack.c.h.bf16 %v2092
        %v2213 = vunpack.c.l.bf16 %v2093
        %v2214 = vunpack.c.l.bf16 %v2094
        %v2215 = vunpack.c.h.bf16 %v2093
        %v2216 = vunpack.c.h.bf16 %v2094
        %v2217 = vunpack.c.l.bf16 %v2095
        %v2218 = vunpack.c.l.bf16 %v2096
        %v2219 = vunpack.c.h.bf16 %v2095
        %v2220 = vunpack.c.h.bf16 %v2096
        %v2221 = vunpack.c.l.bf16 %v2097
        %v2222 = vunpack.c.l.bf16 %v2098
        %v2223 = vunpack.c.h.bf16 %v2097
        %v2224 = vunpack.c.h.bf16 %v2098
        %v2225 = vunpack.c.l.bf16 %v2099
        %v2226 = vunpack.c.l.bf16 %v2100
        %v2227 = vunpack.c.h.bf16 %v2099
        %v2228 = vunpack.c.h.bf16 %v2100
        %v2229 = vunpack.c.l.bf16 %v2101
        %v2230 = vunpack.c.l.bf16 %v2102
        %v2231 = vunpack.c.h.bf16 %v2101
        %v2232 = vunpack.c.h.bf16 %v2102
        %v2233 = vunpack.c.l.bf16 %v2103
        %v2234 = vunpack.c.l.bf16 %v2104
        %v2235 = vunpack.c.h.bf16 %v2103
        %v2236 = vunpack.c.h.bf16 %v2104
        %v2237 = vunpack.c.l.bf16 %v2105
        %v2238 = vunpack.c.l.bf16 %v2106
        %v2239 = vunpack.c.h.bf16 %v2105
        %v2240 = vunpack.c.h.bf16 %v2106
        %v2241 = vunpack.c.l.bf16 %v2107
        %v2242 = vunpack.c.l.bf16 %v2108
        %v2243 = vunpack.c.h.bf16 %v2107
        %v2244 = vunpack.c.h.bf16 %v2108
        %v2245 = vunpack.c.l.bf16 %v2109
        %v2246 = vunpack.c.l.bf16 %v2110
        %v2247 = vunpack.c.h.bf16 %v2109
        %v2248 = vunpack.c.h.bf16 %v2110
        %v2249 = vunpack.c.l.bf16 %v2111
        %v2250 = vunpack.c.l.bf16 %v2112
        %v2251 = vunpack.c.h.bf16 %v2111
        %v2252 = vunpack.c.h.bf16 %v2112
        %v2253 = vunpack.c.l.bf16 %v2113
        %v2254 = vunpack.c.l.bf16 %v2114
        %v2255 = vunpack.c.h.bf16 %v2113
        %v2256 = vunpack.c.h.bf16 %v2114
        %v2257 = vunpack.c.l.bf16 %v2115
        %v2258 = vunpack.c.l.bf16 %v2116
        %v2259 = vunpack.c.h.bf16 %v2115
        %v2260 = vunpack.c.h.bf16 %v2116
        %v2261 = vunpack.c.l.bf16 %v2117
        %v2262 = vunpack.c.l.bf16 %v2118
        %v2263 = vunpack.c.h.bf16 %v2117
        %v2264 = vunpack.c.h.bf16 %v2118
        %v2265 = vunpack.c.l.bf16 %v2119
        %v2266 = vunpack.c.l.bf16 %v2120
        %v2267 = vunpack.c.h.bf16 %v2119
        %v2268 = vunpack.c.h.bf16 %v2120
        %v2269 = vunpack.c.l.bf16 %v2121
        %v2270 = vunpack.c.l.bf16 %v2122
        %v2271 = vunpack.c.h.bf16 %v2121
        %v2272 = vunpack.c.h.bf16 %v2122
        %v2273 = vunpack.c.l.bf16 %v2123
        %v2274 = vunpack.c.l.bf16 %v2124
        %v2275 = vunpack.c.h.bf16 %v2123
        %v2276 = vunpack.c.h.bf16 %v2124
        %v2277 = vunpack.c.l.bf16 %v2125
        %v2278 = vunpack.c.l.bf16 %v2126
        %v2279 = vunpack.c.h.bf16 %v2125
        %v2280 = vunpack.c.h.bf16 %v2126
        %v2281 = vunpack.c.l.bf16 %v2127
        %v2282 = vunpack.c.l.bf16 %v2128
        %v2283 = vunpack.c.h.bf16 %v2127
        %v2284 = vunpack.c.h.bf16 %v2128
        %2285 = vmatprep.subr.mxu0 %v2188
        %2286 = vmatpush1.msra.mxu0 %v2187
        %2287 = vmatprep.subr.mxu0 %v2186
        %2288 = vmatpush1.msra.mxu0 %v2185
        %2289 = vmatprep.subr.mxu0 %v2184
        %2290 = vmatpush1.msra.mxu0 %v2183
        %2291 = vmatprep.subr.mxu0 %v2182
        %2292 = vmatpush1.msra.mxu0 %v2181
        %2293 = vmatprep.subr.mxu0 %v2180
        %2294 = vmatpush1.msra.mxu0 %v2179
        %2295 = vmatprep.subr.mxu0 %v2178
        %2296 = vmatpush1.msra.mxu0 %v2177
        %2297 = vmatprep.subr.mxu0 %v2176
        %2298 = vmatpush1.msra.mxu0 %v2175
        %2299 = vmatprep.subr.mxu0 %v2174
        %2300 = vmatpush1.msra.mxu0 %v2173
        %2301 = vmatprep.subr.mxu0 %v2172
        %2302 = vmatpush1.msra.mxu0 %v2171
        %2303 = vmatprep.subr.mxu0 %v2170
        %2304 = vmatpush1.msra.mxu0 %v2169
        %2305 = vmatprep.subr.mxu0 %v2168
        %2306 = vmatpush1.msra.mxu0 %v2167
        %2307 = vmatprep.subr.mxu0 %v2166
        %2308 = vmatpush1.msra.mxu0 %v2165
        %2309 = vmatprep.subr.mxu0 %v2164
        %2310 = vmatpush1.msra.mxu0 %v2163
        %2311 = vmatprep.subr.mxu0 %v2162
        %2312 = vmatpush1.msra.mxu0 %v2161
        %2313 = vmatprep.subr.mxu0 %v2160
        %2314 = vmatpush1.msra.mxu0 %v2159
        %2315 = vmatprep.subr.mxu0 %v2158
        %2316 = vmatpush1.msra.mxu0 %v2157
        %2317 = vmatprep.subr.mxu0 %v2220
        %2318 = vmatpush2.msra.mxu0 %v2219
        %2319 = vmatprep.subr.mxu0 %v2218
        %2320 = vmatpush2.msra.mxu0 %v2217
        %2321 = vmatprep.subr.mxu0 %v2216
        %2322 = vmatpush2.msra.mxu0 %v2215
        %2323 = vmatprep.subr.mxu0 %v2214
        %2324 = vmatpush2.msra.mxu0 %v2213
        %2325 = vmatprep.subr.mxu0 %v2212
        %2326 = vmatpush2.msra.mxu0 %v2211
        %2327 = vmatprep.subr.mxu0 %v2210
        %2328 = vmatpush2.msra.mxu0 %v2209
        %2329 = vmatprep.subr.mxu0 %v2208
        %2330 = vmatpush2.msra.mxu0 %v2207
        %2331 = vmatprep.subr.mxu0 %v2206
        %2332 = vmatpush2.msra.mxu0 %v2205
        %2333 = vmatprep.subr.mxu0 %v2204
        %2334 = vmatpush2.msra.mxu0 %v2203
        %2335 = vmatprep.subr.mxu0 %v2202
        %2336 = vmatpush2.msra.mxu0 %v2201
        %2337 = vmatprep.subr.mxu0 %v2200
        %2338 = vmatpush2.msra.mxu0 %v2199
        %2339 = vmatprep.subr.mxu0 %v2198
        %2340 = vmatpush2.msra.mxu0 %v2197
        %2341 = vmatprep.subr.mxu0 %v2196
        %2342 = vmatpush2.msra.mxu0 %v2195
        %2343 = vmatprep.subr.mxu0 %v2194
        %2344 = vmatpush2.msra.mxu0 %v2193
        %2345 = vmatprep.subr.mxu0 %v2192
        %2346 = vmatpush2.msra.mxu0 %v2191
        %2347 = vmatprep.subr.mxu0 %v2190
        %2348 = vmatpush2.msra.mxu0 %v2189
        %2349 = vmatprep.mubr.f32.mxu0 %v2130
        %2350 = vmatmul.mubr.f32.gmra.mxu0 %v2129
        %v2351 = vpop.f32.mrf.mxu0
        %v2352 = vadd.f32 0.0, %v2351
        %v2353 = vpop.f32.mrf.mxu0
        %v2354 = vadd.f32 0.0, %v2353
        %2355 = vmatprep.mubr.f32.mxu0 %v2134
        %2356 = vmatmul.mubr.f32.gmra.mxu0 %v2133
        %v2357 = vpop.f32.mrf.mxu0
        %v2358 = vadd.f32 0.0, %v2357
        %v2359 = vpop.f32.mrf.mxu0
        %v2360 = vadd.f32 0.0, %v2359
        %2361 = vmatprep.mubr.f32.mxu0 %v2138
        %2362 = vmatmul.mubr.f32.gmra.mxu0 %v2137
        %v2363 = vpop.f32.mrf.mxu0
        %v2364 = vadd.f32 0.0, %v2363
        %v2365 = vpop.f32.mrf.mxu0
        %v2366 = vadd.f32 0.0, %v2365
        %2367 = vmatprep.mubr.f32.mxu0 %v2142
        %2368 = vmatmul.mubr.f32.gmra.mxu0 %v2141
        %v2369 = vpop.f32.mrf.mxu0
        %v2370 = vadd.f32 0.0, %v2369
        %v2371 = vpop.f32.mrf.mxu0
        %v2372 = vadd.f32 0.0, %v2371
        %2373 = vmatprep.mubr.f32.mxu0 %v2146
        %2374 = vmatmul.mubr.f32.gmra.mxu0 %v2145
        %v2375 = vpop.f32.mrf.mxu0
        %v2376 = vadd.f32 0.0, %v2375
        %v2377 = vpop.f32.mrf.mxu0
        %v2378 = vadd.f32 0.0, %v2377
        %2379 = vmatprep.mubr.f32.mxu0 %v2150
        %2380 = vmatmul.mubr.f32.gmra.mxu0 %v2149
        %v2381 = vpop.f32.mrf.mxu0
        %v2382 = vadd.f32 0.0, %v2381
        %v2383 = vpop.f32.mrf.mxu0
        %v2384 = vadd.f32 0.0, %v2383
        %2385 = vmatprep.mubr.f32.mxu0 %v2154
        %2386 = vmatmul.mubr.f32.gmra.mxu0 %v2153
        %v2387 = vpop.f32.mrf.mxu0
        %v2388 = vadd.f32 0.0, %v2387
        %v2389 = vpop.f32.mrf.mxu0
        %v2390 = vadd.f32 0.0, %v2389
        %2391 = vdwg.mxu0
        %2392 = vmatprep.subr.mxu0 %v2252
        %2393 = vmatpush1.msra.mxu0 %v2251
        %2394 = vmatprep.subr.mxu0 %v2250
        %2395 = vmatpush1.msra.mxu0 %v2249
        %2396 = vmatprep.subr.mxu0 %v2248
        %2397 = vmatpush1.msra.mxu0 %v2247
        %2398 = vmatprep.subr.mxu0 %v2246
        %2399 = vmatpush1.msra.mxu0 %v2245
        %2400 = vmatprep.subr.mxu0 %v2244
        %2401 = vmatpush1.msra.mxu0 %v2243
        %2402 = vmatprep.subr.mxu0 %v2242
        %2403 = vmatpush1.msra.mxu0 %v2241
        %2404 = vmatprep.subr.mxu0 %v2240
        %2405 = vmatpush1.msra.mxu0 %v2239
        %2406 = vmatprep.subr.mxu0 %v2238
        %2407 = vmatpush1.msra.mxu0 %v2237
        %2408 = vmatprep.subr.mxu0 %v2236
        %2409 = vmatpush1.msra.mxu0 %v2235
        %2410 = vmatprep.subr.mxu0 %v2234
        %2411 = vmatpush1.msra.mxu0 %v2233
        %2412 = vmatprep.subr.mxu0 %v2232
        %2413 = vmatpush1.msra.mxu0 %v2231
        %2414 = vmatprep.subr.mxu0 %v2230
        %2415 = vmatpush1.msra.mxu0 %v2229
        %2416 = vmatprep.subr.mxu0 %v2228
        %2417 = vmatpush1.msra.mxu0 %v2227
        %2418 = vmatprep.subr.mxu0 %v2226
        %2419 = vmatpush1.msra.mxu0 %v2225
        %2420 = vmatprep.subr.mxu0 %v2224
        %2421 = vmatpush1.msra.mxu0 %v2223
        %2422 = vmatprep.subr.mxu0 %v2222
        %2423 = vmatpush1.msra.mxu0 %v2221
        %2424 = vmatprep.subr.mxu0 %v2284
        %2425 = vmatpush2.msra.mxu0 %v2283
        %2426 = vmatprep.subr.mxu0 %v2282
        %2427 = vmatpush2.msra.mxu0 %v2281
        %2428 = vmatprep.subr.mxu0 %v2280
        %2429 = vmatpush2.msra.mxu0 %v2279
        %2430 = vmatprep.subr.mxu0 %v2278
        %2431 = vmatpush2.msra.mxu0 %v2277
        %2432 = vmatprep.subr.mxu0 %v2276
        %2433 = vmatpush2.msra.mxu0 %v2275
        %2434 = vmatprep.subr.mxu0 %v2274
        %2435 = vmatpush2.msra.mxu0 %v2273
        %2436 = vmatprep.subr.mxu0 %v2272
        %2437 = vmatpush2.msra.mxu0 %v2271
        %2438 = vmatprep.subr.mxu0 %v2270
        %2439 = vmatpush2.msra.mxu0 %v2269
        %2440 = vmatprep.subr.mxu0 %v2268
        %2441 = vmatpush2.msra.mxu0 %v2267
        %2442 = vmatprep.subr.mxu0 %v2266
        %2443 = vmatpush2.msra.mxu0 %v2265
        %2444 = vmatprep.subr.mxu0 %v2264
        %2445 = vmatpush2.msra.mxu0 %v2263
        %2446 = vmatprep.subr.mxu0 %v2262
        %2447 = vmatpush2.msra.mxu0 %v2261
        %2448 = vmatprep.subr.mxu0 %v2260
        %2449 = vmatpush2.msra.mxu0 %v2259
        %2450 = vmatprep.subr.mxu0 %v2258
        %2451 = vmatpush2.msra.mxu0 %v2257
        %2452 = vmatprep.subr.mxu0 %v2256
        %2453 = vmatpush2.msra.mxu0 %v2255
        %2454 = vmatprep.subr.mxu0 %v2254
        %2455 = vmatpush2.msra.mxu0 %v2253
        %2456 = vmatprep.mubr.f32.mxu0 %v2132
        %2457 = vmatmul.mubr.f32.gmra.mxu0 %v2131
        %v2458 = vpop.f32.mrf.mxu0
        %v2459 = vadd.f32 %v2352, %v2458
        %v2460 = vpop.f32.mrf.mxu0
        %v2461 = vadd.f32 %v2354, %v2460
        %2462 = vmatprep.mubr.f32.mxu0 %v2136
        %2463 = vmatmul.mubr.f32.gmra.mxu0 %v2135
        %v2464 = vpop.f32.mrf.mxu0
        %v2465 = vadd.f32 %v2358, %v2464
        %v2466 = vpop.f32.mrf.mxu0
        %v2467 = vadd.f32 %v2360, %v2466
        %2468 = vmatprep.mubr.f32.mxu0 %v2140
        %2469 = vmatmul.mubr.f32.gmra.mxu0 %v2139
        %v2470 = vpop.f32.mrf.mxu0
        %v2471 = vadd.f32 %v2364, %v2470
        %v2472 = vpop.f32.mrf.mxu0
        %v2473 = vadd.f32 %v2366, %v2472
        %2474 = vmatprep.mubr.f32.mxu0 %v2144
        %2475 = vmatmul.mubr.f32.gmra.mxu0 %v2143
        %v2476 = vpop.f32.mrf.mxu0
        %v2477 = vadd.f32 %v2370, %v2476
        %v2478 = vpop.f32.mrf.mxu0
        %v2479 = vadd.f32 %v2372, %v2478
        %2480 = vmatprep.mubr.f32.mxu0 %v2148
        %2481 = vmatmul.mubr.f32.gmra.mxu0 %v2147
        %v2482 = vpop.f32.mrf.mxu0
        %v2483 = vadd.f32 %v2376, %v2482
        %v2484 = vpop.f32.mrf.mxu0
        %v2485 = vadd.f32 %v2378, %v2484
        %2486 = vmatprep.mubr.f32.mxu0 %v2152
        %2487 = vmatmul.mubr.f32.gmra.mxu0 %v2151
        %v2488 = vpop.f32.mrf.mxu0
        %v2489 = vadd.f32 %v2382, %v2488
        %v2490 = vpop.f32.mrf.mxu0
        %v2491 = vadd.f32 %v2384, %v2490
        %2492 = vmatprep.mubr.f32.mxu0 %v2156
        %2493 = vmatmul.mubr.f32.gmra.mxu0 %v2155
        %v2494 = vpop.f32.mrf.mxu0
        %v2495 = vadd.f32 %v2388, %v2494
        %v2496 = vpop.f32.mrf.mxu0
        %v2497 = vadd.f32 %v2390, %v2496
        %2498 = vdwg.mxu0
        %v2499 = vld [vmem:[#allocation9] sm:$0xff]
        %v2500 = vld [vmem:[#allocation9 + $0x8] sm:$0xff]
        %v2501 = vld [vmem:[#allocation9 + $0x10] sm:$0xff]
        %v2502 = vld [vmem:[#allocation9 + $0x18] sm:$0xff]
        %v2503 = vld [vmem:[#allocation9 + $0x20] sm:$0xff]
        %v2504 = vld [vmem:[#allocation9 + $0x28] sm:$0xff]
        %v2505 = vld [vmem:[#allocation9 + $0x30] sm:$0xff]
        %v2506 = vld [vmem:[#allocation9 + $0x38] sm:$0xff]
        %v2507 = vld [vmem:[#allocation9 + $0x40] sm:$0xff]
        %v2508 = vld [vmem:[#allocation9 + $0x48] sm:$0xff]
        %v2509 = vld [vmem:[#allocation9 + $0x50] sm:$0xff]
        %v2510 = vld [vmem:[#allocation9 + $0x58] sm:$0xff]
        %v2511 = vld [vmem:[#allocation9 + $0x60] sm:$0x1]
        %v2512 = vld [vmem:[#allocation9 + $0x68] sm:$0x1]
        %v2513 = vlaneseq
        %v2514 = vshrl.u32 %v2513, 7
        %v2515 = vsub.s32 0, %v2514
        %v2516 = vrot.slane %v2459, %v2515
        %v2517 = vlaneseq
        %v2518 = vshrl.u32 %v2517, 7
        %v2519 = vsub.s32 0, %v2518
        %v2520 = vrot.slane %v2461, %v2519
        %v2521 = vmul.f32 %v2516, %v2499
        %v2522 = vmul.f32 %v2520, %v2500
        %v2523 = vmul.f32 %v2516, %v2501
        %v2524 = vmul.f32 %v2520, %v2502
        %v2525 = vmul.f32 %v2516, %v2503
        %v2526 = vmul.f32 %v2520, %v2504
        %v2527 = vmul.f32 %v2516, %v2505
        %v2528 = vmul.f32 %v2520, %v2506
        %v2529 = vmul.f32 %v2516, %v2507
        %v2530 = vmul.f32 %v2520, %v2508
        %v2531 = vmul.f32 %v2516, %v2509
        %v2532 = vmul.f32 %v2520, %v2510
        %v2533 = vmul.f32 %v2516, %v2511
        %v2534 = vmul.f32 %v2520, %v2512
        %v2535 = vadd.f32 %v2521, 0.0
        %v2536 = vadd.f32 %v2522, 0.0
        %v2537 = vadd.f32 %v2523, 0.0
        %v2538 = vadd.f32 %v2524, 0.0
        %v2539 = vadd.f32 %v2525, 0.0
        %v2540 = vadd.f32 %v2526, 0.0
        %v2541 = vadd.f32 %v2527, 0.0
        %v2542 = vadd.f32 %v2528, 0.0
        %v2543 = vadd.f32 %v2529, 0.0
        %v2544 = vadd.f32 %v2530, 0.0
        %v2545 = vadd.f32 %v2531, 0.0
        %v2546 = vadd.f32 %v2532, 0.0
        %v2547 = vadd.f32 %v2533, 0.0
        %v2548 = vadd.f32 %v2534, 0.0
        %s2549 = scalar_lea.vmem [#allocation9], 112
        %v2550 = vld [vmem:[%s2549] sm:$0xff]
        %v2551 = vld [vmem:[%s2549 + $0x8] sm:$0xff]
        %v2552 = vld [vmem:[%s2549 + $0x10] sm:$0xff]
        %v2553 = vld [vmem:[%s2549 + $0x18] sm:$0xff]
        %v2554 = vld [vmem:[%s2549 + $0x20] sm:$0xff]
        %v2555 = vld [vmem:[%s2549 + $0x28] sm:$0xff]
        %v2556 = vld [vmem:[%s2549 + $0x30] sm:$0xff]
        %v2557 = vld [vmem:[%s2549 + $0x38] sm:$0xff]
        %v2558 = vld [vmem:[%s2549 + $0x40] sm:$0xff]
        %v2559 = vld [vmem:[%s2549 + $0x48] sm:$0xff]
        %v2560 = vld [vmem:[%s2549 + $0x50] sm:$0xff]
        %v2561 = vld [vmem:[%s2549 + $0x58] sm:$0xff]
        %v2562 = vld [vmem:[%s2549 + $0x60] sm:$0x1]
        %v2563 = vld [vmem:[%s2549 + $0x68] sm:$0x1]
        %v2564 = vlaneseq
        %v2565 = vshrl.u32 %v2564, 7
        %v2566 = vsub.s32 1, %v2565
        %v2567 = vrot.slane %v2459, %v2566
        %v2568 = vlaneseq
        %v2569 = vshrl.u32 %v2568, 7
        %v2570 = vsub.s32 1, %v2569
        %v2571 = vrot.slane %v2461, %v2570
        %v2572 = vmul.f32 %v2567, %v2550
        %v2573 = vmul.f32 %v2571, %v2551
        %v2574 = vmul.f32 %v2567, %v2552
        %v2575 = vmul.f32 %v2571, %v2553
        %v2576 = vmul.f32 %v2567, %v2554
        %v2577 = vmul.f32 %v2571, %v2555
        %v2578 = vmul.f32 %v2567, %v2556
        %v2579 = vmul.f32 %v2571, %v2557
        %v2580 = vmul.f32 %v2567, %v2558
        %v2581 = vmul.f32 %v2571, %v2559
        %v2582 = vmul.f32 %v2567, %v2560
        %v2583 = vmul.f32 %v2571, %v2561
        %v2584 = vmul.f32 %v2567, %v2562
        %v2585 = vmul.f32 %v2571, %v2563
        %v2586 = vadd.f32 %v2535, %v2572
        %v2587 = vadd.f32 %v2536, %v2573
        %v2588 = vadd.f32 %v2537, %v2574
        %v2589 = vadd.f32 %v2538, %v2575
        %v2590 = vadd.f32 %v2539, %v2576
        %v2591 = vadd.f32 %v2540, %v2577
        %v2592 = vadd.f32 %v2541, %v2578
        %v2593 = vadd.f32 %v2542, %v2579
        %v2594 = vadd.f32 %v2543, %v2580
        %v2595 = vadd.f32 %v2544, %v2581
        %v2596 = vadd.f32 %v2545, %v2582
        %v2597 = vadd.f32 %v2546, %v2583
        %v2598 = vadd.f32 %v2547, %v2584
        %v2599 = vadd.f32 %v2548, %v2585
        %s2600 = scalar_lea.vmem [#allocation9], 224
        %v2601 = vld [vmem:[%s2600] sm:$0xff]
        %v2602 = vld [vmem:[%s2600 + $0x8] sm:$0xff]
        %v2603 = vld [vmem:[%s2600 + $0x10] sm:$0xff]
        %v2604 = vld [vmem:[%s2600 + $0x18] sm:$0xff]
        %v2605 = vld [vmem:[%s2600 + $0x20] sm:$0xff]
        %v2606 = vld [vmem:[%s2600 + $0x28] sm:$0xff]
        %v2607 = vld [vmem:[%s2600 + $0x30] sm:$0xff]
        %v2608 = vld [vmem:[%s2600 + $0x38] sm:$0xff]
        %v2609 = vld [vmem:[%s2600 + $0x40] sm:$0xff]
        %v2610 = vld [vmem:[%s2600 + $0x48] sm:$0xff]
        %v2611 = vld [vmem:[%s2600 + $0x50] sm:$0xff]
        %v2612 = vld [vmem:[%s2600 + $0x58] sm:$0xff]
        %v2613 = vld [vmem:[%s2600 + $0x60] sm:$0x1]
        %v2614 = vld [vmem:[%s2600 + $0x68] sm:$0x1]
        %v2615 = vlaneseq
        %v2616 = vshrl.u32 %v2615, 7
        %v2617 = vsub.s32 2, %v2616
        %v2618 = vrot.slane %v2459, %v2617
        %v2619 = vlaneseq
        %v2620 = vshrl.u32 %v2619, 7
        %v2621 = vsub.s32 2, %v2620
        %v2622 = vrot.slane %v2461, %v2621
        %v2623 = vmul.f32 %v2618, %v2601
        %v2624 = vmul.f32 %v2622, %v2602
        %v2625 = vmul.f32 %v2618, %v2603
        %v2626 = vmul.f32 %v2622, %v2604
        %v2627 = vmul.f32 %v2618, %v2605
        %v2628 = vmul.f32 %v2622, %v2606
        %v2629 = vmul.f32 %v2618, %v2607
        %v2630 = vmul.f32 %v2622, %v2608
        %v2631 = vmul.f32 %v2618, %v2609
        %v2632 = vmul.f32 %v2622, %v2610
        %v2633 = vmul.f32 %v2618, %v2611
        %v2634 = vmul.f32 %v2622, %v2612
        %v2635 = vmul.f32 %v2618, %v2613
        %v2636 = vmul.f32 %v2622, %v2614
        %v2637 = vadd.f32 %v2586, %v2623
        %v2638 = vadd.f32 %v2587, %v2624
        %v2639 = vadd.f32 %v2588, %v2625
        %v2640 = vadd.f32 %v2589, %v2626
        %v2641 = vadd.f32 %v2590, %v2627
        %v2642 = vadd.f32 %v2591, %v2628
        %v2643 = vadd.f32 %v2592, %v2629
        %v2644 = vadd.f32 %v2593, %v2630
        %v2645 = vadd.f32 %v2594, %v2631
        %v2646 = vadd.f32 %v2595, %v2632
        %v2647 = vadd.f32 %v2596, %v2633
        %v2648 = vadd.f32 %v2597, %v2634
        %v2649 = vadd.f32 %v2598, %v2635
        %v2650 = vadd.f32 %v2599, %v2636
        %s2651 = scalar_lea.vmem [#allocation9], 336
        %v2652 = vld [vmem:[%s2651] sm:$0xff]
        %v2653 = vld [vmem:[%s2651 + $0x8] sm:$0xff]
        %v2654 = vld [vmem:[%s2651 + $0x10] sm:$0xff]
        %v2655 = vld [vmem:[%s2651 + $0x18] sm:$0xff]
        %v2656 = vld [vmem:[%s2651 + $0x20] sm:$0xff]
        %v2657 = vld [vmem:[%s2651 + $0x28] sm:$0xff]
        %v2658 = vld [vmem:[%s2651 + $0x30] sm:$0xff]
        %v2659 = vld [vmem:[%s2651 + $0x38] sm:$0xff]
        %v2660 = vld [vmem:[%s2651 + $0x40] sm:$0xff]
        %v2661 = vld [vmem:[%s2651 + $0x48] sm:$0xff]
        %v2662 = vld [vmem:[%s2651 + $0x50] sm:$0xff]
        %v2663 = vld [vmem:[%s2651 + $0x58] sm:$0xff]
        %v2664 = vld [vmem:[%s2651 + $0x60] sm:$0x1]
        %v2665 = vld [vmem:[%s2651 + $0x68] sm:$0x1]
        %v2666 = vlaneseq
        %v2667 = vshrl.u32 %v2666, 7
        %v2668 = vsub.s32 3, %v2667
        %v2669 = vrot.slane %v2459, %v2668
        %v2670 = vlaneseq
        %v2671 = vshrl.u32 %v2670, 7
        %v2672 = vsub.s32 3, %v2671
        %v2673 = vrot.slane %v2461, %v2672
        %v2674 = vmul.f32 %v2669, %v2652
        %v2675 = vmul.f32 %v2673, %v2653
        %v2676 = vmul.f32 %v2669, %v2654
        %v2677 = vmul.f32 %v2673, %v2655
        %v2678 = vmul.f32 %v2669, %v2656
        %v2679 = vmul.f32 %v2673, %v2657
        %v2680 = vmul.f32 %v2669, %v2658
        %v2681 = vmul.f32 %v2673, %v2659
        %v2682 = vmul.f32 %v2669, %v2660
        %v2683 = vmul.f32 %v2673, %v2661
        %v2684 = vmul.f32 %v2669, %v2662
        %v2685 = vmul.f32 %v2673, %v2663
        %v2686 = vmul.f32 %v2669, %v2664
        %v2687 = vmul.f32 %v2673, %v2665
        %v2688 = vadd.f32 %v2637, %v2674
        %v2689 = vadd.f32 %v2638, %v2675
        %v2690 = vadd.f32 %v2639, %v2676
        %v2691 = vadd.f32 %v2640, %v2677
        %v2692 = vadd.f32 %v2641, %v2678
        %v2693 = vadd.f32 %v2642, %v2679
        %v2694 = vadd.f32 %v2643, %v2680
        %v2695 = vadd.f32 %v2644, %v2681
        %v2696 = vadd.f32 %v2645, %v2682
        %v2697 = vadd.f32 %v2646, %v2683
        %v2698 = vadd.f32 %v2647, %v2684
        %v2699 = vadd.f32 %v2648, %v2685
        %v2700 = vadd.f32 %v2649, %v2686
        %v2701 = vadd.f32 %v2650, %v2687
        %s2702 = scalar_lea.vmem [#allocation9], 448
        %v2703 = vld [vmem:[%s2702] sm:$0xff]
        %v2704 = vld [vmem:[%s2702 + $0x8] sm:$0xff]
        %v2705 = vld [vmem:[%s2702 + $0x10] sm:$0xff]
        %v2706 = vld [vmem:[%s2702 + $0x18] sm:$0xff]
        %v2707 = vld [vmem:[%s2702 + $0x20] sm:$0xff]
        %v2708 = vld [vmem:[%s2702 + $0x28] sm:$0xff]
        %v2709 = vld [vmem:[%s2702 + $0x30] sm:$0xff]
        %v2710 = vld [vmem:[%s2702 + $0x38] sm:$0xff]
        %v2711 = vld [vmem:[%s2702 + $0x40] sm:$0xff]
        %v2712 = vld [vmem:[%s2702 + $0x48] sm:$0xff]
        %v2713 = vld [vmem:[%s2702 + $0x50] sm:$0xff]
        %v2714 = vld [vmem:[%s2702 + $0x58] sm:$0xff]
        %v2715 = vld [vmem:[%s2702 + $0x60] sm:$0x1]
        %v2716 = vld [vmem:[%s2702 + $0x68] sm:$0x1]
        %v2717 = vlaneseq
        %v2718 = vshrl.u32 %v2717, 7
        %v2719 = vsub.s32 4, %v2718
        %v2720 = vrot.slane %v2459, %v2719
        %v2721 = vlaneseq
        %v2722 = vshrl.u32 %v2721, 7
        %v2723 = vsub.s32 4, %v2722
        %v2724 = vrot.slane %v2461, %v2723
        %v2725 = vmul.f32 %v2720, %v2703
        %v2726 = vmul.f32 %v2724, %v2704
        %v2727 = vmul.f32 %v2720, %v2705
        %v2728 = vmul.f32 %v2724, %v2706
        %v2729 = vmul.f32 %v2720, %v2707
        %v2730 = vmul.f32 %v2724, %v2708
        %v2731 = vmul.f32 %v2720, %v2709
        %v2732 = vmul.f32 %v2724, %v2710
        %v2733 = vmul.f32 %v2720, %v2711
        %v2734 = vmul.f32 %v2724, %v2712
        %v2735 = vmul.f32 %v2720, %v2713
        %v2736 = vmul.f32 %v2724, %v2714
        %v2737 = vmul.f32 %v2720, %v2715
        %v2738 = vmul.f32 %v2724, %v2716
        %v2739 = vadd.f32 %v2688, %v2725
        %v2740 = vadd.f32 %v2689, %v2726
        %v2741 = vadd.f32 %v2690, %v2727
        %v2742 = vadd.f32 %v2691, %v2728
        %v2743 = vadd.f32 %v2692, %v2729
        %v2744 = vadd.f32 %v2693, %v2730
        %v2745 = vadd.f32 %v2694, %v2731
        %v2746 = vadd.f32 %v2695, %v2732
        %v2747 = vadd.f32 %v2696, %v2733
        %v2748 = vadd.f32 %v2697, %v2734
        %v2749 = vadd.f32 %v2698, %v2735
        %v2750 = vadd.f32 %v2699, %v2736
        %v2751 = vadd.f32 %v2700, %v2737
        %v2752 = vadd.f32 %v2701, %v2738
        %s2753 = scalar_lea.vmem [#allocation9], 560
        %v2754 = vld [vmem:[%s2753] sm:$0xff]
        %v2755 = vld [vmem:[%s2753 + $0x8] sm:$0xff]
        %v2756 = vld [vmem:[%s2753 + $0x10] sm:$0xff]
        %v2757 = vld [vmem:[%s2753 + $0x18] sm:$0xff]
        %v2758 = vld [vmem:[%s2753 + $0x20] sm:$0xff]
        %v2759 = vld [vmem:[%s2753 + $0x28] sm:$0xff]
        %v2760 = vld [vmem:[%s2753 + $0x30] sm:$0xff]
        %v2761 = vld [vmem:[%s2753 + $0x38] sm:$0xff]
        %v2762 = vld [vmem:[%s2753 + $0x40] sm:$0xff]
        %v2763 = vld [vmem:[%s2753 + $0x48] sm:$0xff]
        %v2764 = vld [vmem:[%s2753 + $0x50] sm:$0xff]
        %v2765 = vld [vmem:[%s2753 + $0x58] sm:$0xff]
        %v2766 = vld [vmem:[%s2753 + $0x60] sm:$0x1]
        %v2767 = vld [vmem:[%s2753 + $0x68] sm:$0x1]
        %v2768 = vlaneseq
        %v2769 = vshrl.u32 %v2768, 7
        %v2770 = vsub.s32 5, %v2769
        %v2771 = vrot.slane %v2459, %v2770
        %v2772 = vlaneseq
        %v2773 = vshrl.u32 %v2772, 7
        %v2774 = vsub.s32 5, %v2773
        %v2775 = vrot.slane %v2461, %v2774
        %v2776 = vmul.f32 %v2771, %v2754
        %v2777 = vmul.f32 %v2775, %v2755
        %v2778 = vmul.f32 %v2771, %v2756
        %v2779 = vmul.f32 %v2775, %v2757
        %v2780 = vmul.f32 %v2771, %v2758
        %v2781 = vmul.f32 %v2775, %v2759
        %v2782 = vmul.f32 %v2771, %v2760
        %v2783 = vmul.f32 %v2775, %v2761
        %v2784 = vmul.f32 %v2771, %v2762
        %v2785 = vmul.f32 %v2775, %v2763
        %v2786 = vmul.f32 %v2771, %v2764
        %v2787 = vmul.f32 %v2775, %v2765
        %v2788 = vmul.f32 %v2771, %v2766
        %v2789 = vmul.f32 %v2775, %v2767
        %v2790 = vadd.f32 %v2739, %v2776
        %v2791 = vadd.f32 %v2740, %v2777
        %v2792 = vadd.f32 %v2741, %v2778
        %v2793 = vadd.f32 %v2742, %v2779
        %v2794 = vadd.f32 %v2743, %v2780
        %v2795 = vadd.f32 %v2744, %v2781
        %v2796 = vadd.f32 %v2745, %v2782
        %v2797 = vadd.f32 %v2746, %v2783
        %v2798 = vadd.f32 %v2747, %v2784
        %v2799 = vadd.f32 %v2748, %v2785
        %v2800 = vadd.f32 %v2749, %v2786
        %v2801 = vadd.f32 %v2750, %v2787
        %v2802 = vadd.f32 %v2751, %v2788
        %v2803 = vadd.f32 %v2752, %v2789
        %s2804 = scalar_lea.vmem [#allocation9], 672
        %v2805 = vld [vmem:[%s2804] sm:$0xff]
        %v2806 = vld [vmem:[%s2804 + $0x8] sm:$0xff]
        %v2807 = vld [vmem:[%s2804 + $0x10] sm:$0xff]
        %v2808 = vld [vmem:[%s2804 + $0x18] sm:$0xff]
        %v2809 = vld [vmem:[%s2804 + $0x20] sm:$0xff]
        %v2810 = vld [vmem:[%s2804 + $0x28] sm:$0xff]
        %v2811 = vld [vmem:[%s2804 + $0x30] sm:$0xff]
        %v2812 = vld [vmem:[%s2804 + $0x38] sm:$0xff]
        %v2813 = vld [vmem:[%s2804 + $0x40] sm:$0xff]
        %v2814 = vld [vmem:[%s2804 + $0x48] sm:$0xff]
        %v2815 = vld [vmem:[%s2804 + $0x50] sm:$0xff]
        %v2816 = vld [vmem:[%s2804 + $0x58] sm:$0xff]
        %v2817 = vld [vmem:[%s2804 + $0x60] sm:$0x1]
        %v2818 = vld [vmem:[%s2804 + $0x68] sm:$0x1]
        %v2819 = vlaneseq
        %v2820 = vshrl.u32 %v2819, 7
        %v2821 = vsub.s32 6, %v2820
        %v2822 = vrot.slane %v2459, %v2821
        %v2823 = vlaneseq
        %v2824 = vshrl.u32 %v2823, 7
        %v2825 = vsub.s32 6, %v2824
        %v2826 = vrot.slane %v2461, %v2825
        %v2827 = vmul.f32 %v2822, %v2805
        %v2828 = vmul.f32 %v2826, %v2806
        %v2829 = vmul.f32 %v2822, %v2807
        %v2830 = vmul.f32 %v2826, %v2808
        %v2831 = vmul.f32 %v2822, %v2809
        %v2832 = vmul.f32 %v2826, %v2810
        %v2833 = vmul.f32 %v2822, %v2811
        %v2834 = vmul.f32 %v2826, %v2812
        %v2835 = vmul.f32 %v2822, %v2813
        %v2836 = vmul.f32 %v2826, %v2814
        %v2837 = vmul.f32 %v2822, %v2815
        %v2838 = vmul.f32 %v2826, %v2816
        %v2839 = vmul.f32 %v2822, %v2817
        %v2840 = vmul.f32 %v2826, %v2818
        %v2841 = vadd.f32 %v2790, %v2827
        %v2842 = vadd.f32 %v2791, %v2828
        %v2843 = vadd.f32 %v2792, %v2829
        %v2844 = vadd.f32 %v2793, %v2830
        %v2845 = vadd.f32 %v2794, %v2831
        %v2846 = vadd.f32 %v2795, %v2832
        %v2847 = vadd.f32 %v2796, %v2833
        %v2848 = vadd.f32 %v2797, %v2834
        %v2849 = vadd.f32 %v2798, %v2835
        %v2850 = vadd.f32 %v2799, %v2836
        %v2851 = vadd.f32 %v2800, %v2837
        %v2852 = vadd.f32 %v2801, %v2838
        %v2853 = vadd.f32 %v2802, %v2839
        %v2854 = vadd.f32 %v2803, %v2840
        %s2855 = scalar_lea.vmem [#allocation9], 784
        %v2856 = vld [vmem:[%s2855] sm:$0xff]
        %v2857 = vld [vmem:[%s2855 + $0x8] sm:$0xff]
        %v2858 = vld [vmem:[%s2855 + $0x10] sm:$0xff]
        %v2859 = vld [vmem:[%s2855 + $0x18] sm:$0xff]
        %v2860 = vld [vmem:[%s2855 + $0x20] sm:$0xff]
        %v2861 = vld [vmem:[%s2855 + $0x28] sm:$0xff]
        %v2862 = vld [vmem:[%s2855 + $0x30] sm:$0xff]
        %v2863 = vld [vmem:[%s2855 + $0x38] sm:$0xff]
        %v2864 = vld [vmem:[%s2855 + $0x40] sm:$0xff]
        %v2865 = vld [vmem:[%s2855 + $0x48] sm:$0xff]
        %v2866 = vld [vmem:[%s2855 + $0x50] sm:$0xff]
        %v2867 = vld [vmem:[%s2855 + $0x58] sm:$0xff]
        %v2868 = vld [vmem:[%s2855 + $0x60] sm:$0x1]
        %v2869 = vld [vmem:[%s2855 + $0x68] sm:$0x1]
        %v2870 = vlaneseq
        %v2871 = vshrl.u32 %v2870, 7
        %v2872 = vsub.s32 7, %v2871
        %v2873 = vrot.slane %v2459, %v2872
        %v2874 = vlaneseq
        %v2875 = vshrl.u32 %v2874, 7
        %v2876 = vsub.s32 7, %v2875
        %v2877 = vrot.slane %v2461, %v2876
        %v2878 = vmul.f32 %v2873, %v2856
        %v2879 = vmul.f32 %v2877, %v2857
        %v2880 = vmul.f32 %v2873, %v2858
        %v2881 = vmul.f32 %v2877, %v2859
        %v2882 = vmul.f32 %v2873, %v2860
        %v2883 = vmul.f32 %v2877, %v2861
        %v2884 = vmul.f32 %v2873, %v2862
        %v2885 = vmul.f32 %v2877, %v2863
        %v2886 = vmul.f32 %v2873, %v2864
        %v2887 = vmul.f32 %v2877, %v2865
        %v2888 = vmul.f32 %v2873, %v2866
        %v2889 = vmul.f32 %v2877, %v2867
        %v2890 = vmul.f32 %v2873, %v2868
        %v2891 = vmul.f32 %v2877, %v2869
        %v2892 = vadd.f32 %v2841, %v2878
        %v2893 = vadd.f32 %v2842, %v2879
        %v2894 = vadd.f32 %v2843, %v2880
        %v2895 = vadd.f32 %v2844, %v2881
        %v2896 = vadd.f32 %v2845, %v2882
        %v2897 = vadd.f32 %v2846, %v2883
        %v2898 = vadd.f32 %v2847, %v2884
        %v2899 = vadd.f32 %v2848, %v2885
        %v2900 = vadd.f32 %v2849, %v2886
        %v2901 = vadd.f32 %v2850, %v2887
        %v2902 = vadd.f32 %v2851, %v2888
        %v2903 = vadd.f32 %v2852, %v2889
        %v2904 = vadd.f32 %v2853, %v2890
        %v2905 = vadd.f32 %v2854, %v2891
        %s2906 = scalar_lea.vmem [#allocation9], 896
        %v2907 = vld [vmem:[%s2906] sm:$0xff]
        %v2908 = vld [vmem:[%s2906 + $0x8] sm:$0xff]
        %v2909 = vld [vmem:[%s2906 + $0x10] sm:$0xff]
        %v2910 = vld [vmem:[%s2906 + $0x18] sm:$0xff]
        %v2911 = vld [vmem:[%s2906 + $0x20] sm:$0xff]
        %v2912 = vld [vmem:[%s2906 + $0x28] sm:$0xff]
        %v2913 = vld [vmem:[%s2906 + $0x30] sm:$0xff]
        %v2914 = vld [vmem:[%s2906 + $0x38] sm:$0xff]
        %v2915 = vld [vmem:[%s2906 + $0x40] sm:$0xff]
        %v2916 = vld [vmem:[%s2906 + $0x48] sm:$0xff]
        %v2917 = vld [vmem:[%s2906 + $0x50] sm:$0xff]
        %v2918 = vld [vmem:[%s2906 + $0x58] sm:$0xff]
        %v2919 = vld [vmem:[%s2906 + $0x60] sm:$0x1]
        %v2920 = vld [vmem:[%s2906 + $0x68] sm:$0x1]
        %v2921 = vlaneseq
        %v2922 = vshrl.u32 %v2921, 7
        %v2923 = vsub.s32 0, %v2922
        %v2924 = vrot.slane %v2465, %v2923
        %v2925 = vlaneseq
        %v2926 = vshrl.u32 %v2925, 7
        %v2927 = vsub.s32 0, %v2926
        %v2928 = vrot.slane %v2467, %v2927
        %v2929 = vmul.f32 %v2924, %v2907
        %v2930 = vmul.f32 %v2928, %v2908
        %v2931 = vmul.f32 %v2924, %v2909
        %v2932 = vmul.f32 %v2928, %v2910
        %v2933 = vmul.f32 %v2924, %v2911
        %v2934 = vmul.f32 %v2928, %v2912
        %v2935 = vmul.f32 %v2924, %v2913
        %v2936 = vmul.f32 %v2928, %v2914
        %v2937 = vmul.f32 %v2924, %v2915
        %v2938 = vmul.f32 %v2928, %v2916
        %v2939 = vmul.f32 %v2924, %v2917
        %v2940 = vmul.f32 %v2928, %v2918
        %v2941 = vmul.f32 %v2924, %v2919
        %v2942 = vmul.f32 %v2928, %v2920
        %v2943 = vadd.f32 %v2892, %v2929
        %v2944 = vadd.f32 %v2893, %v2930
        %v2945 = vadd.f32 %v2894, %v2931
        %v2946 = vadd.f32 %v2895, %v2932
        %v2947 = vadd.f32 %v2896, %v2933
        %v2948 = vadd.f32 %v2897, %v2934
        %v2949 = vadd.f32 %v2898, %v2935
        %v2950 = vadd.f32 %v2899, %v2936
        %v2951 = vadd.f32 %v2900, %v2937
        %v2952 = vadd.f32 %v2901, %v2938
        %v2953 = vadd.f32 %v2902, %v2939
        %v2954 = vadd.f32 %v2903, %v2940
        %v2955 = vadd.f32 %v2904, %v2941
        %v2956 = vadd.f32 %v2905, %v2942
        %s2957 = scalar_lea.vmem [#allocation9], 1008
        %v2958 = vld [vmem:[%s2957] sm:$0xff]
        %v2959 = vld [vmem:[%s2957 + $0x8] sm:$0xff]
        %v2960 = vld [vmem:[%s2957 + $0x10] sm:$0xff]
        %v2961 = vld [vmem:[%s2957 + $0x18] sm:$0xff]
        %v2962 = vld [vmem:[%s2957 + $0x20] sm:$0xff]
        %v2963 = vld [vmem:[%s2957 + $0x28] sm:$0xff]
        %v2964 = vld [vmem:[%s2957 + $0x30] sm:$0xff]
        %v2965 = vld [vmem:[%s2957 + $0x38] sm:$0xff]
        %v2966 = vld [vmem:[%s2957 + $0x40] sm:$0xff]
        %v2967 = vld [vmem:[%s2957 + $0x48] sm:$0xff]
        %v2968 = vld [vmem:[%s2957 + $0x50] sm:$0xff]
        %v2969 = vld [vmem:[%s2957 + $0x58] sm:$0xff]
        %v2970 = vld [vmem:[%s2957 + $0x60] sm:$0x1]
        %v2971 = vld [vmem:[%s2957 + $0x68] sm:$0x1]
        %v2972 = vlaneseq
        %v2973 = vshrl.u32 %v2972, 7
        %v2974 = vsub.s32 1, %v2973
        %v2975 = vrot.slane %v2465, %v2974
        %v2976 = vlaneseq
        %v2977 = vshrl.u32 %v2976, 7
        %v2978 = vsub.s32 1, %v2977
        %v2979 = vrot.slane %v2467, %v2978
        %v2980 = vmul.f32 %v2975, %v2958
        %v2981 = vmul.f32 %v2979, %v2959
        %v2982 = vmul.f32 %v2975, %v2960
        %v2983 = vmul.f32 %v2979, %v2961
        %v2984 = vmul.f32 %v2975, %v2962
        %v2985 = vmul.f32 %v2979, %v2963
        %v2986 = vmul.f32 %v2975, %v2964
        %v2987 = vmul.f32 %v2979, %v2965
        %v2988 = vmul.f32 %v2975, %v2966
        %v2989 = vmul.f32 %v2979, %v2967
        %v2990 = vmul.f32 %v2975, %v2968
        %v2991 = vmul.f32 %v2979, %v2969
        %v2992 = vmul.f32 %v2975, %v2970
        %v2993 = vmul.f32 %v2979, %v2971
        %v2994 = vadd.f32 %v2943, %v2980
        %v2995 = vadd.f32 %v2944, %v2981
        %v2996 = vadd.f32 %v2945, %v2982
        %v2997 = vadd.f32 %v2946, %v2983
        %v2998 = vadd.f32 %v2947, %v2984
        %v2999 = vadd.f32 %v2948, %v2985
        %v3000 = vadd.f32 %v2949, %v2986
        %v3001 = vadd.f32 %v2950, %v2987
        %v3002 = vadd.f32 %v2951, %v2988
        %v3003 = vadd.f32 %v2952, %v2989
        %v3004 = vadd.f32 %v2953, %v2990
        %v3005 = vadd.f32 %v2954, %v2991
        %v3006 = vadd.f32 %v2955, %v2992
        %v3007 = vadd.f32 %v2956, %v2993
        %s3008 = scalar_lea.vmem [#allocation9], 1120
        %v3009 = vld [vmem:[%s3008] sm:$0xff]
        %v3010 = vld [vmem:[%s3008 + $0x8] sm:$0xff]
        %v3011 = vld [vmem:[%s3008 + $0x10] sm:$0xff]
        %v3012 = vld [vmem:[%s3008 + $0x18] sm:$0xff]
        %v3013 = vld [vmem:[%s3008 + $0x20] sm:$0xff]
        %v3014 = vld [vmem:[%s3008 + $0x28] sm:$0xff]
        %v3015 = vld [vmem:[%s3008 + $0x30] sm:$0xff]
        %v3016 = vld [vmem:[%s3008 + $0x38] sm:$0xff]
        %v3017 = vld [vmem:[%s3008 + $0x40] sm:$0xff]
        %v3018 = vld [vmem:[%s3008 + $0x48] sm:$0xff]
        %v3019 = vld [vmem:[%s3008 + $0x50] sm:$0xff]
        %v3020 = vld [vmem:[%s3008 + $0x58] sm:$0xff]
        %v3021 = vld [vmem:[%s3008 + $0x60] sm:$0x1]
        %v3022 = vld [vmem:[%s3008 + $0x68] sm:$0x1]
        %v3023 = vlaneseq
        %v3024 = vshrl.u32 %v3023, 7
        %v3025 = vsub.s32 2, %v3024
        %v3026 = vrot.slane %v2465, %v3025
        %v3027 = vlaneseq
        %v3028 = vshrl.u32 %v3027, 7
        %v3029 = vsub.s32 2, %v3028
        %v3030 = vrot.slane %v2467, %v3029
        %v3031 = vmul.f32 %v3026, %v3009
        %v3032 = vmul.f32 %v3030, %v3010
        %v3033 = vmul.f32 %v3026, %v3011
        %v3034 = vmul.f32 %v3030, %v3012
        %v3035 = vmul.f32 %v3026, %v3013
        %v3036 = vmul.f32 %v3030, %v3014
        %v3037 = vmul.f32 %v3026, %v3015
        %v3038 = vmul.f32 %v3030, %v3016
        %v3039 = vmul.f32 %v3026, %v3017
        %v3040 = vmul.f32 %v3030, %v3018
        %v3041 = vmul.f32 %v3026, %v3019
        %v3042 = vmul.f32 %v3030, %v3020
        %v3043 = vmul.f32 %v3026, %v3021
        %v3044 = vmul.f32 %v3030, %v3022
        %v3045 = vadd.f32 %v2994, %v3031
        %v3046 = vadd.f32 %v2995, %v3032
        %v3047 = vadd.f32 %v2996, %v3033
        %v3048 = vadd.f32 %v2997, %v3034
        %v3049 = vadd.f32 %v2998, %v3035
        %v3050 = vadd.f32 %v2999, %v3036
        %v3051 = vadd.f32 %v3000, %v3037
        %v3052 = vadd.f32 %v3001, %v3038
        %v3053 = vadd.f32 %v3002, %v3039
        %v3054 = vadd.f32 %v3003, %v3040
        %v3055 = vadd.f32 %v3004, %v3041
        %v3056 = vadd.f32 %v3005, %v3042
        %v3057 = vadd.f32 %v3006, %v3043
        %v3058 = vadd.f32 %v3007, %v3044
        %s3059 = scalar_lea.vmem [#allocation9], 1232
        %v3060 = vld [vmem:[%s3059] sm:$0xff]
        %v3061 = vld [vmem:[%s3059 + $0x8] sm:$0xff]
        %v3062 = vld [vmem:[%s3059 + $0x10] sm:$0xff]
        %v3063 = vld [vmem:[%s3059 + $0x18] sm:$0xff]
        %v3064 = vld [vmem:[%s3059 + $0x20] sm:$0xff]
        %v3065 = vld [vmem:[%s3059 + $0x28] sm:$0xff]
        %v3066 = vld [vmem:[%s3059 + $0x30] sm:$0xff]
        %v3067 = vld [vmem:[%s3059 + $0x38] sm:$0xff]
        %v3068 = vld [vmem:[%s3059 + $0x40] sm:$0xff]
        %v3069 = vld [vmem:[%s3059 + $0x48] sm:$0xff]
        %v3070 = vld [vmem:[%s3059 + $0x50] sm:$0xff]
        %v3071 = vld [vmem:[%s3059 + $0x58] sm:$0xff]
        %v3072 = vld [vmem:[%s3059 + $0x60] sm:$0x1]
        %v3073 = vld [vmem:[%s3059 + $0x68] sm:$0x1]
        %v3074 = vlaneseq
        %v3075 = vshrl.u32 %v3074, 7
        %v3076 = vsub.s32 3, %v3075
        %v3077 = vrot.slane %v2465, %v3076
        %v3078 = vlaneseq
        %v3079 = vshrl.u32 %v3078, 7
        %v3080 = vsub.s32 3, %v3079
        %v3081 = vrot.slane %v2467, %v3080
        %v3082 = vmul.f32 %v3077, %v3060
        %v3083 = vmul.f32 %v3081, %v3061
        %v3084 = vmul.f32 %v3077, %v3062
        %v3085 = vmul.f32 %v3081, %v3063
        %v3086 = vmul.f32 %v3077, %v3064
        %v3087 = vmul.f32 %v3081, %v3065
        %v3088 = vmul.f32 %v3077, %v3066
        %v3089 = vmul.f32 %v3081, %v3067
        %v3090 = vmul.f32 %v3077, %v3068
        %v3091 = vmul.f32 %v3081, %v3069
        %v3092 = vmul.f32 %v3077, %v3070
        %v3093 = vmul.f32 %v3081, %v3071
        %v3094 = vmul.f32 %v3077, %v3072
        %v3095 = vmul.f32 %v3081, %v3073
        %v3096 = vadd.f32 %v3045, %v3082
        %v3097 = vadd.f32 %v3046, %v3083
        %v3098 = vadd.f32 %v3047, %v3084
        %v3099 = vadd.f32 %v3048, %v3085
        %v3100 = vadd.f32 %v3049, %v3086
        %v3101 = vadd.f32 %v3050, %v3087
        %v3102 = vadd.f32 %v3051, %v3088
        %v3103 = vadd.f32 %v3052, %v3089
        %v3104 = vadd.f32 %v3053, %v3090
        %v3105 = vadd.f32 %v3054, %v3091
        %v3106 = vadd.f32 %v3055, %v3092
        %v3107 = vadd.f32 %v3056, %v3093
        %v3108 = vadd.f32 %v3057, %v3094
        %v3109 = vadd.f32 %v3058, %v3095
        %s3110 = scalar_lea.vmem [#allocation9], 1344
        %v3111 = vld [vmem:[%s3110] sm:$0xff]
        %v3112 = vld [vmem:[%s3110 + $0x8] sm:$0xff]
        %v3113 = vld [vmem:[%s3110 + $0x10] sm:$0xff]
        %v3114 = vld [vmem:[%s3110 + $0x18] sm:$0xff]
        %v3115 = vld [vmem:[%s3110 + $0x20] sm:$0xff]
        %v3116 = vld [vmem:[%s3110 + $0x28] sm:$0xff]
        %v3117 = vld [vmem:[%s3110 + $0x30] sm:$0xff]
        %v3118 = vld [vmem:[%s3110 + $0x38] sm:$0xff]
        %v3119 = vld [vmem:[%s3110 + $0x40] sm:$0xff]
        %v3120 = vld [vmem:[%s3110 + $0x48] sm:$0xff]
        %v3121 = vld [vmem:[%s3110 + $0x50] sm:$0xff]
        %v3122 = vld [vmem:[%s3110 + $0x58] sm:$0xff]
        %v3123 = vld [vmem:[%s3110 + $0x60] sm:$0x1]
        %v3124 = vld [vmem:[%s3110 + $0x68] sm:$0x1]
        %v3125 = vlaneseq
        %v3126 = vshrl.u32 %v3125, 7
        %v3127 = vsub.s32 4, %v3126
        %v3128 = vrot.slane %v2465, %v3127
        %v3129 = vlaneseq
        %v3130 = vshrl.u32 %v3129, 7
        %v3131 = vsub.s32 4, %v3130
        %v3132 = vrot.slane %v2467, %v3131
        %v3133 = vmul.f32 %v3128, %v3111
        %v3134 = vmul.f32 %v3132, %v3112
        %v3135 = vmul.f32 %v3128, %v3113
        %v3136 = vmul.f32 %v3132, %v3114
        %v3137 = vmul.f32 %v3128, %v3115
        %v3138 = vmul.f32 %v3132, %v3116
        %v3139 = vmul.f32 %v3128, %v3117
        %v3140 = vmul.f32 %v3132, %v3118
        %v3141 = vmul.f32 %v3128, %v3119
        %v3142 = vmul.f32 %v3132, %v3120
        %v3143 = vmul.f32 %v3128, %v3121
        %v3144 = vmul.f32 %v3132, %v3122
        %v3145 = vmul.f32 %v3128, %v3123
        %v3146 = vmul.f32 %v3132, %v3124
        %v3147 = vadd.f32 %v3096, %v3133
        %v3148 = vadd.f32 %v3097, %v3134
        %v3149 = vadd.f32 %v3098, %v3135
        %v3150 = vadd.f32 %v3099, %v3136
        %v3151 = vadd.f32 %v3100, %v3137
        %v3152 = vadd.f32 %v3101, %v3138
        %v3153 = vadd.f32 %v3102, %v3139
        %v3154 = vadd.f32 %v3103, %v3140
        %v3155 = vadd.f32 %v3104, %v3141
        %v3156 = vadd.f32 %v3105, %v3142
        %v3157 = vadd.f32 %v3106, %v3143
        %v3158 = vadd.f32 %v3107, %v3144
        %v3159 = vadd.f32 %v3108, %v3145
        %v3160 = vadd.f32 %v3109, %v3146
        %s3161 = scalar_lea.vmem [#allocation9], 1456
        %v3162 = vld [vmem:[%s3161] sm:$0xff]
        %v3163 = vld [vmem:[%s3161 + $0x8] sm:$0xff]
        %v3164 = vld [vmem:[%s3161 + $0x10] sm:$0xff]
        %v3165 = vld [vmem:[%s3161 + $0x18] sm:$0xff]
        %v3166 = vld [vmem:[%s3161 + $0x20] sm:$0xff]
        %v3167 = vld [vmem:[%s3161 + $0x28] sm:$0xff]
        %v3168 = vld [vmem:[%s3161 + $0x30] sm:$0xff]
        %v3169 = vld [vmem:[%s3161 + $0x38] sm:$0xff]
        %v3170 = vld [vmem:[%s3161 + $0x40] sm:$0xff]
        %v3171 = vld [vmem:[%s3161 + $0x48] sm:$0xff]
        %v3172 = vld [vmem:[%s3161 + $0x50] sm:$0xff]
        %v3173 = vld [vmem:[%s3161 + $0x58] sm:$0xff]
        %v3174 = vld [vmem:[%s3161 + $0x60] sm:$0x1]
        %v3175 = vld [vmem:[%s3161 + $0x68] sm:$0x1]
        %v3176 = vlaneseq
        %v3177 = vshrl.u32 %v3176, 7
        %v3178 = vsub.s32 5, %v3177
        %v3179 = vrot.slane %v2465, %v3178
        %v3180 = vlaneseq
        %v3181 = vshrl.u32 %v3180, 7
        %v3182 = vsub.s32 5, %v3181
        %v3183 = vrot.slane %v2467, %v3182
        %v3184 = vmul.f32 %v3179, %v3162
        %v3185 = vmul.f32 %v3183, %v3163
        %v3186 = vmul.f32 %v3179, %v3164
        %v3187 = vmul.f32 %v3183, %v3165
        %v3188 = vmul.f32 %v3179, %v3166
        %v3189 = vmul.f32 %v3183, %v3167
        %v3190 = vmul.f32 %v3179, %v3168
        %v3191 = vmul.f32 %v3183, %v3169
        %v3192 = vmul.f32 %v3179, %v3170
        %v3193 = vmul.f32 %v3183, %v3171
        %v3194 = vmul.f32 %v3179, %v3172
        %v3195 = vmul.f32 %v3183, %v3173
        %v3196 = vmul.f32 %v3179, %v3174
        %v3197 = vmul.f32 %v3183, %v3175
        %v3198 = vadd.f32 %v3147, %v3184
        %v3199 = vadd.f32 %v3148, %v3185
        %v3200 = vadd.f32 %v3149, %v3186
        %v3201 = vadd.f32 %v3150, %v3187
        %v3202 = vadd.f32 %v3151, %v3188
        %v3203 = vadd.f32 %v3152, %v3189
        %v3204 = vadd.f32 %v3153, %v3190
        %v3205 = vadd.f32 %v3154, %v3191
        %v3206 = vadd.f32 %v3155, %v3192
        %v3207 = vadd.f32 %v3156, %v3193
        %v3208 = vadd.f32 %v3157, %v3194
        %v3209 = vadd.f32 %v3158, %v3195
        %v3210 = vadd.f32 %v3159, %v3196
        %v3211 = vadd.f32 %v3160, %v3197
        %s3212 = scalar_lea.vmem [#allocation9], 1568
        %v3213 = vld [vmem:[%s3212] sm:$0xff]
        %v3214 = vld [vmem:[%s3212 + $0x8] sm:$0xff]
        %v3215 = vld [vmem:[%s3212 + $0x10] sm:$0xff]
        %v3216 = vld [vmem:[%s3212 + $0x18] sm:$0xff]
        %v3217 = vld [vmem:[%s3212 + $0x20] sm:$0xff]
        %v3218 = vld [vmem:[%s3212 + $0x28] sm:$0xff]
        %v3219 = vld [vmem:[%s3212 + $0x30] sm:$0xff]
        %v3220 = vld [vmem:[%s3212 + $0x38] sm:$0xff]
        %v3221 = vld [vmem:[%s3212 + $0x40] sm:$0xff]
        %v3222 = vld [vmem:[%s3212 + $0x48] sm:$0xff]
        %v3223 = vld [vmem:[%s3212 + $0x50] sm:$0xff]
        %v3224 = vld [vmem:[%s3212 + $0x58] sm:$0xff]
        %v3225 = vld [vmem:[%s3212 + $0x60] sm:$0x1]
        %v3226 = vld [vmem:[%s3212 + $0x68] sm:$0x1]
        %v3227 = vlaneseq
        %v3228 = vshrl.u32 %v3227, 7
        %v3229 = vsub.s32 6, %v3228
        %v3230 = vrot.slane %v2465, %v3229
        %v3231 = vlaneseq
        %v3232 = vshrl.u32 %v3231, 7
        %v3233 = vsub.s32 6, %v3232
        %v3234 = vrot.slane %v2467, %v3233
        %v3235 = vmul.f32 %v3230, %v3213
        %v3236 = vmul.f32 %v3234, %v3214
        %v3237 = vmul.f32 %v3230, %v3215
        %v3238 = vmul.f32 %v3234, %v3216
        %v3239 = vmul.f32 %v3230, %v3217
        %v3240 = vmul.f32 %v3234, %v3218
        %v3241 = vmul.f32 %v3230, %v3219
        %v3242 = vmul.f32 %v3234, %v3220
        %v3243 = vmul.f32 %v3230, %v3221
        %v3244 = vmul.f32 %v3234, %v3222
        %v3245 = vmul.f32 %v3230, %v3223
        %v3246 = vmul.f32 %v3234, %v3224
        %v3247 = vmul.f32 %v3230, %v3225
        %v3248 = vmul.f32 %v3234, %v3226
        %v3249 = vadd.f32 %v3198, %v3235
        %v3250 = vadd.f32 %v3199, %v3236
        %v3251 = vadd.f32 %v3200, %v3237
        %v3252 = vadd.f32 %v3201, %v3238
        %v3253 = vadd.f32 %v3202, %v3239
        %v3254 = vadd.f32 %v3203, %v3240
        %v3255 = vadd.f32 %v3204, %v3241
        %v3256 = vadd.f32 %v3205, %v3242
        %v3257 = vadd.f32 %v3206, %v3243
        %v3258 = vadd.f32 %v3207, %v3244
        %v3259 = vadd.f32 %v3208, %v3245
        %v3260 = vadd.f32 %v3209, %v3246
        %v3261 = vadd.f32 %v3210, %v3247
        %v3262 = vadd.f32 %v3211, %v3248
        %s3263 = scalar_lea.vmem [#allocation9], 1680
        %v3264 = vld [vmem:[%s3263] sm:$0xff]
        %v3265 = vld [vmem:[%s3263 + $0x8] sm:$0xff]
        %v3266 = vld [vmem:[%s3263 + $0x10] sm:$0xff]
        %v3267 = vld [vmem:[%s3263 + $0x18] sm:$0xff]
        %v3268 = vld [vmem:[%s3263 + $0x20] sm:$0xff]
        %v3269 = vld [vmem:[%s3263 + $0x28] sm:$0xff]
        %v3270 = vld [vmem:[%s3263 + $0x30] sm:$0xff]
        %v3271 = vld [vmem:[%s3263 + $0x38] sm:$0xff]
        %v3272 = vld [vmem:[%s3263 + $0x40] sm:$0xff]
        %v3273 = vld [vmem:[%s3263 + $0x48] sm:$0xff]
        %v3274 = vld [vmem:[%s3263 + $0x50] sm:$0xff]
        %v3275 = vld [vmem:[%s3263 + $0x58] sm:$0xff]
        %v3276 = vld [vmem:[%s3263 + $0x60] sm:$0x1]
        %v3277 = vld [vmem:[%s3263 + $0x68] sm:$0x1]
        %v3278 = vlaneseq
        %v3279 = vshrl.u32 %v3278, 7
        %v3280 = vsub.s32 7, %v3279
        %v3281 = vrot.slane %v2465, %v3280
        %v3282 = vlaneseq
        %v3283 = vshrl.u32 %v3282, 7
        %v3284 = vsub.s32 7, %v3283
        %v3285 = vrot.slane %v2467, %v3284
        %v3286 = vmul.f32 %v3281, %v3264
        %v3287 = vmul.f32 %v3285, %v3265
        %v3288 = vmul.f32 %v3281, %v3266
        %v3289 = vmul.f32 %v3285, %v3267
        %v3290 = vmul.f32 %v3281, %v3268
        %v3291 = vmul.f32 %v3285, %v3269
        %v3292 = vmul.f32 %v3281, %v3270
        %v3293 = vmul.f32 %v3285, %v3271
        %v3294 = vmul.f32 %v3281, %v3272
        %v3295 = vmul.f32 %v3285, %v3273
        %v3296 = vmul.f32 %v3281, %v3274
        %v3297 = vmul.f32 %v3285, %v3275
        %v3298 = vmul.f32 %v3281, %v3276
        %v3299 = vmul.f32 %v3285, %v3277
        %v3300 = vadd.f32 %v3249, %v3286
        %v3301 = vadd.f32 %v3250, %v3287
        %v3302 = vadd.f32 %v3251, %v3288
        %v3303 = vadd.f32 %v3252, %v3289
        %v3304 = vadd.f32 %v3253, %v3290
        %v3305 = vadd.f32 %v3254, %v3291
        %v3306 = vadd.f32 %v3255, %v3292
        %v3307 = vadd.f32 %v3256, %v3293
        %v3308 = vadd.f32 %v3257, %v3294
        %v3309 = vadd.f32 %v3258, %v3295
        %v3310 = vadd.f32 %v3259, %v3296
        %v3311 = vadd.f32 %v3260, %v3297
        %v3312 = vadd.f32 %v3261, %v3298
        %v3313 = vadd.f32 %v3262, %v3299
        %s3314 = scalar_lea.vmem [#allocation9], 1792
        %v3315 = vld [vmem:[%s3314] sm:$0xff]
        %v3316 = vld [vmem:[%s3314 + $0x8] sm:$0xff]
        %v3317 = vld [vmem:[%s3314 + $0x10] sm:$0xff]
        %v3318 = vld [vmem:[%s3314 + $0x18] sm:$0xff]
        %v3319 = vld [vmem:[%s3314 + $0x20] sm:$0xff]
        %v3320 = vld [vmem:[%s3314 + $0x28] sm:$0xff]
        %v3321 = vld [vmem:[%s3314 + $0x30] sm:$0xff]
        %v3322 = vld [vmem:[%s3314 + $0x38] sm:$0xff]
        %v3323 = vld [vmem:[%s3314 + $0x40] sm:$0xff]
        %v3324 = vld [vmem:[%s3314 + $0x48] sm:$0xff]
        %v3325 = vld [vmem:[%s3314 + $0x50] sm:$0xff]
        %v3326 = vld [vmem:[%s3314 + $0x58] sm:$0xff]
        %v3327 = vld [vmem:[%s3314 + $0x60] sm:$0x1]
        %v3328 = vld [vmem:[%s3314 + $0x68] sm:$0x1]
        %v3329 = vlaneseq
        %v3330 = vshrl.u32 %v3329, 7
        %v3331 = vsub.s32 0, %v3330
        %v3332 = vrot.slane %v2471, %v3331
        %v3333 = vlaneseq
        %v3334 = vshrl.u32 %v3333, 7
        %v3335 = vsub.s32 0, %v3334
        %v3336 = vrot.slane %v2473, %v3335
        %v3337 = vmul.f32 %v3332, %v3315
        %v3338 = vmul.f32 %v3336, %v3316
        %v3339 = vmul.f32 %v3332, %v3317
        %v3340 = vmul.f32 %v3336, %v3318
        %v3341 = vmul.f32 %v3332, %v3319
        %v3342 = vmul.f32 %v3336, %v3320
        %v3343 = vmul.f32 %v3332, %v3321
        %v3344 = vmul.f32 %v3336, %v3322
        %v3345 = vmul.f32 %v3332, %v3323
        %v3346 = vmul.f32 %v3336, %v3324
        %v3347 = vmul.f32 %v3332, %v3325
        %v3348 = vmul.f32 %v3336, %v3326
        %v3349 = vmul.f32 %v3332, %v3327
        %v3350 = vmul.f32 %v3336, %v3328
        %v3351 = vadd.f32 %v3300, %v3337
        %v3352 = vadd.f32 %v3301, %v3338
        %v3353 = vadd.f32 %v3302, %v3339
        %v3354 = vadd.f32 %v3303, %v3340
        %v3355 = vadd.f32 %v3304, %v3341
        %v3356 = vadd.f32 %v3305, %v3342
        %v3357 = vadd.f32 %v3306, %v3343
        %v3358 = vadd.f32 %v3307, %v3344
        %v3359 = vadd.f32 %v3308, %v3345
        %v3360 = vadd.f32 %v3309, %v3346
        %v3361 = vadd.f32 %v3310, %v3347
        %v3362 = vadd.f32 %v3311, %v3348
        %v3363 = vadd.f32 %v3312, %v3349
        %v3364 = vadd.f32 %v3313, %v3350
        %s3365 = scalar_lea.vmem [#allocation9], 1904
        %v3366 = vld [vmem:[%s3365] sm:$0xff]
        %v3367 = vld [vmem:[%s3365 + $0x8] sm:$0xff]
        %v3368 = vld [vmem:[%s3365 + $0x10] sm:$0xff]
        %v3369 = vld [vmem:[%s3365 + $0x18] sm:$0xff]
        %v3370 = vld [vmem:[%s3365 + $0x20] sm:$0xff]
        %v3371 = vld [vmem:[%s3365 + $0x28] sm:$0xff]
        %v3372 = vld [vmem:[%s3365 + $0x30] sm:$0xff]
        %v3373 = vld [vmem:[%s3365 + $0x38] sm:$0xff]
        %v3374 = vld [vmem:[%s3365 + $0x40] sm:$0xff]
        %v3375 = vld [vmem:[%s3365 + $0x48] sm:$0xff]
        %v3376 = vld [vmem:[%s3365 + $0x50] sm:$0xff]
        %v3377 = vld [vmem:[%s3365 + $0x58] sm:$0xff]
        %v3378 = vld [vmem:[%s3365 + $0x60] sm:$0x1]
        %v3379 = vld [vmem:[%s3365 + $0x68] sm:$0x1]
        %v3380 = vlaneseq
        %v3381 = vshrl.u32 %v3380, 7
        %v3382 = vsub.s32 1, %v3381
        %v3383 = vrot.slane %v2471, %v3382
        %v3384 = vlaneseq
        %v3385 = vshrl.u32 %v3384, 7
        %v3386 = vsub.s32 1, %v3385
        %v3387 = vrot.slane %v2473, %v3386
        %v3388 = vmul.f32 %v3383, %v3366
        %v3389 = vmul.f32 %v3387, %v3367
        %v3390 = vmul.f32 %v3383, %v3368
        %v3391 = vmul.f32 %v3387, %v3369
        %v3392 = vmul.f32 %v3383, %v3370
        %v3393 = vmul.f32 %v3387, %v3371
        %v3394 = vmul.f32 %v3383, %v3372
        %v3395 = vmul.f32 %v3387, %v3373
        %v3396 = vmul.f32 %v3383, %v3374
        %v3397 = vmul.f32 %v3387, %v3375
        %v3398 = vmul.f32 %v3383, %v3376
        %v3399 = vmul.f32 %v3387, %v3377
        %v3400 = vmul.f32 %v3383, %v3378
        %v3401 = vmul.f32 %v3387, %v3379
        %v3402 = vadd.f32 %v3351, %v3388
        %v3403 = vadd.f32 %v3352, %v3389
        %v3404 = vadd.f32 %v3353, %v3390
        %v3405 = vadd.f32 %v3354, %v3391
        %v3406 = vadd.f32 %v3355, %v3392
        %v3407 = vadd.f32 %v3356, %v3393
        %v3408 = vadd.f32 %v3357, %v3394
        %v3409 = vadd.f32 %v3358, %v3395
        %v3410 = vadd.f32 %v3359, %v3396
        %v3411 = vadd.f32 %v3360, %v3397
        %v3412 = vadd.f32 %v3361, %v3398
        %v3413 = vadd.f32 %v3362, %v3399
        %v3414 = vadd.f32 %v3363, %v3400
        %v3415 = vadd.f32 %v3364, %v3401
        %s3416 = scalar_lea.vmem [#allocation9], 2016
        %v3417 = vld [vmem:[%s3416] sm:$0xff]
        %v3418 = vld [vmem:[%s3416 + $0x8] sm:$0xff]
        %v3419 = vld [vmem:[%s3416 + $0x10] sm:$0xff]
        %v3420 = vld [vmem:[%s3416 + $0x18] sm:$0xff]
        %v3421 = vld [vmem:[%s3416 + $0x20] sm:$0xff]
        %v3422 = vld [vmem:[%s3416 + $0x28] sm:$0xff]
        %v3423 = vld [vmem:[%s3416 + $0x30] sm:$0xff]
        %v3424 = vld [vmem:[%s3416 + $0x38] sm:$0xff]
        %v3425 = vld [vmem:[%s3416 + $0x40] sm:$0xff]
        %v3426 = vld [vmem:[%s3416 + $0x48] sm:$0xff]
        %v3427 = vld [vmem:[%s3416 + $0x50] sm:$0xff]
        %v3428 = vld [vmem:[%s3416 + $0x58] sm:$0xff]
        %v3429 = vld [vmem:[%s3416 + $0x60] sm:$0x1]
        %v3430 = vld [vmem:[%s3416 + $0x68] sm:$0x1]
        %v3431 = vlaneseq
        %v3432 = vshrl.u32 %v3431, 7
        %v3433 = vsub.s32 2, %v3432
        %v3434 = vrot.slane %v2471, %v3433
        %v3435 = vlaneseq
        %v3436 = vshrl.u32 %v3435, 7
        %v3437 = vsub.s32 2, %v3436
        %v3438 = vrot.slane %v2473, %v3437
        %v3439 = vmul.f32 %v3434, %v3417
        %v3440 = vmul.f32 %v3438, %v3418
        %v3441 = vmul.f32 %v3434, %v3419
        %v3442 = vmul.f32 %v3438, %v3420
        %v3443 = vmul.f32 %v3434, %v3421
        %v3444 = vmul.f32 %v3438, %v3422
        %v3445 = vmul.f32 %v3434, %v3423
        %v3446 = vmul.f32 %v3438, %v3424
        %v3447 = vmul.f32 %v3434, %v3425
        %v3448 = vmul.f32 %v3438, %v3426
        %v3449 = vmul.f32 %v3434, %v3427
        %v3450 = vmul.f32 %v3438, %v3428
        %v3451 = vmul.f32 %v3434, %v3429
        %v3452 = vmul.f32 %v3438, %v3430
        %v3453 = vadd.f32 %v3402, %v3439
        %v3454 = vadd.f32 %v3403, %v3440
        %v3455 = vadd.f32 %v3404, %v3441
        %v3456 = vadd.f32 %v3405, %v3442
        %v3457 = vadd.f32 %v3406, %v3443
        %v3458 = vadd.f32 %v3407, %v3444
        %v3459 = vadd.f32 %v3408, %v3445
        %v3460 = vadd.f32 %v3409, %v3446
        %v3461 = vadd.f32 %v3410, %v3447
        %v3462 = vadd.f32 %v3411, %v3448
        %v3463 = vadd.f32 %v3412, %v3449
        %v3464 = vadd.f32 %v3413, %v3450
        %v3465 = vadd.f32 %v3414, %v3451
        %v3466 = vadd.f32 %v3415, %v3452
        %s3467 = scalar_lea.vmem [#allocation9], 2128
        %v3468 = vld [vmem:[%s3467] sm:$0xff]
        %v3469 = vld [vmem:[%s3467 + $0x8] sm:$0xff]
        %v3470 = vld [vmem:[%s3467 + $0x10] sm:$0xff]
        %v3471 = vld [vmem:[%s3467 + $0x18] sm:$0xff]
        %v3472 = vld [vmem:[%s3467 + $0x20] sm:$0xff]
        %v3473 = vld [vmem:[%s3467 + $0x28] sm:$0xff]
        %v3474 = vld [vmem:[%s3467 + $0x30] sm:$0xff]
        %v3475 = vld [vmem:[%s3467 + $0x38] sm:$0xff]
        %v3476 = vld [vmem:[%s3467 + $0x40] sm:$0xff]
        %v3477 = vld [vmem:[%s3467 + $0x48] sm:$0xff]
        %v3478 = vld [vmem:[%s3467 + $0x50] sm:$0xff]
        %v3479 = vld [vmem:[%s3467 + $0x58] sm:$0xff]
        %v3480 = vld [vmem:[%s3467 + $0x60] sm:$0x1]
        %v3481 = vld [vmem:[%s3467 + $0x68] sm:$0x1]
        %v3482 = vlaneseq
        %v3483 = vshrl.u32 %v3482, 7
        %v3484 = vsub.s32 3, %v3483
        %v3485 = vrot.slane %v2471, %v3484
        %v3486 = vlaneseq
        %v3487 = vshrl.u32 %v3486, 7
        %v3488 = vsub.s32 3, %v3487
        %v3489 = vrot.slane %v2473, %v3488
        %v3490 = vmul.f32 %v3485, %v3468
        %v3491 = vmul.f32 %v3489, %v3469
        %v3492 = vmul.f32 %v3485, %v3470
        %v3493 = vmul.f32 %v3489, %v3471
        %v3494 = vmul.f32 %v3485, %v3472
        %v3495 = vmul.f32 %v3489, %v3473
        %v3496 = vmul.f32 %v3485, %v3474
        %v3497 = vmul.f32 %v3489, %v3475
        %v3498 = vmul.f32 %v3485, %v3476
        %v3499 = vmul.f32 %v3489, %v3477
        %v3500 = vmul.f32 %v3485, %v3478
        %v3501 = vmul.f32 %v3489, %v3479
        %v3502 = vmul.f32 %v3485, %v3480
        %v3503 = vmul.f32 %v3489, %v3481
        %v3504 = vadd.f32 %v3453, %v3490
        %v3505 = vadd.f32 %v3454, %v3491
        %v3506 = vadd.f32 %v3455, %v3492
        %v3507 = vadd.f32 %v3456, %v3493
        %v3508 = vadd.f32 %v3457, %v3494
        %v3509 = vadd.f32 %v3458, %v3495
        %v3510 = vadd.f32 %v3459, %v3496
        %v3511 = vadd.f32 %v3460, %v3497
        %v3512 = vadd.f32 %v3461, %v3498
        %v3513 = vadd.f32 %v3462, %v3499
        %v3514 = vadd.f32 %v3463, %v3500
        %v3515 = vadd.f32 %v3464, %v3501
        %v3516 = vadd.f32 %v3465, %v3502
        %v3517 = vadd.f32 %v3466, %v3503
        %s3518 = scalar_lea.vmem [#allocation9], 2240
        %v3519 = vld [vmem:[%s3518] sm:$0xff]
        %v3520 = vld [vmem:[%s3518 + $0x8] sm:$0xff]
        %v3521 = vld [vmem:[%s3518 + $0x10] sm:$0xff]
        %v3522 = vld [vmem:[%s3518 + $0x18] sm:$0xff]
        %v3523 = vld [vmem:[%s3518 + $0x20] sm:$0xff]
        %v3524 = vld [vmem:[%s3518 + $0x28] sm:$0xff]
        %v3525 = vld [vmem:[%s3518 + $0x30] sm:$0xff]
        %v3526 = vld [vmem:[%s3518 + $0x38] sm:$0xff]
        %v3527 = vld [vmem:[%s3518 + $0x40] sm:$0xff]
        %v3528 = vld [vmem:[%s3518 + $0x48] sm:$0xff]
        %v3529 = vld [vmem:[%s3518 + $0x50] sm:$0xff]
        %v3530 = vld [vmem:[%s3518 + $0x58] sm:$0xff]
        %v3531 = vld [vmem:[%s3518 + $0x60] sm:$0x1]
        %v3532 = vld [vmem:[%s3518 + $0x68] sm:$0x1]
        %v3533 = vlaneseq
        %v3534 = vshrl.u32 %v3533, 7
        %v3535 = vsub.s32 4, %v3534
        %v3536 = vrot.slane %v2471, %v3535
        %v3537 = vlaneseq
        %v3538 = vshrl.u32 %v3537, 7
        %v3539 = vsub.s32 4, %v3538
        %v3540 = vrot.slane %v2473, %v3539
        %v3541 = vmul.f32 %v3536, %v3519
        %v3542 = vmul.f32 %v3540, %v3520
        %v3543 = vmul.f32 %v3536, %v3521
        %v3544 = vmul.f32 %v3540, %v3522
        %v3545 = vmul.f32 %v3536, %v3523
        %v3546 = vmul.f32 %v3540, %v3524
        %v3547 = vmul.f32 %v3536, %v3525
        %v3548 = vmul.f32 %v3540, %v3526
        %v3549 = vmul.f32 %v3536, %v3527
        %v3550 = vmul.f32 %v3540, %v3528
        %v3551 = vmul.f32 %v3536, %v3529
        %v3552 = vmul.f32 %v3540, %v3530
        %v3553 = vmul.f32 %v3536, %v3531
        %v3554 = vmul.f32 %v3540, %v3532
        %v3555 = vadd.f32 %v3504, %v3541
        %v3556 = vadd.f32 %v3505, %v3542
        %v3557 = vadd.f32 %v3506, %v3543
        %v3558 = vadd.f32 %v3507, %v3544
        %v3559 = vadd.f32 %v3508, %v3545
        %v3560 = vadd.f32 %v3509, %v3546
        %v3561 = vadd.f32 %v3510, %v3547
        %v3562 = vadd.f32 %v3511, %v3548
        %v3563 = vadd.f32 %v3512, %v3549
        %v3564 = vadd.f32 %v3513, %v3550
        %v3565 = vadd.f32 %v3514, %v3551
        %v3566 = vadd.f32 %v3515, %v3552
        %v3567 = vadd.f32 %v3516, %v3553
        %v3568 = vadd.f32 %v3517, %v3554
        %s3569 = scalar_lea.vmem [#allocation9], 2352
        %v3570 = vld [vmem:[%s3569] sm:$0xff]
        %v3571 = vld [vmem:[%s3569 + $0x8] sm:$0xff]
        %v3572 = vld [vmem:[%s3569 + $0x10] sm:$0xff]
        %v3573 = vld [vmem:[%s3569 + $0x18] sm:$0xff]
        %v3574 = vld [vmem:[%s3569 + $0x20] sm:$0xff]
        %v3575 = vld [vmem:[%s3569 + $0x28] sm:$0xff]
        %v3576 = vld [vmem:[%s3569 + $0x30] sm:$0xff]
        %v3577 = vld [vmem:[%s3569 + $0x38] sm:$0xff]
        %v3578 = vld [vmem:[%s3569 + $0x40] sm:$0xff]
        %v3579 = vld [vmem:[%s3569 + $0x48] sm:$0xff]
        %v3580 = vld [vmem:[%s3569 + $0x50] sm:$0xff]
        %v3581 = vld [vmem:[%s3569 + $0x58] sm:$0xff]
        %v3582 = vld [vmem:[%s3569 + $0x60] sm:$0x1]
        %v3583 = vld [vmem:[%s3569 + $0x68] sm:$0x1]
        %v3584 = vlaneseq
        %v3585 = vshrl.u32 %v3584, 7
        %v3586 = vsub.s32 5, %v3585
        %v3587 = vrot.slane %v2471, %v3586
        %v3588 = vlaneseq
        %v3589 = vshrl.u32 %v3588, 7
        %v3590 = vsub.s32 5, %v3589
        %v3591 = vrot.slane %v2473, %v3590
        %v3592 = vmul.f32 %v3587, %v3570
        %v3593 = vmul.f32 %v3591, %v3571
        %v3594 = vmul.f32 %v3587, %v3572
        %v3595 = vmul.f32 %v3591, %v3573
        %v3596 = vmul.f32 %v3587, %v3574
        %v3597 = vmul.f32 %v3591, %v3575
        %v3598 = vmul.f32 %v3587, %v3576
        %v3599 = vmul.f32 %v3591, %v3577
        %v3600 = vmul.f32 %v3587, %v3578
        %v3601 = vmul.f32 %v3591, %v3579
        %v3602 = vmul.f32 %v3587, %v3580
        %v3603 = vmul.f32 %v3591, %v3581
        %v3604 = vmul.f32 %v3587, %v3582
        %v3605 = vmul.f32 %v3591, %v3583
        %v3606 = vadd.f32 %v3555, %v3592
        %v3607 = vadd.f32 %v3556, %v3593
        %v3608 = vadd.f32 %v3557, %v3594
        %v3609 = vadd.f32 %v3558, %v3595
        %v3610 = vadd.f32 %v3559, %v3596
        %v3611 = vadd.f32 %v3560, %v3597
        %v3612 = vadd.f32 %v3561, %v3598
        %v3613 = vadd.f32 %v3562, %v3599
        %v3614 = vadd.f32 %v3563, %v3600
        %v3615 = vadd.f32 %v3564, %v3601
        %v3616 = vadd.f32 %v3565, %v3602
        %v3617 = vadd.f32 %v3566, %v3603
        %v3618 = vadd.f32 %v3567, %v3604
        %v3619 = vadd.f32 %v3568, %v3605
        %s3620 = scalar_lea.vmem [#allocation9], 2464
        %v3621 = vld [vmem:[%s3620] sm:$0xff]
        %v3622 = vld [vmem:[%s3620 + $0x8] sm:$0xff]
        %v3623 = vld [vmem:[%s3620 + $0x10] sm:$0xff]
        %v3624 = vld [vmem:[%s3620 + $0x18] sm:$0xff]
        %v3625 = vld [vmem:[%s3620 + $0x20] sm:$0xff]
        %v3626 = vld [vmem:[%s3620 + $0x28] sm:$0xff]
        %v3627 = vld [vmem:[%s3620 + $0x30] sm:$0xff]
        %v3628 = vld [vmem:[%s3620 + $0x38] sm:$0xff]
        %v3629 = vld [vmem:[%s3620 + $0x40] sm:$0xff]
        %v3630 = vld [vmem:[%s3620 + $0x48] sm:$0xff]
        %v3631 = vld [vmem:[%s3620 + $0x50] sm:$0xff]
        %v3632 = vld [vmem:[%s3620 + $0x58] sm:$0xff]
        %v3633 = vld [vmem:[%s3620 + $0x60] sm:$0x1]
        %v3634 = vld [vmem:[%s3620 + $0x68] sm:$0x1]
        %v3635 = vlaneseq
        %v3636 = vshrl.u32 %v3635, 7
        %v3637 = vsub.s32 6, %v3636
        %v3638 = vrot.slane %v2471, %v3637
        %v3639 = vlaneseq
        %v3640 = vshrl.u32 %v3639, 7
        %v3641 = vsub.s32 6, %v3640
        %v3642 = vrot.slane %v2473, %v3641
        %v3643 = vmul.f32 %v3638, %v3621
        %v3644 = vmul.f32 %v3642, %v3622
        %v3645 = vmul.f32 %v3638, %v3623
        %v3646 = vmul.f32 %v3642, %v3624
        %v3647 = vmul.f32 %v3638, %v3625
        %v3648 = vmul.f32 %v3642, %v3626
        %v3649 = vmul.f32 %v3638, %v3627
        %v3650 = vmul.f32 %v3642, %v3628
        %v3651 = vmul.f32 %v3638, %v3629
        %v3652 = vmul.f32 %v3642, %v3630
        %v3653 = vmul.f32 %v3638, %v3631
        %v3654 = vmul.f32 %v3642, %v3632
        %v3655 = vmul.f32 %v3638, %v3633
        %v3656 = vmul.f32 %v3642, %v3634
        %v3657 = vadd.f32 %v3606, %v3643
        %v3658 = vadd.f32 %v3607, %v3644
        %v3659 = vadd.f32 %v3608, %v3645
        %v3660 = vadd.f32 %v3609, %v3646
        %v3661 = vadd.f32 %v3610, %v3647
        %v3662 = vadd.f32 %v3611, %v3648
        %v3663 = vadd.f32 %v3612, %v3649
        %v3664 = vadd.f32 %v3613, %v3650
        %v3665 = vadd.f32 %v3614, %v3651
        %v3666 = vadd.f32 %v3615, %v3652
        %v3667 = vadd.f32 %v3616, %v3653
        %v3668 = vadd.f32 %v3617, %v3654
        %v3669 = vadd.f32 %v3618, %v3655
        %v3670 = vadd.f32 %v3619, %v3656
        %s3671 = scalar_lea.vmem [#allocation9], 2576
        %v3672 = vld [vmem:[%s3671] sm:$0xff]
        %v3673 = vld [vmem:[%s3671 + $0x8] sm:$0xff]
        %v3674 = vld [vmem:[%s3671 + $0x10] sm:$0xff]
        %v3675 = vld [vmem:[%s3671 + $0x18] sm:$0xff]
        %v3676 = vld [vmem:[%s3671 + $0x20] sm:$0xff]
        %v3677 = vld [vmem:[%s3671 + $0x28] sm:$0xff]
        %v3678 = vld [vmem:[%s3671 + $0x30] sm:$0xff]
        %v3679 = vld [vmem:[%s3671 + $0x38] sm:$0xff]
        %v3680 = vld [vmem:[%s3671 + $0x40] sm:$0xff]
        %v3681 = vld [vmem:[%s3671 + $0x48] sm:$0xff]
        %v3682 = vld [vmem:[%s3671 + $0x50] sm:$0xff]
        %v3683 = vld [vmem:[%s3671 + $0x58] sm:$0xff]
        %v3684 = vld [vmem:[%s3671 + $0x60] sm:$0x1]
        %v3685 = vld [vmem:[%s3671 + $0x68] sm:$0x1]
        %v3686 = vlaneseq
        %v3687 = vshrl.u32 %v3686, 7
        %v3688 = vsub.s32 7, %v3687
        %v3689 = vrot.slane %v2471, %v3688
        %v3690 = vlaneseq
        %v3691 = vshrl.u32 %v3690, 7
        %v3692 = vsub.s32 7, %v3691
        %v3693 = vrot.slane %v2473, %v3692
        %v3694 = vmul.f32 %v3689, %v3672
        %v3695 = vmul.f32 %v3693, %v3673
        %v3696 = vmul.f32 %v3689, %v3674
        %v3697 = vmul.f32 %v3693, %v3675
        %v3698 = vmul.f32 %v3689, %v3676
        %v3699 = vmul.f32 %v3693, %v3677
        %v3700 = vmul.f32 %v3689, %v3678
        %v3701 = vmul.f32 %v3693, %v3679
        %v3702 = vmul.f32 %v3689, %v3680
        %v3703 = vmul.f32 %v3693, %v3681
        %v3704 = vmul.f32 %v3689, %v3682
        %v3705 = vmul.f32 %v3693, %v3683
        %v3706 = vmul.f32 %v3689, %v3684
        %v3707 = vmul.f32 %v3693, %v3685
        %v3708 = vadd.f32 %v3657, %v3694
        %v3709 = vadd.f32 %v3658, %v3695
        %v3710 = vadd.f32 %v3659, %v3696
        %v3711 = vadd.f32 %v3660, %v3697
        %v3712 = vadd.f32 %v3661, %v3698
        %v3713 = vadd.f32 %v3662, %v3699
        %v3714 = vadd.f32 %v3663, %v3700
        %v3715 = vadd.f32 %v3664, %v3701
        %v3716 = vadd.f32 %v3665, %v3702
        %v3717 = vadd.f32 %v3666, %v3703
        %v3718 = vadd.f32 %v3667, %v3704
        %v3719 = vadd.f32 %v3668, %v3705
        %v3720 = vadd.f32 %v3669, %v3706
        %v3721 = vadd.f32 %v3670, %v3707
        %s3722 = scalar_lea.vmem [#allocation9], 2688
        %v3723 = vld [vmem:[%s3722] sm:$0xff]
        %v3724 = vld [vmem:[%s3722 + $0x8] sm:$0xff]
        %v3725 = vld [vmem:[%s3722 + $0x10] sm:$0xff]
        %v3726 = vld [vmem:[%s3722 + $0x18] sm:$0xff]
        %v3727 = vld [vmem:[%s3722 + $0x20] sm:$0xff]
        %v3728 = vld [vmem:[%s3722 + $0x28] sm:$0xff]
        %v3729 = vld [vmem:[%s3722 + $0x30] sm:$0xff]
        %v3730 = vld [vmem:[%s3722 + $0x38] sm:$0xff]
        %v3731 = vld [vmem:[%s3722 + $0x40] sm:$0xff]
        %v3732 = vld [vmem:[%s3722 + $0x48] sm:$0xff]
        %v3733 = vld [vmem:[%s3722 + $0x50] sm:$0xff]
        %v3734 = vld [vmem:[%s3722 + $0x58] sm:$0xff]
        %v3735 = vld [vmem:[%s3722 + $0x60] sm:$0x1]
        %v3736 = vld [vmem:[%s3722 + $0x68] sm:$0x1]
        %v3737 = vlaneseq
        %v3738 = vshrl.u32 %v3737, 7
        %v3739 = vsub.s32 0, %v3738
        %v3740 = vrot.slane %v2477, %v3739
        %v3741 = vlaneseq
        %v3742 = vshrl.u32 %v3741, 7
        %v3743 = vsub.s32 0, %v3742
        %v3744 = vrot.slane %v2479, %v3743
        %v3745 = vmul.f32 %v3740, %v3723
        %v3746 = vmul.f32 %v3744, %v3724
        %v3747 = vmul.f32 %v3740, %v3725
        %v3748 = vmul.f32 %v3744, %v3726
        %v3749 = vmul.f32 %v3740, %v3727
        %v3750 = vmul.f32 %v3744, %v3728
        %v3751 = vmul.f32 %v3740, %v3729
        %v3752 = vmul.f32 %v3744, %v3730
        %v3753 = vmul.f32 %v3740, %v3731
        %v3754 = vmul.f32 %v3744, %v3732
        %v3755 = vmul.f32 %v3740, %v3733
        %v3756 = vmul.f32 %v3744, %v3734
        %v3757 = vmul.f32 %v3740, %v3735
        %v3758 = vmul.f32 %v3744, %v3736
        %v3759 = vadd.f32 %v3708, %v3745
        %v3760 = vadd.f32 %v3709, %v3746
        %v3761 = vadd.f32 %v3710, %v3747
        %v3762 = vadd.f32 %v3711, %v3748
        %v3763 = vadd.f32 %v3712, %v3749
        %v3764 = vadd.f32 %v3713, %v3750
        %v3765 = vadd.f32 %v3714, %v3751
        %v3766 = vadd.f32 %v3715, %v3752
        %v3767 = vadd.f32 %v3716, %v3753
        %v3768 = vadd.f32 %v3717, %v3754
        %v3769 = vadd.f32 %v3718, %v3755
        %v3770 = vadd.f32 %v3719, %v3756
        %v3771 = vadd.f32 %v3720, %v3757
        %v3772 = vadd.f32 %v3721, %v3758
        %s3773 = scalar_lea.vmem [#allocation9], 2800
        %v3774 = vld [vmem:[%s3773] sm:$0xff]
        %v3775 = vld [vmem:[%s3773 + $0x8] sm:$0xff]
        %v3776 = vld [vmem:[%s3773 + $0x10] sm:$0xff]
        %v3777 = vld [vmem:[%s3773 + $0x18] sm:$0xff]
        %v3778 = vld [vmem:[%s3773 + $0x20] sm:$0xff]
        %v3779 = vld [vmem:[%s3773 + $0x28] sm:$0xff]
        %v3780 = vld [vmem:[%s3773 + $0x30] sm:$0xff]
        %v3781 = vld [vmem:[%s3773 + $0x38] sm:$0xff]
        %v3782 = vld [vmem:[%s3773 + $0x40] sm:$0xff]
        %v3783 = vld [vmem:[%s3773 + $0x48] sm:$0xff]
        %v3784 = vld [vmem:[%s3773 + $0x50] sm:$0xff]
        %v3785 = vld [vmem:[%s3773 + $0x58] sm:$0xff]
        %v3786 = vld [vmem:[%s3773 + $0x60] sm:$0x1]
        %v3787 = vld [vmem:[%s3773 + $0x68] sm:$0x1]
        %v3788 = vlaneseq
        %v3789 = vshrl.u32 %v3788, 7
        %v3790 = vsub.s32 1, %v3789
        %v3791 = vrot.slane %v2477, %v3790
        %v3792 = vlaneseq
        %v3793 = vshrl.u32 %v3792, 7
        %v3794 = vsub.s32 1, %v3793
        %v3795 = vrot.slane %v2479, %v3794
        %v3796 = vmul.f32 %v3791, %v3774
        %v3797 = vmul.f32 %v3795, %v3775
        %v3798 = vmul.f32 %v3791, %v3776
        %v3799 = vmul.f32 %v3795, %v3777
        %v3800 = vmul.f32 %v3791, %v3778
        %v3801 = vmul.f32 %v3795, %v3779
        %v3802 = vmul.f32 %v3791, %v3780
        %v3803 = vmul.f32 %v3795, %v3781
        %v3804 = vmul.f32 %v3791, %v3782
        %v3805 = vmul.f32 %v3795, %v3783
        %v3806 = vmul.f32 %v3791, %v3784
        %v3807 = vmul.f32 %v3795, %v3785
        %v3808 = vmul.f32 %v3791, %v3786
        %v3809 = vmul.f32 %v3795, %v3787
        %v3810 = vadd.f32 %v3759, %v3796
        %v3811 = vadd.f32 %v3760, %v3797
        %v3812 = vadd.f32 %v3761, %v3798
        %v3813 = vadd.f32 %v3762, %v3799
        %v3814 = vadd.f32 %v3763, %v3800
        %v3815 = vadd.f32 %v3764, %v3801
        %v3816 = vadd.f32 %v3765, %v3802
        %v3817 = vadd.f32 %v3766, %v3803
        %v3818 = vadd.f32 %v3767, %v3804
        %v3819 = vadd.f32 %v3768, %v3805
        %v3820 = vadd.f32 %v3769, %v3806
        %v3821 = vadd.f32 %v3770, %v3807
        %v3822 = vadd.f32 %v3771, %v3808
        %v3823 = vadd.f32 %v3772, %v3809
        %s3824 = scalar_lea.vmem [#allocation9], 2912
        %v3825 = vld [vmem:[%s3824] sm:$0xff]
        %v3826 = vld [vmem:[%s3824 + $0x8] sm:$0xff]
        %v3827 = vld [vmem:[%s3824 + $0x10] sm:$0xff]
        %v3828 = vld [vmem:[%s3824 + $0x18] sm:$0xff]
        %v3829 = vld [vmem:[%s3824 + $0x20] sm:$0xff]
        %v3830 = vld [vmem:[%s3824 + $0x28] sm:$0xff]
        %v3831 = vld [vmem:[%s3824 + $0x30] sm:$0xff]
        %v3832 = vld [vmem:[%s3824 + $0x38] sm:$0xff]
        %v3833 = vld [vmem:[%s3824 + $0x40] sm:$0xff]
        %v3834 = vld [vmem:[%s3824 + $0x48] sm:$0xff]
        %v3835 = vld [vmem:[%s3824 + $0x50] sm:$0xff]
        %v3836 = vld [vmem:[%s3824 + $0x58] sm:$0xff]
        %v3837 = vld [vmem:[%s3824 + $0x60] sm:$0x1]
        %v3838 = vld [vmem:[%s3824 + $0x68] sm:$0x1]
        %v3839 = vlaneseq
        %v3840 = vshrl.u32 %v3839, 7
        %v3841 = vsub.s32 2, %v3840
        %v3842 = vrot.slane %v2477, %v3841
        %v3843 = vlaneseq
        %v3844 = vshrl.u32 %v3843, 7
        %v3845 = vsub.s32 2, %v3844
        %v3846 = vrot.slane %v2479, %v3845
        %v3847 = vmul.f32 %v3842, %v3825
        %v3848 = vmul.f32 %v3846, %v3826
        %v3849 = vmul.f32 %v3842, %v3827
        %v3850 = vmul.f32 %v3846, %v3828
        %v3851 = vmul.f32 %v3842, %v3829
        %v3852 = vmul.f32 %v3846, %v3830
        %v3853 = vmul.f32 %v3842, %v3831
        %v3854 = vmul.f32 %v3846, %v3832
        %v3855 = vmul.f32 %v3842, %v3833
        %v3856 = vmul.f32 %v3846, %v3834
        %v3857 = vmul.f32 %v3842, %v3835
        %v3858 = vmul.f32 %v3846, %v3836
        %v3859 = vmul.f32 %v3842, %v3837
        %v3860 = vmul.f32 %v3846, %v3838
        %v3861 = vadd.f32 %v3810, %v3847
        %v3862 = vadd.f32 %v3811, %v3848
        %v3863 = vadd.f32 %v3812, %v3849
        %v3864 = vadd.f32 %v3813, %v3850
        %v3865 = vadd.f32 %v3814, %v3851
        %v3866 = vadd.f32 %v3815, %v3852
        %v3867 = vadd.f32 %v3816, %v3853
        %v3868 = vadd.f32 %v3817, %v3854
        %v3869 = vadd.f32 %v3818, %v3855
        %v3870 = vadd.f32 %v3819, %v3856
        %v3871 = vadd.f32 %v3820, %v3857
        %v3872 = vadd.f32 %v3821, %v3858
        %v3873 = vadd.f32 %v3822, %v3859
        %v3874 = vadd.f32 %v3823, %v3860
        %s3875 = scalar_lea.vmem [#allocation9], 3024
        %v3876 = vld [vmem:[%s3875] sm:$0xff]
        %v3877 = vld [vmem:[%s3875 + $0x8] sm:$0xff]
        %v3878 = vld [vmem:[%s3875 + $0x10] sm:$0xff]
        %v3879 = vld [vmem:[%s3875 + $0x18] sm:$0xff]
        %v3880 = vld [vmem:[%s3875 + $0x20] sm:$0xff]
        %v3881 = vld [vmem:[%s3875 + $0x28] sm:$0xff]
        %v3882 = vld [vmem:[%s3875 + $0x30] sm:$0xff]
        %v3883 = vld [vmem:[%s3875 + $0x38] sm:$0xff]
        %v3884 = vld [vmem:[%s3875 + $0x40] sm:$0xff]
        %v3885 = vld [vmem:[%s3875 + $0x48] sm:$0xff]
        %v3886 = vld [vmem:[%s3875 + $0x50] sm:$0xff]
        %v3887 = vld [vmem:[%s3875 + $0x58] sm:$0xff]
        %v3888 = vld [vmem:[%s3875 + $0x60] sm:$0x1]
        %v3889 = vld [vmem:[%s3875 + $0x68] sm:$0x1]
        %v3890 = vlaneseq
        %v3891 = vshrl.u32 %v3890, 7
        %v3892 = vsub.s32 3, %v3891
        %v3893 = vrot.slane %v2477, %v3892
        %v3894 = vlaneseq
        %v3895 = vshrl.u32 %v3894, 7
        %v3896 = vsub.s32 3, %v3895
        %v3897 = vrot.slane %v2479, %v3896
        %v3898 = vmul.f32 %v3893, %v3876
        %v3899 = vmul.f32 %v3897, %v3877
        %v3900 = vmul.f32 %v3893, %v3878
        %v3901 = vmul.f32 %v3897, %v3879
        %v3902 = vmul.f32 %v3893, %v3880
        %v3903 = vmul.f32 %v3897, %v3881
        %v3904 = vmul.f32 %v3893, %v3882
        %v3905 = vmul.f32 %v3897, %v3883
        %v3906 = vmul.f32 %v3893, %v3884
        %v3907 = vmul.f32 %v3897, %v3885
        %v3908 = vmul.f32 %v3893, %v3886
        %v3909 = vmul.f32 %v3897, %v3887
        %v3910 = vmul.f32 %v3893, %v3888
        %v3911 = vmul.f32 %v3897, %v3889
        %v3912 = vadd.f32 %v3861, %v3898
        %v3913 = vadd.f32 %v3862, %v3899
        %v3914 = vadd.f32 %v3863, %v3900
        %v3915 = vadd.f32 %v3864, %v3901
        %v3916 = vadd.f32 %v3865, %v3902
        %v3917 = vadd.f32 %v3866, %v3903
        %v3918 = vadd.f32 %v3867, %v3904
        %v3919 = vadd.f32 %v3868, %v3905
        %v3920 = vadd.f32 %v3869, %v3906
        %v3921 = vadd.f32 %v3870, %v3907
        %v3922 = vadd.f32 %v3871, %v3908
        %v3923 = vadd.f32 %v3872, %v3909
        %v3924 = vadd.f32 %v3873, %v3910
        %v3925 = vadd.f32 %v3874, %v3911
        %s3926 = scalar_lea.vmem [#allocation9], 3136
        %v3927 = vld [vmem:[%s3926] sm:$0xff]
        %v3928 = vld [vmem:[%s3926 + $0x8] sm:$0xff]
        %v3929 = vld [vmem:[%s3926 + $0x10] sm:$0xff]
        %v3930 = vld [vmem:[%s3926 + $0x18] sm:$0xff]
        %v3931 = vld [vmem:[%s3926 + $0x20] sm:$0xff]
        %v3932 = vld [vmem:[%s3926 + $0x28] sm:$0xff]
        %v3933 = vld [vmem:[%s3926 + $0x30] sm:$0xff]
        %v3934 = vld [vmem:[%s3926 + $0x38] sm:$0xff]
        %v3935 = vld [vmem:[%s3926 + $0x40] sm:$0xff]
        %v3936 = vld [vmem:[%s3926 + $0x48] sm:$0xff]
        %v3937 = vld [vmem:[%s3926 + $0x50] sm:$0xff]
        %v3938 = vld [vmem:[%s3926 + $0x58] sm:$0xff]
        %v3939 = vld [vmem:[%s3926 + $0x60] sm:$0x1]
        %v3940 = vld [vmem:[%s3926 + $0x68] sm:$0x1]
        %v3941 = vlaneseq
        %v3942 = vshrl.u32 %v3941, 7
        %v3943 = vsub.s32 4, %v3942
        %v3944 = vrot.slane %v2477, %v3943
        %v3945 = vlaneseq
        %v3946 = vshrl.u32 %v3945, 7
        %v3947 = vsub.s32 4, %v3946
        %v3948 = vrot.slane %v2479, %v3947
        %v3949 = vmul.f32 %v3944, %v3927
        %v3950 = vmul.f32 %v3948, %v3928
        %v3951 = vmul.f32 %v3944, %v3929
        %v3952 = vmul.f32 %v3948, %v3930
        %v3953 = vmul.f32 %v3944, %v3931
        %v3954 = vmul.f32 %v3948, %v3932
        %v3955 = vmul.f32 %v3944, %v3933
        %v3956 = vmul.f32 %v3948, %v3934
        %v3957 = vmul.f32 %v3944, %v3935
        %v3958 = vmul.f32 %v3948, %v3936
        %v3959 = vmul.f32 %v3944, %v3937
        %v3960 = vmul.f32 %v3948, %v3938
        %v3961 = vmul.f32 %v3944, %v3939
        %v3962 = vmul.f32 %v3948, %v3940
        %v3963 = vadd.f32 %v3912, %v3949
        %v3964 = vadd.f32 %v3913, %v3950
        %v3965 = vadd.f32 %v3914, %v3951
        %v3966 = vadd.f32 %v3915, %v3952
        %v3967 = vadd.f32 %v3916, %v3953
        %v3968 = vadd.f32 %v3917, %v3954
        %v3969 = vadd.f32 %v3918, %v3955
        %v3970 = vadd.f32 %v3919, %v3956
        %v3971 = vadd.f32 %v3920, %v3957
        %v3972 = vadd.f32 %v3921, %v3958
        %v3973 = vadd.f32 %v3922, %v3959
        %v3974 = vadd.f32 %v3923, %v3960
        %v3975 = vadd.f32 %v3924, %v3961
        %v3976 = vadd.f32 %v3925, %v3962
        %s3977 = scalar_lea.vmem [#allocation9], 3248
        %v3978 = vld [vmem:[%s3977] sm:$0xff]
        %v3979 = vld [vmem:[%s3977 + $0x8] sm:$0xff]
        %v3980 = vld [vmem:[%s3977 + $0x10] sm:$0xff]
        %v3981 = vld [vmem:[%s3977 + $0x18] sm:$0xff]
        %v3982 = vld [vmem:[%s3977 + $0x20] sm:$0xff]
        %v3983 = vld [vmem:[%s3977 + $0x28] sm:$0xff]
        %v3984 = vld [vmem:[%s3977 + $0x30] sm:$0xff]
        %v3985 = vld [vmem:[%s3977 + $0x38] sm:$0xff]
        %v3986 = vld [vmem:[%s3977 + $0x40] sm:$0xff]
        %v3987 = vld [vmem:[%s3977 + $0x48] sm:$0xff]
        %v3988 = vld [vmem:[%s3977 + $0x50] sm:$0xff]
        %v3989 = vld [vmem:[%s3977 + $0x58] sm:$0xff]
        %v3990 = vld [vmem:[%s3977 + $0x60] sm:$0x1]
        %v3991 = vld [vmem:[%s3977 + $0x68] sm:$0x1]
        %v3992 = vlaneseq
        %v3993 = vshrl.u32 %v3992, 7
        %v3994 = vsub.s32 5, %v3993
        %v3995 = vrot.slane %v2477, %v3994
        %v3996 = vlaneseq
        %v3997 = vshrl.u32 %v3996, 7
        %v3998 = vsub.s32 5, %v3997
        %v3999 = vrot.slane %v2479, %v3998
        %v4000 = vmul.f32 %v3995, %v3978
        %v4001 = vmul.f32 %v3999, %v3979
        %v4002 = vmul.f32 %v3995, %v3980
        %v4003 = vmul.f32 %v3999, %v3981
        %v4004 = vmul.f32 %v3995, %v3982
        %v4005 = vmul.f32 %v3999, %v3983
        %v4006 = vmul.f32 %v3995, %v3984
        %v4007 = vmul.f32 %v3999, %v3985
        %v4008 = vmul.f32 %v3995, %v3986
        %v4009 = vmul.f32 %v3999, %v3987
        %v4010 = vmul.f32 %v3995, %v3988
        %v4011 = vmul.f32 %v3999, %v3989
        %v4012 = vmul.f32 %v3995, %v3990
        %v4013 = vmul.f32 %v3999, %v3991
        %v4014 = vadd.f32 %v3963, %v4000
        %v4015 = vadd.f32 %v3964, %v4001
        %v4016 = vadd.f32 %v3965, %v4002
        %v4017 = vadd.f32 %v3966, %v4003
        %v4018 = vadd.f32 %v3967, %v4004
        %v4019 = vadd.f32 %v3968, %v4005
        %v4020 = vadd.f32 %v3969, %v4006
        %v4021 = vadd.f32 %v3970, %v4007
        %v4022 = vadd.f32 %v3971, %v4008
        %v4023 = vadd.f32 %v3972, %v4009
        %v4024 = vadd.f32 %v3973, %v4010
        %v4025 = vadd.f32 %v3974, %v4011
        %v4026 = vadd.f32 %v3975, %v4012
        %v4027 = vadd.f32 %v3976, %v4013
        %s4028 = scalar_lea.vmem [#allocation9], 3360
        %v4029 = vld [vmem:[%s4028] sm:$0xff]
        %v4030 = vld [vmem:[%s4028 + $0x8] sm:$0xff]
        %v4031 = vld [vmem:[%s4028 + $0x10] sm:$0xff]
        %v4032 = vld [vmem:[%s4028 + $0x18] sm:$0xff]
        %v4033 = vld [vmem:[%s4028 + $0x20] sm:$0xff]
        %v4034 = vld [vmem:[%s4028 + $0x28] sm:$0xff]
        %v4035 = vld [vmem:[%s4028 + $0x30] sm:$0xff]
        %v4036 = vld [vmem:[%s4028 + $0x38] sm:$0xff]
        %v4037 = vld [vmem:[%s4028 + $0x40] sm:$0xff]
        %v4038 = vld [vmem:[%s4028 + $0x48] sm:$0xff]
        %v4039 = vld [vmem:[%s4028 + $0x50] sm:$0xff]
        %v4040 = vld [vmem:[%s4028 + $0x58] sm:$0xff]
        %v4041 = vld [vmem:[%s4028 + $0x60] sm:$0x1]
        %v4042 = vld [vmem:[%s4028 + $0x68] sm:$0x1]
        %v4043 = vlaneseq
        %v4044 = vshrl.u32 %v4043, 7
        %v4045 = vsub.s32 6, %v4044
        %v4046 = vrot.slane %v2477, %v4045
        %v4047 = vlaneseq
        %v4048 = vshrl.u32 %v4047, 7
        %v4049 = vsub.s32 6, %v4048
        %v4050 = vrot.slane %v2479, %v4049
        %v4051 = vmul.f32 %v4046, %v4029
        %v4052 = vmul.f32 %v4050, %v4030
        %v4053 = vmul.f32 %v4046, %v4031
        %v4054 = vmul.f32 %v4050, %v4032
        %v4055 = vmul.f32 %v4046, %v4033
        %v4056 = vmul.f32 %v4050, %v4034
        %v4057 = vmul.f32 %v4046, %v4035
        %v4058 = vmul.f32 %v4050, %v4036
        %v4059 = vmul.f32 %v4046, %v4037
        %v4060 = vmul.f32 %v4050, %v4038
        %v4061 = vmul.f32 %v4046, %v4039
        %v4062 = vmul.f32 %v4050, %v4040
        %v4063 = vmul.f32 %v4046, %v4041
        %v4064 = vmul.f32 %v4050, %v4042
        %v4065 = vadd.f32 %v4014, %v4051
        %v4066 = vadd.f32 %v4015, %v4052
        %v4067 = vadd.f32 %v4016, %v4053
        %v4068 = vadd.f32 %v4017, %v4054
        %v4069 = vadd.f32 %v4018, %v4055
        %v4070 = vadd.f32 %v4019, %v4056
        %v4071 = vadd.f32 %v4020, %v4057
        %v4072 = vadd.f32 %v4021, %v4058
        %v4073 = vadd.f32 %v4022, %v4059
        %v4074 = vadd.f32 %v4023, %v4060
        %v4075 = vadd.f32 %v4024, %v4061
        %v4076 = vadd.f32 %v4025, %v4062
        %v4077 = vadd.f32 %v4026, %v4063
        %v4078 = vadd.f32 %v4027, %v4064
        %s4079 = scalar_lea.vmem [#allocation9], 3472
        %v4080 = vld [vmem:[%s4079] sm:$0xff]
        %v4081 = vld [vmem:[%s4079 + $0x8] sm:$0xff]
        %v4082 = vld [vmem:[%s4079 + $0x10] sm:$0xff]
        %v4083 = vld [vmem:[%s4079 + $0x18] sm:$0xff]
        %v4084 = vld [vmem:[%s4079 + $0x20] sm:$0xff]
        %v4085 = vld [vmem:[%s4079 + $0x28] sm:$0xff]
        %v4086 = vld [vmem:[%s4079 + $0x30] sm:$0xff]
        %v4087 = vld [vmem:[%s4079 + $0x38] sm:$0xff]
        %v4088 = vld [vmem:[%s4079 + $0x40] sm:$0xff]
        %v4089 = vld [vmem:[%s4079 + $0x48] sm:$0xff]
        %v4090 = vld [vmem:[%s4079 + $0x50] sm:$0xff]
        %v4091 = vld [vmem:[%s4079 + $0x58] sm:$0xff]
        %v4092 = vld [vmem:[%s4079 + $0x60] sm:$0x1]
        %v4093 = vld [vmem:[%s4079 + $0x68] sm:$0x1]
        %v4094 = vlaneseq
        %v4095 = vshrl.u32 %v4094, 7
        %v4096 = vsub.s32 7, %v4095
        %v4097 = vrot.slane %v2477, %v4096
        %v4098 = vlaneseq
        %v4099 = vshrl.u32 %v4098, 7
        %v4100 = vsub.s32 7, %v4099
        %v4101 = vrot.slane %v2479, %v4100
        %v4102 = vmul.f32 %v4097, %v4080
        %v4103 = vmul.f32 %v4101, %v4081
        %v4104 = vmul.f32 %v4097, %v4082
        %v4105 = vmul.f32 %v4101, %v4083
        %v4106 = vmul.f32 %v4097, %v4084
        %v4107 = vmul.f32 %v4101, %v4085
        %v4108 = vmul.f32 %v4097, %v4086
        %v4109 = vmul.f32 %v4101, %v4087
        %v4110 = vmul.f32 %v4097, %v4088
        %v4111 = vmul.f32 %v4101, %v4089
        %v4112 = vmul.f32 %v4097, %v4090
        %v4113 = vmul.f32 %v4101, %v4091
        %v4114 = vmul.f32 %v4097, %v4092
        %v4115 = vmul.f32 %v4101, %v4093
        %v4116 = vadd.f32 %v4065, %v4102
        %v4117 = vadd.f32 %v4066, %v4103
        %v4118 = vadd.f32 %v4067, %v4104
        %v4119 = vadd.f32 %v4068, %v4105
        %v4120 = vadd.f32 %v4069, %v4106
        %v4121 = vadd.f32 %v4070, %v4107
        %v4122 = vadd.f32 %v4071, %v4108
        %v4123 = vadd.f32 %v4072, %v4109
        %v4124 = vadd.f32 %v4073, %v4110
        %v4125 = vadd.f32 %v4074, %v4111
        %v4126 = vadd.f32 %v4075, %v4112
        %v4127 = vadd.f32 %v4076, %v4113
        %v4128 = vadd.f32 %v4077, %v4114
        %v4129 = vadd.f32 %v4078, %v4115
        %s4130 = scalar_lea.vmem [#allocation9], 3584
        %v4131 = vld [vmem:[%s4130] sm:$0xff]
        %v4132 = vld [vmem:[%s4130 + $0x8] sm:$0xff]
        %v4133 = vld [vmem:[%s4130 + $0x10] sm:$0xff]
        %v4134 = vld [vmem:[%s4130 + $0x18] sm:$0xff]
        %v4135 = vld [vmem:[%s4130 + $0x20] sm:$0xff]
        %v4136 = vld [vmem:[%s4130 + $0x28] sm:$0xff]
        %v4137 = vld [vmem:[%s4130 + $0x30] sm:$0xff]
        %v4138 = vld [vmem:[%s4130 + $0x38] sm:$0xff]
        %v4139 = vld [vmem:[%s4130 + $0x40] sm:$0xff]
        %v4140 = vld [vmem:[%s4130 + $0x48] sm:$0xff]
        %v4141 = vld [vmem:[%s4130 + $0x50] sm:$0xff]
        %v4142 = vld [vmem:[%s4130 + $0x58] sm:$0xff]
        %v4143 = vld [vmem:[%s4130 + $0x60] sm:$0x1]
        %v4144 = vld [vmem:[%s4130 + $0x68] sm:$0x1]
        %v4145 = vlaneseq
        %v4146 = vshrl.u32 %v4145, 7
        %v4147 = vsub.s32 0, %v4146
        %v4148 = vrot.slane %v2483, %v4147
        %v4149 = vlaneseq
        %v4150 = vshrl.u32 %v4149, 7
        %v4151 = vsub.s32 0, %v4150
        %v4152 = vrot.slane %v2485, %v4151
        %v4153 = vmul.f32 %v4148, %v4131
        %v4154 = vmul.f32 %v4152, %v4132
        %v4155 = vmul.f32 %v4148, %v4133
        %v4156 = vmul.f32 %v4152, %v4134
        %v4157 = vmul.f32 %v4148, %v4135
        %v4158 = vmul.f32 %v4152, %v4136
        %v4159 = vmul.f32 %v4148, %v4137
        %v4160 = vmul.f32 %v4152, %v4138
        %v4161 = vmul.f32 %v4148, %v4139
        %v4162 = vmul.f32 %v4152, %v4140
        %v4163 = vmul.f32 %v4148, %v4141
        %v4164 = vmul.f32 %v4152, %v4142
        %v4165 = vmul.f32 %v4148, %v4143
        %v4166 = vmul.f32 %v4152, %v4144
        %v4167 = vadd.f32 %v4116, %v4153
        %v4168 = vadd.f32 %v4117, %v4154
        %v4169 = vadd.f32 %v4118, %v4155
        %v4170 = vadd.f32 %v4119, %v4156
        %v4171 = vadd.f32 %v4120, %v4157
        %v4172 = vadd.f32 %v4121, %v4158
        %v4173 = vadd.f32 %v4122, %v4159
        %v4174 = vadd.f32 %v4123, %v4160
        %v4175 = vadd.f32 %v4124, %v4161
        %v4176 = vadd.f32 %v4125, %v4162
        %v4177 = vadd.f32 %v4126, %v4163
        %v4178 = vadd.f32 %v4127, %v4164
        %v4179 = vadd.f32 %v4128, %v4165
        %v4180 = vadd.f32 %v4129, %v4166
        %s4181 = scalar_lea.vmem [#allocation9], 3696
        %v4182 = vld [vmem:[%s4181] sm:$0xff]
        %v4183 = vld [vmem:[%s4181 + $0x8] sm:$0xff]
        %v4184 = vld [vmem:[%s4181 + $0x10] sm:$0xff]
        %v4185 = vld [vmem:[%s4181 + $0x18] sm:$0xff]
        %v4186 = vld [vmem:[%s4181 + $0x20] sm:$0xff]
        %v4187 = vld [vmem:[%s4181 + $0x28] sm:$0xff]
        %v4188 = vld [vmem:[%s4181 + $0x30] sm:$0xff]
        %v4189 = vld [vmem:[%s4181 + $0x38] sm:$0xff]
        %v4190 = vld [vmem:[%s4181 + $0x40] sm:$0xff]
        %v4191 = vld [vmem:[%s4181 + $0x48] sm:$0xff]
        %v4192 = vld [vmem:[%s4181 + $0x50] sm:$0xff]
        %v4193 = vld [vmem:[%s4181 + $0x58] sm:$0xff]
        %v4194 = vld [vmem:[%s4181 + $0x60] sm:$0x1]
        %v4195 = vld [vmem:[%s4181 + $0x68] sm:$0x1]
        %v4196 = vlaneseq
        %v4197 = vshrl.u32 %v4196, 7
        %v4198 = vsub.s32 1, %v4197
        %v4199 = vrot.slane %v2483, %v4198
        %v4200 = vlaneseq
        %v4201 = vshrl.u32 %v4200, 7
        %v4202 = vsub.s32 1, %v4201
        %v4203 = vrot.slane %v2485, %v4202
        %v4204 = vmul.f32 %v4199, %v4182
        %v4205 = vmul.f32 %v4203, %v4183
        %v4206 = vmul.f32 %v4199, %v4184
        %v4207 = vmul.f32 %v4203, %v4185
        %v4208 = vmul.f32 %v4199, %v4186
        %v4209 = vmul.f32 %v4203, %v4187
        %v4210 = vmul.f32 %v4199, %v4188
        %v4211 = vmul.f32 %v4203, %v4189
        %v4212 = vmul.f32 %v4199, %v4190
        %v4213 = vmul.f32 %v4203, %v4191
        %v4214 = vmul.f32 %v4199, %v4192
        %v4215 = vmul.f32 %v4203, %v4193
        %v4216 = vmul.f32 %v4199, %v4194
        %v4217 = vmul.f32 %v4203, %v4195
        %v4218 = vadd.f32 %v4167, %v4204
        %v4219 = vadd.f32 %v4168, %v4205
        %v4220 = vadd.f32 %v4169, %v4206
        %v4221 = vadd.f32 %v4170, %v4207
        %v4222 = vadd.f32 %v4171, %v4208
        %v4223 = vadd.f32 %v4172, %v4209
        %v4224 = vadd.f32 %v4173, %v4210
        %v4225 = vadd.f32 %v4174, %v4211
        %v4226 = vadd.f32 %v4175, %v4212
        %v4227 = vadd.f32 %v4176, %v4213
        %v4228 = vadd.f32 %v4177, %v4214
        %v4229 = vadd.f32 %v4178, %v4215
        %v4230 = vadd.f32 %v4179, %v4216
        %v4231 = vadd.f32 %v4180, %v4217
        %s4232 = scalar_lea.vmem [#allocation9], 3808
        %v4233 = vld [vmem:[%s4232] sm:$0xff]
        %v4234 = vld [vmem:[%s4232 + $0x8] sm:$0xff]
        %v4235 = vld [vmem:[%s4232 + $0x10] sm:$0xff]
        %v4236 = vld [vmem:[%s4232 + $0x18] sm:$0xff]
        %v4237 = vld [vmem:[%s4232 + $0x20] sm:$0xff]
        %v4238 = vld [vmem:[%s4232 + $0x28] sm:$0xff]
        %v4239 = vld [vmem:[%s4232 + $0x30] sm:$0xff]
        %v4240 = vld [vmem:[%s4232 + $0x38] sm:$0xff]
        %v4241 = vld [vmem:[%s4232 + $0x40] sm:$0xff]
        %v4242 = vld [vmem:[%s4232 + $0x48] sm:$0xff]
        %v4243 = vld [vmem:[%s4232 + $0x50] sm:$0xff]
        %v4244 = vld [vmem:[%s4232 + $0x58] sm:$0xff]
        %v4245 = vld [vmem:[%s4232 + $0x60] sm:$0x1]
        %v4246 = vld [vmem:[%s4232 + $0x68] sm:$0x1]
        %v4247 = vlaneseq
        %v4248 = vshrl.u32 %v4247, 7
        %v4249 = vsub.s32 2, %v4248
        %v4250 = vrot.slane %v2483, %v4249
        %v4251 = vlaneseq
        %v4252 = vshrl.u32 %v4251, 7
        %v4253 = vsub.s32 2, %v4252
        %v4254 = vrot.slane %v2485, %v4253
        %v4255 = vmul.f32 %v4250, %v4233
        %v4256 = vmul.f32 %v4254, %v4234
        %v4257 = vmul.f32 %v4250, %v4235
        %v4258 = vmul.f32 %v4254, %v4236
        %v4259 = vmul.f32 %v4250, %v4237
        %v4260 = vmul.f32 %v4254, %v4238
        %v4261 = vmul.f32 %v4250, %v4239
        %v4262 = vmul.f32 %v4254, %v4240
        %v4263 = vmul.f32 %v4250, %v4241
        %v4264 = vmul.f32 %v4254, %v4242
        %v4265 = vmul.f32 %v4250, %v4243
        %v4266 = vmul.f32 %v4254, %v4244
        %v4267 = vmul.f32 %v4250, %v4245
        %v4268 = vmul.f32 %v4254, %v4246
        %v4269 = vadd.f32 %v4218, %v4255
        %v4270 = vadd.f32 %v4219, %v4256
        %v4271 = vadd.f32 %v4220, %v4257
        %v4272 = vadd.f32 %v4221, %v4258
        %v4273 = vadd.f32 %v4222, %v4259
        %v4274 = vadd.f32 %v4223, %v4260
        %v4275 = vadd.f32 %v4224, %v4261
        %v4276 = vadd.f32 %v4225, %v4262
        %v4277 = vadd.f32 %v4226, %v4263
        %v4278 = vadd.f32 %v4227, %v4264
        %v4279 = vadd.f32 %v4228, %v4265
        %v4280 = vadd.f32 %v4229, %v4266
        %v4281 = vadd.f32 %v4230, %v4267
        %v4282 = vadd.f32 %v4231, %v4268
        %s4283 = scalar_lea.vmem [#allocation9], 3920
        %v4284 = vld [vmem:[%s4283] sm:$0xff]
        %v4285 = vld [vmem:[%s4283 + $0x8] sm:$0xff]
        %v4286 = vld [vmem:[%s4283 + $0x10] sm:$0xff]
        %v4287 = vld [vmem:[%s4283 + $0x18] sm:$0xff]
        %v4288 = vld [vmem:[%s4283 + $0x20] sm:$0xff]
        %v4289 = vld [vmem:[%s4283 + $0x28] sm:$0xff]
        %v4290 = vld [vmem:[%s4283 + $0x30] sm:$0xff]
        %v4291 = vld [vmem:[%s4283 + $0x38] sm:$0xff]
        %v4292 = vld [vmem:[%s4283 + $0x40] sm:$0xff]
        %v4293 = vld [vmem:[%s4283 + $0x48] sm:$0xff]
        %v4294 = vld [vmem:[%s4283 + $0x50] sm:$0xff]
        %v4295 = vld [vmem:[%s4283 + $0x58] sm:$0xff]
        %v4296 = vld [vmem:[%s4283 + $0x60] sm:$0x1]
        %v4297 = vld [vmem:[%s4283 + $0x68] sm:$0x1]
        %v4298 = vlaneseq
        %v4299 = vshrl.u32 %v4298, 7
        %v4300 = vsub.s32 3, %v4299
        %v4301 = vrot.slane %v2483, %v4300
        %v4302 = vlaneseq
        %v4303 = vshrl.u32 %v4302, 7
        %v4304 = vsub.s32 3, %v4303
        %v4305 = vrot.slane %v2485, %v4304
        %v4306 = vmul.f32 %v4301, %v4284
        %v4307 = vmul.f32 %v4305, %v4285
        %v4308 = vmul.f32 %v4301, %v4286
        %v4309 = vmul.f32 %v4305, %v4287
        %v4310 = vmul.f32 %v4301, %v4288
        %v4311 = vmul.f32 %v4305, %v4289
        %v4312 = vmul.f32 %v4301, %v4290
        %v4313 = vmul.f32 %v4305, %v4291
        %v4314 = vmul.f32 %v4301, %v4292
        %v4315 = vmul.f32 %v4305, %v4293
        %v4316 = vmul.f32 %v4301, %v4294
        %v4317 = vmul.f32 %v4305, %v4295
        %v4318 = vmul.f32 %v4301, %v4296
        %v4319 = vmul.f32 %v4305, %v4297
        %v4320 = vadd.f32 %v4269, %v4306
        %v4321 = vadd.f32 %v4270, %v4307
        %v4322 = vadd.f32 %v4271, %v4308
        %v4323 = vadd.f32 %v4272, %v4309
        %v4324 = vadd.f32 %v4273, %v4310
        %v4325 = vadd.f32 %v4274, %v4311
        %v4326 = vadd.f32 %v4275, %v4312
        %v4327 = vadd.f32 %v4276, %v4313
        %v4328 = vadd.f32 %v4277, %v4314
        %v4329 = vadd.f32 %v4278, %v4315
        %v4330 = vadd.f32 %v4279, %v4316
        %v4331 = vadd.f32 %v4280, %v4317
        %v4332 = vadd.f32 %v4281, %v4318
        %v4333 = vadd.f32 %v4282, %v4319
        %s4334 = scalar_lea.vmem [#allocation9], 4032
        %v4335 = vld [vmem:[%s4334] sm:$0xff]
        %v4336 = vld [vmem:[%s4334 + $0x8] sm:$0xff]
        %v4337 = vld [vmem:[%s4334 + $0x10] sm:$0xff]
        %v4338 = vld [vmem:[%s4334 + $0x18] sm:$0xff]
        %v4339 = vld [vmem:[%s4334 + $0x20] sm:$0xff]
        %v4340 = vld [vmem:[%s4334 + $0x28] sm:$0xff]
        %v4341 = vld [vmem:[%s4334 + $0x30] sm:$0xff]
        %v4342 = vld [vmem:[%s4334 + $0x38] sm:$0xff]
        %v4343 = vld [vmem:[%s4334 + $0x40] sm:$0xff]
        %v4344 = vld [vmem:[%s4334 + $0x48] sm:$0xff]
        %v4345 = vld [vmem:[%s4334 + $0x50] sm:$0xff]
        %v4346 = vld [vmem:[%s4334 + $0x58] sm:$0xff]
        %v4347 = vld [vmem:[%s4334 + $0x60] sm:$0x1]
        %v4348 = vld [vmem:[%s4334 + $0x68] sm:$0x1]
        %v4349 = vlaneseq
        %v4350 = vshrl.u32 %v4349, 7
        %v4351 = vsub.s32 4, %v4350
        %v4352 = vrot.slane %v2483, %v4351
        %v4353 = vlaneseq
        %v4354 = vshrl.u32 %v4353, 7
        %v4355 = vsub.s32 4, %v4354
        %v4356 = vrot.slane %v2485, %v4355
        %v4357 = vmul.f32 %v4352, %v4335
        %v4358 = vmul.f32 %v4356, %v4336
        %v4359 = vmul.f32 %v4352, %v4337
        %v4360 = vmul.f32 %v4356, %v4338
        %v4361 = vmul.f32 %v4352, %v4339
        %v4362 = vmul.f32 %v4356, %v4340
        %v4363 = vmul.f32 %v4352, %v4341
        %v4364 = vmul.f32 %v4356, %v4342
        %v4365 = vmul.f32 %v4352, %v4343
        %v4366 = vmul.f32 %v4356, %v4344
        %v4367 = vmul.f32 %v4352, %v4345
        %v4368 = vmul.f32 %v4356, %v4346
        %v4369 = vmul.f32 %v4352, %v4347
        %v4370 = vmul.f32 %v4356, %v4348
        %v4371 = vadd.f32 %v4320, %v4357
        %v4372 = vadd.f32 %v4321, %v4358
        %v4373 = vadd.f32 %v4322, %v4359
        %v4374 = vadd.f32 %v4323, %v4360
        %v4375 = vadd.f32 %v4324, %v4361
        %v4376 = vadd.f32 %v4325, %v4362
        %v4377 = vadd.f32 %v4326, %v4363
        %v4378 = vadd.f32 %v4327, %v4364
        %v4379 = vadd.f32 %v4328, %v4365
        %v4380 = vadd.f32 %v4329, %v4366
        %v4381 = vadd.f32 %v4330, %v4367
        %v4382 = vadd.f32 %v4331, %v4368
        %v4383 = vadd.f32 %v4332, %v4369
        %v4384 = vadd.f32 %v4333, %v4370
        %s4385 = scalar_lea.vmem [#allocation9], 4144
        %v4386 = vld [vmem:[%s4385] sm:$0xff]
        %v4387 = vld [vmem:[%s4385 + $0x8] sm:$0xff]
        %v4388 = vld [vmem:[%s4385 + $0x10] sm:$0xff]
        %v4389 = vld [vmem:[%s4385 + $0x18] sm:$0xff]
        %v4390 = vld [vmem:[%s4385 + $0x20] sm:$0xff]
        %v4391 = vld [vmem:[%s4385 + $0x28] sm:$0xff]
        %v4392 = vld [vmem:[%s4385 + $0x30] sm:$0xff]
        %v4393 = vld [vmem:[%s4385 + $0x38] sm:$0xff]
        %v4394 = vld [vmem:[%s4385 + $0x40] sm:$0xff]
        %v4395 = vld [vmem:[%s4385 + $0x48] sm:$0xff]
        %v4396 = vld [vmem:[%s4385 + $0x50] sm:$0xff]
        %v4397 = vld [vmem:[%s4385 + $0x58] sm:$0xff]
        %v4398 = vld [vmem:[%s4385 + $0x60] sm:$0x1]
        %v4399 = vld [vmem:[%s4385 + $0x68] sm:$0x1]
        %v4400 = vlaneseq
        %v4401 = vshrl.u32 %v4400, 7
        %v4402 = vsub.s32 5, %v4401
        %v4403 = vrot.slane %v2483, %v4402
        %v4404 = vlaneseq
        %v4405 = vshrl.u32 %v4404, 7
        %v4406 = vsub.s32 5, %v4405
        %v4407 = vrot.slane %v2485, %v4406
        %v4408 = vmul.f32 %v4403, %v4386
        %v4409 = vmul.f32 %v4407, %v4387
        %v4410 = vmul.f32 %v4403, %v4388
        %v4411 = vmul.f32 %v4407, %v4389
        %v4412 = vmul.f32 %v4403, %v4390
        %v4413 = vmul.f32 %v4407, %v4391
        %v4414 = vmul.f32 %v4403, %v4392
        %v4415 = vmul.f32 %v4407, %v4393
        %v4416 = vmul.f32 %v4403, %v4394
        %v4417 = vmul.f32 %v4407, %v4395
        %v4418 = vmul.f32 %v4403, %v4396
        %v4419 = vmul.f32 %v4407, %v4397
        %v4420 = vmul.f32 %v4403, %v4398
        %v4421 = vmul.f32 %v4407, %v4399
        %v4422 = vadd.f32 %v4371, %v4408
        %v4423 = vadd.f32 %v4372, %v4409
        %v4424 = vadd.f32 %v4373, %v4410
        %v4425 = vadd.f32 %v4374, %v4411
        %v4426 = vadd.f32 %v4375, %v4412
        %v4427 = vadd.f32 %v4376, %v4413
        %v4428 = vadd.f32 %v4377, %v4414
        %v4429 = vadd.f32 %v4378, %v4415
        %v4430 = vadd.f32 %v4379, %v4416
        %v4431 = vadd.f32 %v4380, %v4417
        %v4432 = vadd.f32 %v4381, %v4418
        %v4433 = vadd.f32 %v4382, %v4419
        %v4434 = vadd.f32 %v4383, %v4420
        %v4435 = vadd.f32 %v4384, %v4421
        %s4436 = scalar_lea.vmem [#allocation9], 4256
        %v4437 = vld [vmem:[%s4436] sm:$0xff]
        %v4438 = vld [vmem:[%s4436 + $0x8] sm:$0xff]
        %v4439 = vld [vmem:[%s4436 + $0x10] sm:$0xff]
        %v4440 = vld [vmem:[%s4436 + $0x18] sm:$0xff]
        %v4441 = vld [vmem:[%s4436 + $0x20] sm:$0xff]
        %v4442 = vld [vmem:[%s4436 + $0x28] sm:$0xff]
        %v4443 = vld [vmem:[%s4436 + $0x30] sm:$0xff]
        %v4444 = vld [vmem:[%s4436 + $0x38] sm:$0xff]
        %v4445 = vld [vmem:[%s4436 + $0x40] sm:$0xff]
        %v4446 = vld [vmem:[%s4436 + $0x48] sm:$0xff]
        %v4447 = vld [vmem:[%s4436 + $0x50] sm:$0xff]
        %v4448 = vld [vmem:[%s4436 + $0x58] sm:$0xff]
        %v4449 = vld [vmem:[%s4436 + $0x60] sm:$0x1]
        %v4450 = vld [vmem:[%s4436 + $0x68] sm:$0x1]
        %v4451 = vlaneseq
        %v4452 = vshrl.u32 %v4451, 7
        %v4453 = vsub.s32 6, %v4452
        %v4454 = vrot.slane %v2483, %v4453
        %v4455 = vlaneseq
        %v4456 = vshrl.u32 %v4455, 7
        %v4457 = vsub.s32 6, %v4456
        %v4458 = vrot.slane %v2485, %v4457
        %v4459 = vmul.f32 %v4454, %v4437
        %v4460 = vmul.f32 %v4458, %v4438
        %v4461 = vmul.f32 %v4454, %v4439
        %v4462 = vmul.f32 %v4458, %v4440
        %v4463 = vmul.f32 %v4454, %v4441
        %v4464 = vmul.f32 %v4458, %v4442
        %v4465 = vmul.f32 %v4454, %v4443
        %v4466 = vmul.f32 %v4458, %v4444
        %v4467 = vmul.f32 %v4454, %v4445
        %v4468 = vmul.f32 %v4458, %v4446
        %v4469 = vmul.f32 %v4454, %v4447
        %v4470 = vmul.f32 %v4458, %v4448
        %v4471 = vmul.f32 %v4454, %v4449
        %v4472 = vmul.f32 %v4458, %v4450
        %v4473 = vadd.f32 %v4422, %v4459
        %v4474 = vadd.f32 %v4423, %v4460
        %v4475 = vadd.f32 %v4424, %v4461
        %v4476 = vadd.f32 %v4425, %v4462
        %v4477 = vadd.f32 %v4426, %v4463
        %v4478 = vadd.f32 %v4427, %v4464
        %v4479 = vadd.f32 %v4428, %v4465
        %v4480 = vadd.f32 %v4429, %v4466
        %v4481 = vadd.f32 %v4430, %v4467
        %v4482 = vadd.f32 %v4431, %v4468
        %v4483 = vadd.f32 %v4432, %v4469
        %v4484 = vadd.f32 %v4433, %v4470
        %v4485 = vadd.f32 %v4434, %v4471
        %v4486 = vadd.f32 %v4435, %v4472
        %s4487 = scalar_lea.vmem [#allocation9], 4368
        %v4488 = vld [vmem:[%s4487] sm:$0xff]
        %v4489 = vld [vmem:[%s4487 + $0x8] sm:$0xff]
        %v4490 = vld [vmem:[%s4487 + $0x10] sm:$0xff]
        %v4491 = vld [vmem:[%s4487 + $0x18] sm:$0xff]
        %v4492 = vld [vmem:[%s4487 + $0x20] sm:$0xff]
        %v4493 = vld [vmem:[%s4487 + $0x28] sm:$0xff]
        %v4494 = vld [vmem:[%s4487 + $0x30] sm:$0xff]
        %v4495 = vld [vmem:[%s4487 + $0x38] sm:$0xff]
        %v4496 = vld [vmem:[%s4487 + $0x40] sm:$0xff]
        %v4497 = vld [vmem:[%s4487 + $0x48] sm:$0xff]
        %v4498 = vld [vmem:[%s4487 + $0x50] sm:$0xff]
        %v4499 = vld [vmem:[%s4487 + $0x58] sm:$0xff]
        %v4500 = vld [vmem:[%s4487 + $0x60] sm:$0x1]
        %v4501 = vld [vmem:[%s4487 + $0x68] sm:$0x1]
        %v4502 = vlaneseq
        %v4503 = vshrl.u32 %v4502, 7
        %v4504 = vsub.s32 7, %v4503
        %v4505 = vrot.slane %v2483, %v4504
        %v4506 = vlaneseq
        %v4507 = vshrl.u32 %v4506, 7
        %v4508 = vsub.s32 7, %v4507
        %v4509 = vrot.slane %v2485, %v4508
        %v4510 = vmul.f32 %v4505, %v4488
        %v4511 = vmul.f32 %v4509, %v4489
        %v4512 = vmul.f32 %v4505, %v4490
        %v4513 = vmul.f32 %v4509, %v4491
        %v4514 = vmul.f32 %v4505, %v4492
        %v4515 = vmul.f32 %v4509, %v4493
        %v4516 = vmul.f32 %v4505, %v4494
        %v4517 = vmul.f32 %v4509, %v4495
        %v4518 = vmul.f32 %v4505, %v4496
        %v4519 = vmul.f32 %v4509, %v4497
        %v4520 = vmul.f32 %v4505, %v4498
        %v4521 = vmul.f32 %v4509, %v4499
        %v4522 = vmul.f32 %v4505, %v4500
        %v4523 = vmul.f32 %v4509, %v4501
        %v4524 = vadd.f32 %v4473, %v4510
        %v4525 = vadd.f32 %v4474, %v4511
        %v4526 = vadd.f32 %v4475, %v4512
        %v4527 = vadd.f32 %v4476, %v4513
        %v4528 = vadd.f32 %v4477, %v4514
        %v4529 = vadd.f32 %v4478, %v4515
        %v4530 = vadd.f32 %v4479, %v4516
        %v4531 = vadd.f32 %v4480, %v4517
        %v4532 = vadd.f32 %v4481, %v4518
        %v4533 = vadd.f32 %v4482, %v4519
        %v4534 = vadd.f32 %v4483, %v4520
        %v4535 = vadd.f32 %v4484, %v4521
        %v4536 = vadd.f32 %v4485, %v4522
        %v4537 = vadd.f32 %v4486, %v4523
        %s4538 = scalar_lea.vmem [#allocation9], 4480
        %v4539 = vld [vmem:[%s4538] sm:$0xff]
        %v4540 = vld [vmem:[%s4538 + $0x8] sm:$0xff]
        %v4541 = vld [vmem:[%s4538 + $0x10] sm:$0xff]
        %v4542 = vld [vmem:[%s4538 + $0x18] sm:$0xff]
        %v4543 = vld [vmem:[%s4538 + $0x20] sm:$0xff]
        %v4544 = vld [vmem:[%s4538 + $0x28] sm:$0xff]
        %v4545 = vld [vmem:[%s4538 + $0x30] sm:$0xff]
        %v4546 = vld [vmem:[%s4538 + $0x38] sm:$0xff]
        %v4547 = vld [vmem:[%s4538 + $0x40] sm:$0xff]
        %v4548 = vld [vmem:[%s4538 + $0x48] sm:$0xff]
        %v4549 = vld [vmem:[%s4538 + $0x50] sm:$0xff]
        %v4550 = vld [vmem:[%s4538 + $0x58] sm:$0xff]
        %v4551 = vld [vmem:[%s4538 + $0x60] sm:$0x1]
        %v4552 = vld [vmem:[%s4538 + $0x68] sm:$0x1]
        %v4553 = vlaneseq
        %v4554 = vshrl.u32 %v4553, 7
        %v4555 = vsub.s32 0, %v4554
        %v4556 = vrot.slane %v2489, %v4555
        %v4557 = vlaneseq
        %v4558 = vshrl.u32 %v4557, 7
        %v4559 = vsub.s32 0, %v4558
        %v4560 = vrot.slane %v2491, %v4559
        %v4561 = vmul.f32 %v4556, %v4539
        %v4562 = vmul.f32 %v4560, %v4540
        %v4563 = vmul.f32 %v4556, %v4541
        %v4564 = vmul.f32 %v4560, %v4542
        %v4565 = vmul.f32 %v4556, %v4543
        %v4566 = vmul.f32 %v4560, %v4544
        %v4567 = vmul.f32 %v4556, %v4545
        %v4568 = vmul.f32 %v4560, %v4546
        %v4569 = vmul.f32 %v4556, %v4547
        %v4570 = vmul.f32 %v4560, %v4548
        %v4571 = vmul.f32 %v4556, %v4549
        %v4572 = vmul.f32 %v4560, %v4550
        %v4573 = vmul.f32 %v4556, %v4551
        %v4574 = vmul.f32 %v4560, %v4552
        %v4575 = vadd.f32 %v4524, %v4561
        %v4576 = vadd.f32 %v4525, %v4562
        %v4577 = vadd.f32 %v4526, %v4563
        %v4578 = vadd.f32 %v4527, %v4564
        %v4579 = vadd.f32 %v4528, %v4565
        %v4580 = vadd.f32 %v4529, %v4566
        %v4581 = vadd.f32 %v4530, %v4567
        %v4582 = vadd.f32 %v4531, %v4568
        %v4583 = vadd.f32 %v4532, %v4569
        %v4584 = vadd.f32 %v4533, %v4570
        %v4585 = vadd.f32 %v4534, %v4571
        %v4586 = vadd.f32 %v4535, %v4572
        %v4587 = vadd.f32 %v4536, %v4573
        %v4588 = vadd.f32 %v4537, %v4574
        %s4589 = scalar_lea.vmem [#allocation9], 4592
        %v4590 = vld [vmem:[%s4589] sm:$0xff]
        %v4591 = vld [vmem:[%s4589 + $0x8] sm:$0xff]
        %v4592 = vld [vmem:[%s4589 + $0x10] sm:$0xff]
        %v4593 = vld [vmem:[%s4589 + $0x18] sm:$0xff]
        %v4594 = vld [vmem:[%s4589 + $0x20] sm:$0xff]
        %v4595 = vld [vmem:[%s4589 + $0x28] sm:$0xff]
        %v4596 = vld [vmem:[%s4589 + $0x30] sm:$0xff]
        %v4597 = vld [vmem:[%s4589 + $0x38] sm:$0xff]
        %v4598 = vld [vmem:[%s4589 + $0x40] sm:$0xff]
        %v4599 = vld [vmem:[%s4589 + $0x48] sm:$0xff]
        %v4600 = vld [vmem:[%s4589 + $0x50] sm:$0xff]
        %v4601 = vld [vmem:[%s4589 + $0x58] sm:$0xff]
        %v4602 = vld [vmem:[%s4589 + $0x60] sm:$0x1]
        %v4603 = vld [vmem:[%s4589 + $0x68] sm:$0x1]
        %v4604 = vlaneseq
        %v4605 = vshrl.u32 %v4604, 7
        %v4606 = vsub.s32 1, %v4605
        %v4607 = vrot.slane %v2489, %v4606
        %v4608 = vlaneseq
        %v4609 = vshrl.u32 %v4608, 7
        %v4610 = vsub.s32 1, %v4609
        %v4611 = vrot.slane %v2491, %v4610
        %v4612 = vmul.f32 %v4607, %v4590
        %v4613 = vmul.f32 %v4611, %v4591
        %v4614 = vmul.f32 %v4607, %v4592
        %v4615 = vmul.f32 %v4611, %v4593
        %v4616 = vmul.f32 %v4607, %v4594
        %v4617 = vmul.f32 %v4611, %v4595
        %v4618 = vmul.f32 %v4607, %v4596
        %v4619 = vmul.f32 %v4611, %v4597
        %v4620 = vmul.f32 %v4607, %v4598
        %v4621 = vmul.f32 %v4611, %v4599
        %v4622 = vmul.f32 %v4607, %v4600
        %v4623 = vmul.f32 %v4611, %v4601
        %v4624 = vmul.f32 %v4607, %v4602
        %v4625 = vmul.f32 %v4611, %v4603
        %v4626 = vadd.f32 %v4575, %v4612
        %v4627 = vadd.f32 %v4576, %v4613
        %v4628 = vadd.f32 %v4577, %v4614
        %v4629 = vadd.f32 %v4578, %v4615
        %v4630 = vadd.f32 %v4579, %v4616
        %v4631 = vadd.f32 %v4580, %v4617
        %v4632 = vadd.f32 %v4581, %v4618
        %v4633 = vadd.f32 %v4582, %v4619
        %v4634 = vadd.f32 %v4583, %v4620
        %v4635 = vadd.f32 %v4584, %v4621
        %v4636 = vadd.f32 %v4585, %v4622
        %v4637 = vadd.f32 %v4586, %v4623
        %v4638 = vadd.f32 %v4587, %v4624
        %v4639 = vadd.f32 %v4588, %v4625
        %s4640 = scalar_lea.vmem [#allocation9], 4704
        %v4641 = vld [vmem:[%s4640] sm:$0xff]
        %v4642 = vld [vmem:[%s4640 + $0x8] sm:$0xff]
        %v4643 = vld [vmem:[%s4640 + $0x10] sm:$0xff]
        %v4644 = vld [vmem:[%s4640 + $0x18] sm:$0xff]
        %v4645 = vld [vmem:[%s4640 + $0x20] sm:$0xff]
        %v4646 = vld [vmem:[%s4640 + $0x28] sm:$0xff]
        %v4647 = vld [vmem:[%s4640 + $0x30] sm:$0xff]
        %v4648 = vld [vmem:[%s4640 + $0x38] sm:$0xff]
        %v4649 = vld [vmem:[%s4640 + $0x40] sm:$0xff]
        %v4650 = vld [vmem:[%s4640 + $0x48] sm:$0xff]
        %v4651 = vld [vmem:[%s4640 + $0x50] sm:$0xff]
        %v4652 = vld [vmem:[%s4640 + $0x58] sm:$0xff]
        %v4653 = vld [vmem:[%s4640 + $0x60] sm:$0x1]
        %v4654 = vld [vmem:[%s4640 + $0x68] sm:$0x1]
        %v4655 = vlaneseq
        %v4656 = vshrl.u32 %v4655, 7
        %v4657 = vsub.s32 2, %v4656
        %v4658 = vrot.slane %v2489, %v4657
        %v4659 = vlaneseq
        %v4660 = vshrl.u32 %v4659, 7
        %v4661 = vsub.s32 2, %v4660
        %v4662 = vrot.slane %v2491, %v4661
        %v4663 = vmul.f32 %v4658, %v4641
        %v4664 = vmul.f32 %v4662, %v4642
        %v4665 = vmul.f32 %v4658, %v4643
        %v4666 = vmul.f32 %v4662, %v4644
        %v4667 = vmul.f32 %v4658, %v4645
        %v4668 = vmul.f32 %v4662, %v4646
        %v4669 = vmul.f32 %v4658, %v4647
        %v4670 = vmul.f32 %v4662, %v4648
        %v4671 = vmul.f32 %v4658, %v4649
        %v4672 = vmul.f32 %v4662, %v4650
        %v4673 = vmul.f32 %v4658, %v4651
        %v4674 = vmul.f32 %v4662, %v4652
        %v4675 = vmul.f32 %v4658, %v4653
        %v4676 = vmul.f32 %v4662, %v4654
        %v4677 = vadd.f32 %v4626, %v4663
        %v4678 = vadd.f32 %v4627, %v4664
        %v4679 = vadd.f32 %v4628, %v4665
        %v4680 = vadd.f32 %v4629, %v4666
        %v4681 = vadd.f32 %v4630, %v4667
        %v4682 = vadd.f32 %v4631, %v4668
        %v4683 = vadd.f32 %v4632, %v4669
        %v4684 = vadd.f32 %v4633, %v4670
        %v4685 = vadd.f32 %v4634, %v4671
        %v4686 = vadd.f32 %v4635, %v4672
        %v4687 = vadd.f32 %v4636, %v4673
        %v4688 = vadd.f32 %v4637, %v4674
        %v4689 = vadd.f32 %v4638, %v4675
        %v4690 = vadd.f32 %v4639, %v4676
        %s4691 = scalar_lea.vmem [#allocation9], 4816
        %v4692 = vld [vmem:[%s4691] sm:$0xff]
        %v4693 = vld [vmem:[%s4691 + $0x8] sm:$0xff]
        %v4694 = vld [vmem:[%s4691 + $0x10] sm:$0xff]
        %v4695 = vld [vmem:[%s4691 + $0x18] sm:$0xff]
        %v4696 = vld [vmem:[%s4691 + $0x20] sm:$0xff]
        %v4697 = vld [vmem:[%s4691 + $0x28] sm:$0xff]
        %v4698 = vld [vmem:[%s4691 + $0x30] sm:$0xff]
        %v4699 = vld [vmem:[%s4691 + $0x38] sm:$0xff]
        %v4700 = vld [vmem:[%s4691 + $0x40] sm:$0xff]
        %v4701 = vld [vmem:[%s4691 + $0x48] sm:$0xff]
        %v4702 = vld [vmem:[%s4691 + $0x50] sm:$0xff]
        %v4703 = vld [vmem:[%s4691 + $0x58] sm:$0xff]
        %v4704 = vld [vmem:[%s4691 + $0x60] sm:$0x1]
        %v4705 = vld [vmem:[%s4691 + $0x68] sm:$0x1]
        %v4706 = vlaneseq
        %v4707 = vshrl.u32 %v4706, 7
        %v4708 = vsub.s32 3, %v4707
        %v4709 = vrot.slane %v2489, %v4708
        %v4710 = vlaneseq
        %v4711 = vshrl.u32 %v4710, 7
        %v4712 = vsub.s32 3, %v4711
        %v4713 = vrot.slane %v2491, %v4712
        %v4714 = vmul.f32 %v4709, %v4692
        %v4715 = vmul.f32 %v4713, %v4693
        %v4716 = vmul.f32 %v4709, %v4694
        %v4717 = vmul.f32 %v4713, %v4695
        %v4718 = vmul.f32 %v4709, %v4696
        %v4719 = vmul.f32 %v4713, %v4697
        %v4720 = vmul.f32 %v4709, %v4698
        %v4721 = vmul.f32 %v4713, %v4699
        %v4722 = vmul.f32 %v4709, %v4700
        %v4723 = vmul.f32 %v4713, %v4701
        %v4724 = vmul.f32 %v4709, %v4702
        %v4725 = vmul.f32 %v4713, %v4703
        %v4726 = vmul.f32 %v4709, %v4704
        %v4727 = vmul.f32 %v4713, %v4705
        %v4728 = vadd.f32 %v4677, %v4714
        %v4729 = vadd.f32 %v4678, %v4715
        %v4730 = vadd.f32 %v4679, %v4716
        %v4731 = vadd.f32 %v4680, %v4717
        %v4732 = vadd.f32 %v4681, %v4718
        %v4733 = vadd.f32 %v4682, %v4719
        %v4734 = vadd.f32 %v4683, %v4720
        %v4735 = vadd.f32 %v4684, %v4721
        %v4736 = vadd.f32 %v4685, %v4722
        %v4737 = vadd.f32 %v4686, %v4723
        %v4738 = vadd.f32 %v4687, %v4724
        %v4739 = vadd.f32 %v4688, %v4725
        %v4740 = vadd.f32 %v4689, %v4726
        %v4741 = vadd.f32 %v4690, %v4727
        %s4742 = scalar_lea.vmem [#allocation9], 4928
        %v4743 = vld [vmem:[%s4742] sm:$0xff]
        %v4744 = vld [vmem:[%s4742 + $0x8] sm:$0xff]
        %v4745 = vld [vmem:[%s4742 + $0x10] sm:$0xff]
        %v4746 = vld [vmem:[%s4742 + $0x18] sm:$0xff]
        %v4747 = vld [vmem:[%s4742 + $0x20] sm:$0xff]
        %v4748 = vld [vmem:[%s4742 + $0x28] sm:$0xff]
        %v4749 = vld [vmem:[%s4742 + $0x30] sm:$0xff]
        %v4750 = vld [vmem:[%s4742 + $0x38] sm:$0xff]
        %v4751 = vld [vmem:[%s4742 + $0x40] sm:$0xff]
        %v4752 = vld [vmem:[%s4742 + $0x48] sm:$0xff]
        %v4753 = vld [vmem:[%s4742 + $0x50] sm:$0xff]
        %v4754 = vld [vmem:[%s4742 + $0x58] sm:$0xff]
        %v4755 = vld [vmem:[%s4742 + $0x60] sm:$0x1]
        %v4756 = vld [vmem:[%s4742 + $0x68] sm:$0x1]
        %v4757 = vlaneseq
        %v4758 = vshrl.u32 %v4757, 7
        %v4759 = vsub.s32 4, %v4758
        %v4760 = vrot.slane %v2489, %v4759
        %v4761 = vlaneseq
        %v4762 = vshrl.u32 %v4761, 7
        %v4763 = vsub.s32 4, %v4762
        %v4764 = vrot.slane %v2491, %v4763
        %v4765 = vmul.f32 %v4760, %v4743
        %v4766 = vmul.f32 %v4764, %v4744
        %v4767 = vmul.f32 %v4760, %v4745
        %v4768 = vmul.f32 %v4764, %v4746
        %v4769 = vmul.f32 %v4760, %v4747
        %v4770 = vmul.f32 %v4764, %v4748
        %v4771 = vmul.f32 %v4760, %v4749
        %v4772 = vmul.f32 %v4764, %v4750
        %v4773 = vmul.f32 %v4760, %v4751
        %v4774 = vmul.f32 %v4764, %v4752
        %v4775 = vmul.f32 %v4760, %v4753
        %v4776 = vmul.f32 %v4764, %v4754
        %v4777 = vmul.f32 %v4760, %v4755
        %v4778 = vmul.f32 %v4764, %v4756
        %v4779 = vadd.f32 %v4728, %v4765
        %v4780 = vadd.f32 %v4729, %v4766
        %v4781 = vadd.f32 %v4730, %v4767
        %v4782 = vadd.f32 %v4731, %v4768
        %v4783 = vadd.f32 %v4732, %v4769
        %v4784 = vadd.f32 %v4733, %v4770
        %v4785 = vadd.f32 %v4734, %v4771
        %v4786 = vadd.f32 %v4735, %v4772
        %v4787 = vadd.f32 %v4736, %v4773
        %v4788 = vadd.f32 %v4737, %v4774
        %v4789 = vadd.f32 %v4738, %v4775
        %v4790 = vadd.f32 %v4739, %v4776
        %v4791 = vadd.f32 %v4740, %v4777
        %v4792 = vadd.f32 %v4741, %v4778
        %s4793 = scalar_lea.vmem [#allocation9], 5040
        %v4794 = vld [vmem:[%s4793] sm:$0xff]
        %v4795 = vld [vmem:[%s4793 + $0x8] sm:$0xff]
        %v4796 = vld [vmem:[%s4793 + $0x10] sm:$0xff]
        %v4797 = vld [vmem:[%s4793 + $0x18] sm:$0xff]
        %v4798 = vld [vmem:[%s4793 + $0x20] sm:$0xff]
        %v4799 = vld [vmem:[%s4793 + $0x28] sm:$0xff]
        %v4800 = vld [vmem:[%s4793 + $0x30] sm:$0xff]
        %v4801 = vld [vmem:[%s4793 + $0x38] sm:$0xff]
        %v4802 = vld [vmem:[%s4793 + $0x40] sm:$0xff]
        %v4803 = vld [vmem:[%s4793 + $0x48] sm:$0xff]
        %v4804 = vld [vmem:[%s4793 + $0x50] sm:$0xff]
        %v4805 = vld [vmem:[%s4793 + $0x58] sm:$0xff]
        %v4806 = vld [vmem:[%s4793 + $0x60] sm:$0x1]
        %v4807 = vld [vmem:[%s4793 + $0x68] sm:$0x1]
        %v4808 = vlaneseq
        %v4809 = vshrl.u32 %v4808, 7
        %v4810 = vsub.s32 5, %v4809
        %v4811 = vrot.slane %v2489, %v4810
        %v4812 = vlaneseq
        %v4813 = vshrl.u32 %v4812, 7
        %v4814 = vsub.s32 5, %v4813
        %v4815 = vrot.slane %v2491, %v4814
        %v4816 = vmul.f32 %v4811, %v4794
        %v4817 = vmul.f32 %v4815, %v4795
        %v4818 = vmul.f32 %v4811, %v4796
        %v4819 = vmul.f32 %v4815, %v4797
        %v4820 = vmul.f32 %v4811, %v4798
        %v4821 = vmul.f32 %v4815, %v4799
        %v4822 = vmul.f32 %v4811, %v4800
        %v4823 = vmul.f32 %v4815, %v4801
        %v4824 = vmul.f32 %v4811, %v4802
        %v4825 = vmul.f32 %v4815, %v4803
        %v4826 = vmul.f32 %v4811, %v4804
        %v4827 = vmul.f32 %v4815, %v4805
        %v4828 = vmul.f32 %v4811, %v4806
        %v4829 = vmul.f32 %v4815, %v4807
        %v4830 = vadd.f32 %v4779, %v4816
        %v4831 = vadd.f32 %v4780, %v4817
        %v4832 = vadd.f32 %v4781, %v4818
        %v4833 = vadd.f32 %v4782, %v4819
        %v4834 = vadd.f32 %v4783, %v4820
        %v4835 = vadd.f32 %v4784, %v4821
        %v4836 = vadd.f32 %v4785, %v4822
        %v4837 = vadd.f32 %v4786, %v4823
        %v4838 = vadd.f32 %v4787, %v4824
        %v4839 = vadd.f32 %v4788, %v4825
        %v4840 = vadd.f32 %v4789, %v4826
        %v4841 = vadd.f32 %v4790, %v4827
        %v4842 = vadd.f32 %v4791, %v4828
        %v4843 = vadd.f32 %v4792, %v4829
        %s4844 = scalar_lea.vmem [#allocation9], 5152
        %v4845 = vld [vmem:[%s4844] sm:$0xff]
        %v4846 = vld [vmem:[%s4844 + $0x8] sm:$0xff]
        %v4847 = vld [vmem:[%s4844 + $0x10] sm:$0xff]
        %v4848 = vld [vmem:[%s4844 + $0x18] sm:$0xff]
        %v4849 = vld [vmem:[%s4844 + $0x20] sm:$0xff]
        %v4850 = vld [vmem:[%s4844 + $0x28] sm:$0xff]
        %v4851 = vld [vmem:[%s4844 + $0x30] sm:$0xff]
        %v4852 = vld [vmem:[%s4844 + $0x38] sm:$0xff]
        %v4853 = vld [vmem:[%s4844 + $0x40] sm:$0xff]
        %v4854 = vld [vmem:[%s4844 + $0x48] sm:$0xff]
        %v4855 = vld [vmem:[%s4844 + $0x50] sm:$0xff]
        %v4856 = vld [vmem:[%s4844 + $0x58] sm:$0xff]
        %v4857 = vld [vmem:[%s4844 + $0x60] sm:$0x1]
        %v4858 = vld [vmem:[%s4844 + $0x68] sm:$0x1]
        %v4859 = vlaneseq
        %v4860 = vshrl.u32 %v4859, 7
        %v4861 = vsub.s32 6, %v4860
        %v4862 = vrot.slane %v2489, %v4861
        %v4863 = vlaneseq
        %v4864 = vshrl.u32 %v4863, 7
        %v4865 = vsub.s32 6, %v4864
        %v4866 = vrot.slane %v2491, %v4865
        %v4867 = vmul.f32 %v4862, %v4845
        %v4868 = vmul.f32 %v4866, %v4846
        %v4869 = vmul.f32 %v4862, %v4847
        %v4870 = vmul.f32 %v4866, %v4848
        %v4871 = vmul.f32 %v4862, %v4849
        %v4872 = vmul.f32 %v4866, %v4850
        %v4873 = vmul.f32 %v4862, %v4851
        %v4874 = vmul.f32 %v4866, %v4852
        %v4875 = vmul.f32 %v4862, %v4853
        %v4876 = vmul.f32 %v4866, %v4854
        %v4877 = vmul.f32 %v4862, %v4855
        %v4878 = vmul.f32 %v4866, %v4856
        %v4879 = vmul.f32 %v4862, %v4857
        %v4880 = vmul.f32 %v4866, %v4858
        %v4881 = vadd.f32 %v4830, %v4867
        %v4882 = vadd.f32 %v4831, %v4868
        %v4883 = vadd.f32 %v4832, %v4869
        %v4884 = vadd.f32 %v4833, %v4870
        %v4885 = vadd.f32 %v4834, %v4871
        %v4886 = vadd.f32 %v4835, %v4872
        %v4887 = vadd.f32 %v4836, %v4873
        %v4888 = vadd.f32 %v4837, %v4874
        %v4889 = vadd.f32 %v4838, %v4875
        %v4890 = vadd.f32 %v4839, %v4876
        %v4891 = vadd.f32 %v4840, %v4877
        %v4892 = vadd.f32 %v4841, %v4878
        %v4893 = vadd.f32 %v4842, %v4879
        %v4894 = vadd.f32 %v4843, %v4880
        %s4895 = scalar_lea.vmem [#allocation9], 5264
        %v4896 = vld [vmem:[%s4895] sm:$0xff]
        %v4897 = vld [vmem:[%s4895 + $0x8] sm:$0xff]
        %v4898 = vld [vmem:[%s4895 + $0x10] sm:$0xff]
        %v4899 = vld [vmem:[%s4895 + $0x18] sm:$0xff]
        %v4900 = vld [vmem:[%s4895 + $0x20] sm:$0xff]
        %v4901 = vld [vmem:[%s4895 + $0x28] sm:$0xff]
        %v4902 = vld [vmem:[%s4895 + $0x30] sm:$0xff]
        %v4903 = vld [vmem:[%s4895 + $0x38] sm:$0xff]
        %v4904 = vld [vmem:[%s4895 + $0x40] sm:$0xff]
        %v4905 = vld [vmem:[%s4895 + $0x48] sm:$0xff]
        %v4906 = vld [vmem:[%s4895 + $0x50] sm:$0xff]
        %v4907 = vld [vmem:[%s4895 + $0x58] sm:$0xff]
        %v4908 = vld [vmem:[%s4895 + $0x60] sm:$0x1]
        %v4909 = vld [vmem:[%s4895 + $0x68] sm:$0x1]
        %v4910 = vlaneseq
        %v4911 = vshrl.u32 %v4910, 7
        %v4912 = vsub.s32 7, %v4911
        %v4913 = vrot.slane %v2489, %v4912
        %v4914 = vlaneseq
        %v4915 = vshrl.u32 %v4914, 7
        %v4916 = vsub.s32 7, %v4915
        %v4917 = vrot.slane %v2491, %v4916
        %v4918 = vmul.f32 %v4913, %v4896
        %v4919 = vmul.f32 %v4917, %v4897
        %v4920 = vmul.f32 %v4913, %v4898
        %v4921 = vmul.f32 %v4917, %v4899
        %v4922 = vmul.f32 %v4913, %v4900
        %v4923 = vmul.f32 %v4917, %v4901
        %v4924 = vmul.f32 %v4913, %v4902
        %v4925 = vmul.f32 %v4917, %v4903
        %v4926 = vmul.f32 %v4913, %v4904
        %v4927 = vmul.f32 %v4917, %v4905
        %v4928 = vmul.f32 %v4913, %v4906
        %v4929 = vmul.f32 %v4917, %v4907
        %v4930 = vmul.f32 %v4913, %v4908
        %v4931 = vmul.f32 %v4917, %v4909
        %v4932 = vadd.f32 %v4881, %v4918
        %v4933 = vadd.f32 %v4882, %v4919
        %v4934 = vadd.f32 %v4883, %v4920
        %v4935 = vadd.f32 %v4884, %v4921
        %v4936 = vadd.f32 %v4885, %v4922
        %v4937 = vadd.f32 %v4886, %v4923
        %v4938 = vadd.f32 %v4887, %v4924
        %v4939 = vadd.f32 %v4888, %v4925
        %v4940 = vadd.f32 %v4889, %v4926
        %v4941 = vadd.f32 %v4890, %v4927
        %v4942 = vadd.f32 %v4891, %v4928
        %v4943 = vadd.f32 %v4892, %v4929
        %v4944 = vadd.f32 %v4893, %v4930
        %v4945 = vadd.f32 %v4894, %v4931
        %s4946 = scalar_lea.vmem [#allocation9], 5376
        %v4947 = vld [vmem:[%s4946] sm:$0xff]
        %v4948 = vld [vmem:[%s4946 + $0x8] sm:$0xff]
        %v4949 = vld [vmem:[%s4946 + $0x10] sm:$0xff]
        %v4950 = vld [vmem:[%s4946 + $0x18] sm:$0xff]
        %v4951 = vld [vmem:[%s4946 + $0x20] sm:$0xff]
        %v4952 = vld [vmem:[%s4946 + $0x28] sm:$0xff]
        %v4953 = vld [vmem:[%s4946 + $0x30] sm:$0xff]
        %v4954 = vld [vmem:[%s4946 + $0x38] sm:$0xff]
        %v4955 = vld [vmem:[%s4946 + $0x40] sm:$0xff]
        %v4956 = vld [vmem:[%s4946 + $0x48] sm:$0xff]
        %v4957 = vld [vmem:[%s4946 + $0x50] sm:$0xff]
        %v4958 = vld [vmem:[%s4946 + $0x58] sm:$0xff]
        %v4959 = vld [vmem:[%s4946 + $0x60] sm:$0x1]
        %v4960 = vld [vmem:[%s4946 + $0x68] sm:$0x1]
        %v4961 = vlaneseq
        %v4962 = vshrl.u32 %v4961, 7
        %v4963 = vsub.s32 0, %v4962
        %v4964 = vrot.slane %v2495, %v4963
        %v4965 = vlaneseq
        %v4966 = vshrl.u32 %v4965, 7
        %v4967 = vsub.s32 0, %v4966
        %v4968 = vrot.slane %v2497, %v4967
        %v4969 = vmul.f32 %v4964, %v4947
        %v4970 = vmul.f32 %v4968, %v4948
        %v4971 = vmul.f32 %v4964, %v4949
        %v4972 = vmul.f32 %v4968, %v4950
        %v4973 = vmul.f32 %v4964, %v4951
        %v4974 = vmul.f32 %v4968, %v4952
        %v4975 = vmul.f32 %v4964, %v4953
        %v4976 = vmul.f32 %v4968, %v4954
        %v4977 = vmul.f32 %v4964, %v4955
        %v4978 = vmul.f32 %v4968, %v4956
        %v4979 = vmul.f32 %v4964, %v4957
        %v4980 = vmul.f32 %v4968, %v4958
        %v4981 = vmul.f32 %v4964, %v4959
        %v4982 = vmul.f32 %v4968, %v4960
        %v4983 = vadd.f32 %v4932, %v4969
        %v4984 = vadd.f32 %v4933, %v4970
        %v4985 = vadd.f32 %v4934, %v4971
        %v4986 = vadd.f32 %v4935, %v4972
        %v4987 = vadd.f32 %v4936, %v4973
        %v4988 = vadd.f32 %v4937, %v4974
        %v4989 = vadd.f32 %v4938, %v4975
        %v4990 = vadd.f32 %v4939, %v4976
        %v4991 = vadd.f32 %v4940, %v4977
        %v4992 = vadd.f32 %v4941, %v4978
        %v4993 = vadd.f32 %v4942, %v4979
        %v4994 = vadd.f32 %v4943, %v4980
        %v4995 = vadd.f32 %v4944, %v4981
        %v4996 = vadd.f32 %v4945, %v4982
        %vm4997 = vcmask 334848
        %v4998 = vsel %vm4997, %v4984, 0.0
        %v4999 = vadd.f32 %v4983, %v4998
        %5000 = vadd.xlane.f32.xlu0 %v4999
        %v5001 = vpop.xlane.xlu0 %5000
        %v5002 = vsel %vm4997, %v4986, 0.0
        %v5003 = vadd.f32 %v4985, %v5002
        %5004 = vadd.xlane.f32.xlu0 %v5003
        %v5005 = vpop.xlane.xlu0 %5004
        %v5006 = vsel %vm4997, %v4988, 0.0
        %v5007 = vadd.f32 %v4987, %v5006
        %5008 = vadd.xlane.f32.xlu0 %v5007
        %v5009 = vpop.xlane.xlu0 %5008
        %v5010 = vsel %vm4997, %v4990, 0.0
        %v5011 = vadd.f32 %v4989, %v5010
        %5012 = vadd.xlane.f32.xlu0 %v5011
        %v5013 = vpop.xlane.xlu0 %5012
        %v5014 = vsel %vm4997, %v4992, 0.0
        %v5015 = vadd.f32 %v4991, %v5014
        %5016 = vadd.xlane.f32.xlu0 %v5015
        %v5017 = vpop.xlane.xlu0 %5016
        %v5018 = vsel %vm4997, %v4994, 0.0
        %v5019 = vadd.f32 %v4993, %v5018
        %5020 = vadd.xlane.f32.xlu0 %v5019
        %v5021 = vpop.xlane.xlu0 %5020
        %v5022 = vsel %vm1609, %v4995, 0.0
        %vm5023 = vcmask 327680
        %v5024 = vsel %vm5023, %v4996, 0.0
        %v5025 = vadd.f32 %v5022, %v5024
        %5026 = vadd.xlane.f32.xlu0 %v5025
        %v5027 = vpop.xlane.xlu0 %5026
        %v5028 = vld [vmem:[#allocation10] sm:$0xff]
        %v5029 = vld [vmem:[#allocation10 + $0x8] sm:$0xff]
        %v5030 = vld [vmem:[#allocation10 + $0x10] sm:$0xff]
        %v5031 = vld [vmem:[#allocation10 + $0x18] sm:$0xff]
        %v5032 = vld [vmem:[#allocation10 + $0x20] sm:$0xff]
        %v5033 = vld [vmem:[#allocation10 + $0x28] sm:$0xff]
        %v5034 = vld [vmem:[#allocation10 + $0x30] sm:$0x1]
        %v5035 = vadd.f32 %v5001, %v5028
        %v5036 = vadd.f32 %v5005, %v5029
        %v5037 = vadd.f32 %v5009, %v5030
        %v5038 = vadd.f32 %v5013, %v5031
        %v5039 = vadd.f32 %v5017, %v5032
        %v5040 = vadd.f32 %v5021, %v5033
        %v5041 = vadd.f32 %v5027, %v5034
        %vm5042 = vcmask 7168
        %5043 = vst.msk [vmem:[%s362] sm:$0xff] %vm5042, %v5035
        %5044 = vst.msk [vmem:[%s362 + $0x8] sm:$0xff] %vm5042, %v5036
        %5045 = vst.msk [vmem:[%s362 + $0x10] sm:$0xff] %vm5042, %v5037
        %5046 = vst.msk [vmem:[%s362 + $0x18] sm:$0xff] %vm5042, %v5038
        %5047 = vst.msk [vmem:[%s362 + $0x20] sm:$0xff] %vm5042, %v5039
        %5048 = vst.msk [vmem:[%s362 + $0x28] sm:$0xff] %vm5042, %v5040
        %vm5049 = vcmask 0
        %5050 = vst.msk [vmem:[%s362 + $0x30] sm:$0x1] %vm5049, %v5041
        %p5051 = scmp.lt.s32.totalorder %s22, 1
        %s5052 = scalar_select %p5051, %s22, 1
        %s5053 = smul.addr %s5052, 7
        %s5054 = smul.addr %s5053, 8
        %s5055 = scalar_lea.vmem %s7, %s5054
        // Predicated region
        $region73: #{_lambda_.1} parent=47 // pred_check
          %p5056 = pneg %p192
        $region74: #{_lambda_.1} parent=47 // pred_check_branch
          %5058 = sbr.rel (%p5056) target = $region76
        $region75: #{_lambda_.1} parent=47 // pred_region
          _
        $region76: #{_lambda_.1} parent=47 // pred_fallthru
          _
      $region48: #{_lambda_.1} parent=5 // pred_fallthru
        _
      %p5059 = scmp.le.s32.totalorder 2, %s17
      // Predicated region
      $region77: #{_lambda_.1} parent=5 // pred_check
        %p5060 = pneg %p5059
      $region78: #{_lambda_.1} parent=5 // pred_check_branch
        %5062 = sbr.rel (%p5060) target = $region80
      $region79: #{_lambda_.1} parent=5 // pred_region
        %s5063 = ssub.s32 %s17, 2
        // Predicated region
        $region81: #{_lambda_.1} parent=79 // pred_check
          %p5064 = pneg %p198
        $region82: #{_lambda_.1} parent=79 // pred_check_branch
          %5066 = sbr.rel (%p5064) target = $region84
        $region83: #{_lambda_.1} parent=79 // pred_region
          %p5067 = scmp.lt.s32.totalorder %s23, 1
          %s5068 = scalar_select %p5067, %s23, 1
          %s5069 = smul.addr %s5068, 7
          %s5070 = smul.addr %s5069, 8
          %s5071 = scalar_lea.vmem %s7, %s5070
        $region84: #{_lambda_.1} parent=79 // pred_fallthru
          _
      $region80: #{_lambda_.1} parent=5 // pred_fallthru
        _
    $region6: #{_lambda_.1} parent=1 // loop_footer
      %s21 = sadd.s32 1, %s17
    $region7: #{_lambda_.1} parent=1 // loop_footer_branch
      %16 = sbr.rel target = $region3
    $region8: #{_lambda_.1} parent=1 // loop_exit
      _
    %5072 = vsyncpa [#allocation3], 1
    %s5073 = scalar_lea.sflag [#allocation3], 1
    %5074 = vsyncpa %s5073, 1
    %5075 = vsyncpa [#allocation5], 1
    %5076 = vsyncpa [#allocation8], 1
    %5077 = vsyncpa [#allocation11], 1

</llo_original>
